<compile_context>
chip_gen: v7x
topology: tpu7x:2x2x1
jax: 0.10.0
libtpu: 0.0.40
codegen_flags: <defaults>
</compile_context>

<pallas_src>
import functools
import math

import jax
import jax.numpy as jnp
from jax import lax
from jax.experimental import pallas as pl
from jax.experimental.pallas import tpu as pltpu


# ----------------------- fused decoder-layer kernel -------------------------

def _decoder_layer_kernel(h_ref, ln1_ref, wqkv_ref, wo_ref, ln2_ref, wgu_ref,
                          wd_ref, cos_ref, sins_ref, mask_ref, o_ref, *,
                          num_heads, head_dim, inter, eps):
    S = h_ref.shape[1]
    H = h_ref.shape[2]
    half = head_dim // 2
    scale = 1.0 / math.sqrt(head_dim)

    x = h_ref[0]                      # (S, H) f32 residual stream
    ln1 = ln1_ref[...]                # (1, H)
    ln2 = ln2_ref[...]                # (1, H)
    cos = cos_ref[...]                # (S, D)
    sins = sins_ref[...]              # (S, D) signed sin: [-sin, +sin] halves
    mask = mask_ref[...]              # (S, S) additive causal mask

    # ---- input RMSNorm (f32 VPU/EUP math) ----
    var = jnp.mean(x * x, axis=-1, keepdims=True)
    xn = (x * lax.rsqrt(var + eps)) * ln1

    # ---- fused QKV projection (bf16 MXU operands, f32 accumulate) ----
    qkv = jnp.dot(xn.astype(jnp.bfloat16), wqkv_ref[...],
                  preferred_element_type=jnp.float32)          # (S, 3H)
    q = qkv[:, :H]
    k = qkv[:, H:2 * H]
    v = qkv[:, 2 * H:]

    def rope(t):
        # rotate_half(t) = [-t2, t1]; roll by exactly D/2 gives [t2, t1]
        # (shift == D/2 so roll direction cannot matter); sign lives in `sins`.
        rolled = pltpu.roll(t, shift=half, axis=1)
        return t * cos + rolled * sins

    # ---- attention, heads unrolled statically inside the kernel ----
    outs = []
    for hh in range(num_heads):
        sl = slice(hh * head_dim, (hh + 1) * head_dim)
        qh = rope(q[:, sl])
        kh = rope(k[:, sl])
        vh = v[:, sl]
        s = lax.dot_general(qh.astype(jnp.bfloat16), kh.astype(jnp.bfloat16),
                            dimension_numbers=(((1,), (1,)), ((), ())),
                            preferred_element_type=jnp.float32)
        s = s * scale + mask
        s = s - jnp.max(s, axis=-1, keepdims=True)
        p = jnp.exp(s)
        p = p * pl.reciprocal(jnp.sum(p, axis=-1, keepdims=True), approx=True)
        outs.append(jnp.dot(p.astype(jnp.bfloat16), vh.astype(jnp.bfloat16),
                            preferred_element_type=jnp.float32))
    attn = jnp.concatenate(outs, axis=-1)                       # (S, H)

    # ---- output projection with fused residual add ----
    h1 = x + jnp.dot(attn.astype(jnp.bfloat16), wo_ref[...],
                     preferred_element_type=jnp.float32)

    # ---- post-attention RMSNorm ----
    var2 = jnp.mean(h1 * h1, axis=-1, keepdims=True)
    h1n = (h1 * lax.rsqrt(var2 + eps)) * ln2

    # ---- fused gate+up SwiGLU MLP, residual fused in epilogue ----
    gu = jnp.dot(h1n.astype(jnp.bfloat16), wgu_ref[...],
                 preferred_element_type=jnp.float32)            # (S, 2I)
    g = gu[:, :inter]
    u = gu[:, inter:]
    act = (g * jax.nn.sigmoid(g)) * u                           # SiLU(g) * u, f32
    o_ref[0] = h1 + jnp.dot(act.astype(jnp.bfloat16), wd_ref[...],
                            preferred_element_type=jnp.float32)


def fused_decoder_layer(h, p, cos, sin_signed, mask, *, num_heads, head_dim,
                        eps=1e-6):
    B, S, H = h.shape
    inter = p["wd"].shape[0]
    kernel = functools.partial(_decoder_layer_kernel, num_heads=num_heads,
                               head_dim=head_dim, inter=inter, eps=eps)
    return pl.pallas_call(
        kernel,
        out_shape=jax.ShapeDtypeStruct((B, S, H), jnp.float32),
        grid=(B,),
        in_specs=[
            pl.BlockSpec((1, S, H), lambda b: (b, 0, 0)),        # hidden states
            pl.BlockSpec((1, H), lambda b: (0, 0)),              # input_layernorm
            pl.BlockSpec((H, 3 * H), lambda b: (0, 0)),          # fused Wq|Wk|Wv
            pl.BlockSpec((H, H), lambda b: (0, 0)),              # Wo
            pl.BlockSpec((1, H), lambda b: (0, 0)),              # post_attention_ln
            pl.BlockSpec((H, 2 * inter), lambda b: (0, 0)),      # fused Wgate|Wup
            pl.BlockSpec((inter, H), lambda b: (0, 0)),          # Wdown
            pl.BlockSpec((S, head_dim), lambda b: (0, 0)),       # cos
            pl.BlockSpec((S, head_dim), lambda b: (0, 0)),       # signed sin
            pl.BlockSpec((S, S), lambda b: (0, 0)),              # causal mask
        ],
        out_specs=pl.BlockSpec((1, S, H), lambda b: (b, 0, 0)),
        compiler_params=pltpu.CompilerParams(
            dimension_semantics=("parallel",),
            vmem_limit_bytes=64 * 1024 * 1024,
        ),
    )(h, p["ln1"], p["wqkv"], p["wo"], p["ln2"], p["wgu"], p["wd"],
      cos, sin_signed, mask)


# --------------------------- fused classifier -------------------------------

def _classifier_kernel(h_ref, w1_ref, b1_ref, w2_ref, b2_ref, w3_ref, b3_ref,
                       o_ref):
    h = h_ref[...]                                  # (B, S, H) f32
    x = jnp.mean(h, axis=1)                         # torch.mean(hidden, dim=1)
    x = jnp.maximum(
        jnp.dot(x.astype(jnp.bfloat16), w1_ref[...],
                preferred_element_type=jnp.float32) + b1_ref[...], 0.0)
    x = jnp.maximum(
        jnp.dot(x.astype(jnp.bfloat16), w2_ref[...],
                preferred_element_type=jnp.float32) + b2_ref[...], 0.0)
    # lane-dense (B, 128) store; real num_classes columns are sliced outside.
    o_ref[...] = jnp.dot(x.astype(jnp.bfloat16), w3_ref[...],
                         preferred_element_type=jnp.float32) + b3_ref[...]


def pallas_classifier(h, cp):
    B, S, H = h.shape
    H1 = cp["w1"].shape[1]
    H2 = cp["w2"].shape[1]
    CP = cp["w3"].shape[1]                          # padded to 128 lanes
    return pl.pallas_call(
        _classifier_kernel,
        out_shape=jax.ShapeDtypeStruct((B, CP), jnp.float32),
        grid=(1,),
        in_specs=[pl.BlockSpec((B, S, H), lambda i: (0, 0, 0)),
                  pl.BlockSpec((H, H1), lambda i: (0, 0)),
                  pl.BlockSpec((1, H1), lambda i: (0, 0)),
                  pl.BlockSpec((H1, H2), lambda i: (0, 0)),
                  pl.BlockSpec((1, H2), lambda i: (0, 0)),
                  pl.BlockSpec((H2, CP), lambda i: (0, 0)),
                  pl.BlockSpec((1, CP), lambda i: (0, 0))],
        out_specs=pl.BlockSpec((B, CP), lambda i: (0, 0)),
        compiler_params=pltpu.CompilerParams(
            vmem_limit_bytes=64 * 1024 * 1024),
    )(h, cp["w1"], cp["b1"], cp["w2"], cp["b2"], cp["w3"], cp["b3"])


# ----------------------------- JAX glue (model) ------------------------------

def rotary_tables(S, head_dim, theta=10000.0):
    inv_freq = 1.0 / (theta ** (jnp.arange(0, head_dim, 2, dtype=jnp.float32)
                                / head_dim))
    pos = jnp.arange(S, dtype=jnp.float32)
    freqs = pos[:, None] * inv_freq[None, :]                 # (S, D/2)
    emb = jnp.concatenate([freqs, freqs], axis=-1)           # (S, D)
    cos = jnp.cos(emb).astype(jnp.float32)
    half = head_dim // 2
    sign = jnp.concatenate([-jnp.ones((half,), jnp.float32),
                            jnp.ones((half,), jnp.float32)])
    sin_signed = (jnp.sin(emb) * sign[None, :]).astype(jnp.float32)
    return cos, sin_signed


def causal_mask(S):
    i = jnp.arange(S)[:, None]
    j = jnp.arange(S)[None, :]
    return jnp.where(j <= i, 0.0, jnp.finfo(jnp.float32).min).astype(jnp.float32)


def recurrent_forward(params, input_ids, *, num_loops, num_heads, head_dim,
                      num_classes):
    B, S = input_ids.shape
    h = params["embed"][input_ids]                  # embed_tokens (XLA gather)
    cos, sin_signed = rotary_tables(S, head_dim)    # rotary_emb
    mask = causal_mask(S)                           # _update_causal_mask

    layer = functools.partial(fused_decoder_layer, num_heads=num_heads,
                              head_dim=head_dim)

    # front pass: layers[0:N] (torch.no_grad in reference — values identical)
    for p in params["front_layers"]:
        h = layer(h, p, cos, sin_signed, mask)

    cp = params["classifier"]
    all_logits = []
    for i in range(num_loops):
        h_copy = h                                  # hidden_states_copy
        for p in params["middle_layers"]:           # layers[N:M]
            h = layer(h, p, cos, sin_signed, mask)
        logits_pad = pallas_classifier(h, cp)       # (B, 128) lane-dense
        all_logits.append(logits_pad[:, :num_classes])
        if i == num_loops - 1:
            break
        res = layer(h, params["translayer"], cos, sin_signed, mask)
        h = res + h_copy
    return all_logits


# ----------------------------- parameter init --------------------------------

def init_decoder_params(key, hidden, intermediate, scale=0.02):
    ks = jax.random.split(key, 4)
    nbf = lambda k, s: (scale * jax.random.normal(k, s, jnp.float32)
                        ).astype(jnp.bfloat16)
    return {
        "ln1": jnp.ones((1, hidden), jnp.float32),
        "ln2": jnp.ones((1, hidden), jnp.float32),
        "wqkv": nbf(ks[0], (hidden, 3 * hidden)),        # Wq | Wk | Wv fused
        "wo": nbf(ks[1], (hidden, hidden)),
        "wgu": nbf(ks[2], (hidden, 2 * intermediate)),   # Wgate | Wup fused
        "wd": nbf(ks[3], (intermediate, hidden)),
    }


def init_classifier_params(key, hidden, h1, h2, num_classes, scale=0.02):
    ks = jax.random.split(key, 3)
    nbf = lambda k, s: (scale * jax.random.normal(k, s, jnp.float32)
                        ).astype(jnp.bfloat16)
    w3 = scale * jax.random.normal(ks[2], (h2, num_classes), jnp.float32)
    w3_pad = jnp.zeros((h2, 128), jnp.float32).at[:, :num_classes].set(w3)
    return {
        "w1": nbf(ks[0], (hidden, h1)), "b1": jnp.zeros((1, h1), jnp.float32),
        "w2": nbf(ks[1], (h1, h2)),     "b2": jnp.zeros((1, h2), jnp.float32),
        "w3": w3_pad.astype(jnp.bfloat16),
        "b3": jnp.zeros((1, 128), jnp.float32),
    }


# --------------------------------- main ---------------------------------------

if __name__ == "__main__":
    # Small synthetic shapes (scaled-down Llama config).
    B, S = 2, 8
    HIDDEN, N_HEADS, HEAD_DIM, INTER = 128, 4, 32, 256
    VOCAB = 256
    N_FRONT, N_MIDDLE = 1, 1          # self.N front layers, layers[N:M] middle
    NUM_LOOPS, NUM_CLASSES = 3, 2
    CLS_H1, CLS_H2 = 1024, 256        # Classifier fc1/fc2 widths (input scaled to HIDDEN)

    key = jax.random.PRNGKey(0)
    k_emb, k_front, k_mid, k_trans, k_cls, k_ids = jax.random.split(key, 6)

    params = {
        "embed": 0.02 * jax.random.normal(k_emb, (VOCAB, HIDDEN), jnp.float32),
        "front_layers": [init_decoder_params(k, HIDDEN, INTER)
                         for k in jax.random.split(k_front, N_FRONT)],
        "middle_layers": [init_decoder_params(k, HIDDEN, INTER)
                          for k in jax.random.split(k_mid, N_MIDDLE)],
        "translayer": init_decoder_params(k_trans, HIDDEN, INTER),
        "classifier": init_classifier_params(k_cls, HIDDEN, CLS_H1, CLS_H2,
                                             NUM_CLASSES),
    }

    # Synthetic "tokenized batch" (replaces AutoTokenizer; attention_mask all-ones).
    input_ids = jax.random.randint(k_ids, (B, S), 0, VOCAB, dtype=jnp.int32)

    fwd = jax.jit(functools.partial(recurrent_forward,
                                    num_loops=NUM_LOOPS,
                                    num_heads=N_HEADS,
                                    head_dim=HEAD_DIM,
                                    num_classes=NUM_CLASSES))
    all_logits = fwd(params, input_ids)
    all_logits = jax.block_until_ready(all_logits)

    assert len(all_logits) == NUM_LOOPS
    for lg in all_logits:
        assert lg.shape == (B, NUM_CLASSES)
        assert bool(jnp.all(jnp.isfinite(lg)))
    print("KERNEL_OK")
</pallas_src>

<mosaic_0001>
module attributes {stable_mosaic.version = 11 : i64} {
  func.func @_decoder_layer_kernel(%arg0: i32, %arg1: memref<1x8x128xf32, #tpu.memory_space<vmem>>, %arg2: memref<1x128xf32, #tpu.memory_space<vmem>>, %arg3: memref<128x384xbf16, #tpu.memory_space<vmem>>, %arg4: memref<128x128xbf16, #tpu.memory_space<vmem>>, %arg5: memref<1x128xf32, #tpu.memory_space<vmem>>, %arg6: memref<128x512xbf16, #tpu.memory_space<vmem>>, %arg7: memref<256x128xbf16, #tpu.memory_space<vmem>>, %arg8: memref<8x32xf32, #tpu.memory_space<vmem>>, %arg9: memref<8x32xf32, #tpu.memory_space<vmem>>, %arg10: memref<8x8xf32, #tpu.memory_space<vmem>>, %arg11: memref<1x8x128xf32, #tpu.memory_space<vmem>>) attributes {dimension_semantics = [#tpu.dimension_semantics<parallel>], iteration_bounds = array<i64: 2>, scalar_prefetch = 0 : i64, scratch_operands = 0 : i64, tpu.core_type = #tpu.core_type<tc>, window_params = [{transform_indices = @transform_0, window_bounds = array<i64: 1, 8, 128>}, {pipeline_mode = #tpu.pipeline_mode<synchronous>, transform_indices = @transform_1, window_bounds = array<i64: 1, 128>}, {pipeline_mode = #tpu.pipeline_mode<synchronous>, transform_indices = @transform_2, window_bounds = array<i64: 128, 384>}, {pipeline_mode = #tpu.pipeline_mode<synchronous>, transform_indices = @transform_3, window_bounds = array<i64: 128, 128>}, {pipeline_mode = #tpu.pipeline_mode<synchronous>, transform_indices = @transform_4, window_bounds = array<i64: 1, 128>}, {pipeline_mode = #tpu.pipeline_mode<synchronous>, transform_indices = @transform_5, window_bounds = array<i64: 128, 512>}, {pipeline_mode = #tpu.pipeline_mode<synchronous>, transform_indices = @transform_6, window_bounds = array<i64: 256, 128>}, {pipeline_mode = #tpu.pipeline_mode<synchronous>, transform_indices = @transform_7, window_bounds = array<i64: 8, 32>}, {pipeline_mode = #tpu.pipeline_mode<synchronous>, transform_indices = @transform_8, window_bounds = array<i64: 8, 32>}, {pipeline_mode = #tpu.pipeline_mode<synchronous>, transform_indices = @transform_9, window_bounds = array<i64: 8, 8>}, {transform_indices = @transform_10, window_bounds = array<i64: 1, 8, 128>}]} {
    %c0 = arith.constant 0 : index
    %c0_0 = arith.constant 0 : index
    %c0_1 = arith.constant 0 : index
    %0 = vector.load %arg1[%c0, %c0_0, %c0_1] : memref<1x8x128xf32, #tpu.memory_space<vmem>>, vector<1x8x128xf32>
    %1 = vector.shape_cast %0 : vector<1x8x128xf32> to vector<8x128xf32>
    %c0_2 = arith.constant 0 : index
    %c0_3 = arith.constant 0 : index
    %2 = vector.load %arg2[%c0_2, %c0_3] : memref<1x128xf32, #tpu.memory_space<vmem>>, vector<1x128xf32>
    %c0_4 = arith.constant 0 : index
    %c0_5 = arith.constant 0 : index
    %3 = vector.load %arg5[%c0_4, %c0_5] : memref<1x128xf32, #tpu.memory_space<vmem>>, vector<1x128xf32>
    %c0_6 = arith.constant 0 : index
    %c0_7 = arith.constant 0 : index
    %4 = vector.load %arg8[%c0_6, %c0_7] : memref<8x32xf32, #tpu.memory_space<vmem>>, vector<8x32xf32>
    %c0_8 = arith.constant 0 : index
    %c0_9 = arith.constant 0 : index
    %5 = vector.load %arg9[%c0_8, %c0_9] : memref<8x32xf32, #tpu.memory_space<vmem>>, vector<8x32xf32>
    %c0_10 = arith.constant 0 : index
    %c0_11 = arith.constant 0 : index
    %6 = vector.load %arg10[%c0_10, %c0_11] : memref<8x8xf32, #tpu.memory_space<vmem>>, vector<8x8xf32>
    %7 = arith.mulf %1, %1 : vector<8x128xf32>
    %cst = arith.constant dense<0.000000e+00> : vector<8xf32>
    %8 = vector.multi_reduction <add>, %7, %cst [1] : vector<8x128xf32> to vector<8xf32>
    %9 = vector.shape_cast %8 : vector<8xf32> to vector<8x1xf32>
    %cst_12 = arith.constant 1.280000e+02 : f32
    %10 = vector.broadcast %cst_12 : f32 to vector<8x1xf32>
    %11 = arith.divf %9, %10 : vector<8x1xf32>
    %cst_13 = arith.constant 9.99999997E-7 : f32
    %12 = vector.broadcast %cst_13 : f32 to vector<8x1xf32>
    %13 = arith.addf %11, %12 : vector<8x1xf32>
    %14 = math.rsqrt %13 : vector<8x1xf32>
    %15 = vector.broadcast %14 : vector<8x1xf32> to vector<8x128xf32>
    %16 = arith.mulf %1, %15 : vector<8x128xf32>
    %17 = vector.broadcast %2 : vector<1x128xf32> to vector<8x128xf32>
    %18 = arith.mulf %16, %17 : vector<8x128xf32>
    %19 = arith.truncf %18 : vector<8x128xf32> to vector<8x128xbf16>
    %c0_14 = arith.constant 0 : index
    %c0_15 = arith.constant 0 : index
    %20 = vector.load %arg3[%c0_14, %c0_15] : memref<128x384xbf16, #tpu.memory_space<vmem>>, vector<128x384xbf16>
    %cst_16 = arith.constant dense<0.000000e+00> : vector<8x384xf32>
    %21 = tpu.matmul %19, %20, %cst_16 {dimension_numbers = #tpu.dot_dimension_numbers<[1], [0], [0], [1], [0, 0, 1, 1], [], []>} : vector<8x128xbf16>, vector<128x384xbf16>, vector<8x384xf32> -> vector<8x384xf32>
    %22 = vector.extract_strided_slice %21 {offsets = [0, 0], sizes = [8, 128], strides = [1, 1]} : vector<8x384xf32> to vector<8x128xf32>
    %23 = vector.extract_strided_slice %21 {offsets = [0, 128], sizes = [8, 128], strides = [1, 1]} : vector<8x384xf32> to vector<8x128xf32>
    %24 = vector.extract_strided_slice %21 {offsets = [0, 256], sizes = [8, 128], strides = [1, 1]} : vector<8x384xf32> to vector<8x128xf32>
    %25 = vector.extract_strided_slice %22 {offsets = [0, 0], sizes = [8, 32], strides = [1, 1]} : vector<8x128xf32> to vector<8x32xf32>
    %c16_i32 = arith.constant 16 : i32
    %26 = tpu.dynamic_rotate %25 by %c16_i32 dim 1 : vector<8x32xf32>, i32 -> vector<8x32xf32>
    %27 = arith.mulf %25, %4 : vector<8x32xf32>
    %28 = arith.mulf %26, %5 : vector<8x32xf32>
    %29 = arith.addf %27, %28 : vector<8x32xf32>
    %30 = vector.extract_strided_slice %23 {offsets = [0, 0], sizes = [8, 32], strides = [1, 1]} : vector<8x128xf32> to vector<8x32xf32>
    %c16_i32_17 = arith.constant 16 : i32
    %31 = tpu.dynamic_rotate %30 by %c16_i32_17 dim 1 : vector<8x32xf32>, i32 -> vector<8x32xf32>
    %32 = arith.mulf %30, %4 : vector<8x32xf32>
    %33 = arith.mulf %31, %5 : vector<8x32xf32>
    %34 = arith.addf %32, %33 : vector<8x32xf32>
    %35 = vector.extract_strided_slice %24 {offsets = [0, 0], sizes = [8, 32], strides = [1, 1]} : vector<8x128xf32> to vector<8x32xf32>
    %36 = arith.truncf %29 : vector<8x32xf32> to vector<8x32xbf16>
    %37 = arith.truncf %34 : vector<8x32xf32> to vector<8x32xbf16>
    %cst_18 = arith.constant dense<0.000000e+00> : vector<8x8xf32>
    %38 = tpu.matmul %36, %37, %cst_18 {dimension_numbers = #tpu.dot_dimension_numbers<[1], [1], [0], [0], [0, 0, 1, 0], [], []>} : vector<8x32xbf16>, vector<8x32xbf16>, vector<8x8xf32> -> vector<8x8xf32>
    %cst_19 = arith.constant 0.176776692 : f32
    %39 = vector.broadcast %cst_19 : f32 to vector<8x8xf32>
    %40 = arith.mulf %38, %39 : vector<8x8xf32>
    %41 = arith.addf %40, %6 : vector<8x8xf32>
    %cst_20 = arith.constant dense<0xFF800000> : vector<8xf32>
    %42 = vector.multi_reduction <maximumf>, %41, %cst_20 [1] : vector<8x8xf32> to vector<8xf32>
    %43 = vector.shape_cast %42 : vector<8xf32> to vector<8x1xf32>
    %44 = vector.broadcast %43 : vector<8x1xf32> to vector<8x8xf32>
    %45 = arith.subf %41, %44 : vector<8x8xf32>
    %46 = math.exp %45 : vector<8x8xf32>
    %cst_21 = arith.constant dense<0.000000e+00> : vector<8xf32>
    %47 = vector.multi_reduction <add>, %46, %cst_21 [1] : vector<8x8xf32> to vector<8xf32>
    %48 = vector.shape_cast %47 : vector<8xf32> to vector<8x1xf32>
    %49 = tpu.reciprocal %48 {approx = true} : vector<8x1xf32> -> vector<8x1xf32>
    %50 = vector.broadcast %49 : vector<8x1xf32> to vector<8x8xf32>
    %51 = arith.mulf %46, %50 : vector<8x8xf32>
    %52 = arith.truncf %51 : vector<8x8xf32> to vector<8x8xbf16>
    %53 = arith.truncf %35 : vector<8x32xf32> to vector<8x32xbf16>
    %cst_22 = arith.constant dense<0.000000e+00> : vector<8x32xf32>
    %54 = tpu.matmul %52, %53, %cst_22 {dimension_numbers = #tpu.dot_dimension_numbers<[1], [0], [0], [1], [0, 0, 1, 1], [], []>} : vector<8x8xbf16>, vector<8x32xbf16>, vector<8x32xf32> -> vector<8x32xf32>
    %55 = vector.extract_strided_slice %22 {offsets = [0, 32], sizes = [8, 32], strides = [1, 1]} : vector<8x128xf32> to vector<8x32xf32>
    %c16_i32_23 = arith.constant 16 : i32
    %56 = tpu.dynamic_rotate %55 by %c16_i32_23 dim 1 : vector<8x32xf32>, i32 -> vector<8x32xf32>
    %57 = arith.mulf %55, %4 : vector<8x32xf32>
    %58 = arith.mulf %56, %5 : vector<8x32xf32>
    %59 = arith.addf %57, %58 : vector<8x32xf32>
    %60 = vector.extract_strided_slice %23 {offsets = [0, 32], sizes = [8, 32], strides = [1, 1]} : vector<8x128xf32> to vector<8x32xf32>
    %c16_i32_24 = arith.constant 16 : i32
    %61 = tpu.dynamic_rotate %60 by %c16_i32_24 dim 1 : vector<8x32xf32>, i32 -> vector<8x32xf32>
    %62 = arith.mulf %60, %4 : vector<8x32xf32>
    %63 = arith.mulf %61, %5 : vector<8x32xf32>
    %64 = arith.addf %62, %63 : vector<8x32xf32>
    %65 = vector.extract_strided_slice %24 {offsets = [0, 32], sizes = [8, 32], strides = [1, 1]} : vector<8x128xf32> to vector<8x32xf32>
    %66 = arith.truncf %59 : vector<8x32xf32> to vector<8x32xbf16>
    %67 = arith.truncf %64 : vector<8x32xf32> to vector<8x32xbf16>
    %cst_25 = arith.constant dense<0.000000e+00> : vector<8x8xf32>
    %68 = tpu.matmul %66, %67, %cst_25 {dimension_numbers = #tpu.dot_dimension_numbers<[1], [1], [0], [0], [0, 0, 1, 0], [], []>} : vector<8x32xbf16>, vector<8x32xbf16>, vector<8x8xf32> -> vector<8x8xf32>
    %cst_26 = arith.constant 0.176776692 : f32
    %69 = vector.broadcast %cst_26 : f32 to vector<8x8xf32>
    %70 = arith.mulf %68, %69 : vector<8x8xf32>
    %71 = arith.addf %70, %6 : vector<8x8xf32>
    %cst_27 = arith.constant dense<0xFF800000> : vector<8xf32>
    %72 = vector.multi_reduction <maximumf>, %71, %cst_27 [1] : vector<8x8xf32> to vector<8xf32>
    %73 = vector.shape_cast %72 : vector<8xf32> to vector<8x1xf32>
    %74 = vector.broadcast %73 : vector<8x1xf32> to vector<8x8xf32>
    %75 = arith.subf %71, %74 : vector<8x8xf32>
    %76 = math.exp %75 : vector<8x8xf32>
    %cst_28 = arith.constant dense<0.000000e+00> : vector<8xf32>
    %77 = vector.multi_reduction <add>, %76, %cst_28 [1] : vector<8x8xf32> to vector<8xf32>
    %78 = vector.shape_cast %77 : vector<8xf32> to vector<8x1xf32>
    %79 = tpu.reciprocal %78 {approx = true} : vector<8x1xf32> -> vector<8x1xf32>
    %80 = vector.broadcast %79 : vector<8x1xf32> to vector<8x8xf32>
    %81 = arith.mulf %76, %80 : vector<8x8xf32>
    %82 = arith.truncf %81 : vector<8x8xf32> to vector<8x8xbf16>
    %83 = arith.truncf %65 : vector<8x32xf32> to vector<8x32xbf16>
    %cst_29 = arith.constant dense<0.000000e+00> : vector<8x32xf32>
    %84 = tpu.matmul %82, %83, %cst_29 {dimension_numbers = #tpu.dot_dimension_numbers<[1], [0], [0], [1], [0, 0, 1, 1], [], []>} : vector<8x8xbf16>, vector<8x32xbf16>, vector<8x32xf32> -> vector<8x32xf32>
    %85 = vector.extract_strided_slice %22 {offsets = [0, 64], sizes = [8, 32], strides = [1, 1]} : vector<8x128xf32> to vector<8x32xf32>
    %c16_i32_30 = arith.constant 16 : i32
    %86 = tpu.dynamic_rotate %85 by %c16_i32_30 dim 1 : vector<8x32xf32>, i32 -> vector<8x32xf32>
    %87 = arith.mulf %85, %4 : vector<8x32xf32>
    %88 = arith.mulf %86, %5 : vector<8x32xf32>
    %89 = arith.addf %87, %88 : vector<8x32xf32>
    %90 = vector.extract_strided_slice %23 {offsets = [0, 64], sizes = [8, 32], strides = [1, 1]} : vector<8x128xf32> to vector<8x32xf32>
    %c16_i32_31 = arith.constant 16 : i32
    %91 = tpu.dynamic_rotate %90 by %c16_i32_31 dim 1 : vector<8x32xf32>, i32 -> vector<8x32xf32>
    %92 = arith.mulf %90, %4 : vector<8x32xf32>
    %93 = arith.mulf %91, %5 : vector<8x32xf32>
    %94 = arith.addf %92, %93 : vector<8x32xf32>
    %95 = vector.extract_strided_slice %24 {offsets = [0, 64], sizes = [8, 32], strides = [1, 1]} : vector<8x128xf32> to vector<8x32xf32>
    %96 = arith.truncf %89 : vector<8x32xf32> to vector<8x32xbf16>
    %97 = arith.truncf %94 : vector<8x32xf32> to vector<8x32xbf16>
    %cst_32 = arith.constant dense<0.000000e+00> : vector<8x8xf32>
    %98 = tpu.matmul %96, %97, %cst_32 {dimension_numbers = #tpu.dot_dimension_numbers<[1], [1], [0], [0], [0, 0, 1, 0], [], []>} : vector<8x32xbf16>, vector<8x32xbf16>, vector<8x8xf32> -> vector<8x8xf32>
    %cst_33 = arith.constant 0.176776692 : f32
    %99 = vector.broadcast %cst_33 : f32 to vector<8x8xf32>
    %100 = arith.mulf %98, %99 : vector<8x8xf32>
    %101 = arith.addf %100, %6 : vector<8x8xf32>
    %cst_34 = arith.constant dense<0xFF800000> : vector<8xf32>
    %102 = vector.multi_reduction <maximumf>, %101, %cst_34 [1] : vector<8x8xf32> to vector<8xf32>
    %103 = vector.shape_cast %102 : vector<8xf32> to vector<8x1xf32>
    %104 = vector.broadcast %103 : vector<8x1xf32> to vector<8x8xf32>
    %105 = arith.subf %101, %104 : vector<8x8xf32>
    %106 = math.exp %105 : vector<8x8xf32>
    %cst_35 = arith.constant dense<0.000000e+00> : vector<8xf32>
    %107 = vector.multi_reduction <add>, %106, %cst_35 [1] : vector<8x8xf32> to vector<8xf32>
    %108 = vector.shape_cast %107 : vector<8xf32> to vector<8x1xf32>
    %109 = tpu.reciprocal %108 {approx = true} : vector<8x1xf32> -> vector<8x1xf32>
    %110 = vector.broadcast %109 : vector<8x1xf32> to vector<8x8xf32>
    %111 = arith.mulf %106, %110 : vector<8x8xf32>
    %112 = arith.truncf %111 : vector<8x8xf32> to vector<8x8xbf16>
    %113 = arith.truncf %95 : vector<8x32xf32> to vector<8x32xbf16>
    %cst_36 = arith.constant dense<0.000000e+00> : vector<8x32xf32>
    %114 = tpu.matmul %112, %113, %cst_36 {dimension_numbers = #tpu.dot_dimension_numbers<[1], [0], [0], [1], [0, 0, 1, 1], [], []>} : vector<8x8xbf16>, vector<8x32xbf16>, vector<8x32xf32> -> vector<8x32xf32>
    %115 = vector.extract_strided_slice %22 {offsets = [0, 96], sizes = [8, 32], strides = [1, 1]} : vector<8x128xf32> to vector<8x32xf32>
    %c16_i32_37 = arith.constant 16 : i32
    %116 = tpu.dynamic_rotate %115 by %c16_i32_37 dim 1 : vector<8x32xf32>, i32 -> vector<8x32xf32>
    %117 = arith.mulf %115, %4 : vector<8x32xf32>
    %118 = arith.mulf %116, %5 : vector<8x32xf32>
    %119 = arith.addf %117, %118 : vector<8x32xf32>
    %120 = vector.extract_strided_slice %23 {offsets = [0, 96], sizes = [8, 32], strides = [1, 1]} : vector<8x128xf32> to vector<8x32xf32>
    %c16_i32_38 = arith.constant 16 : i32
    %121 = tpu.dynamic_rotate %120 by %c16_i32_38 dim 1 : vector<8x32xf32>, i32 -> vector<8x32xf32>
    %122 = arith.mulf %120, %4 : vector<8x32xf32>
    %123 = arith.mulf %121, %5 : vector<8x32xf32>
    %124 = arith.addf %122, %123 : vector<8x32xf32>
    %125 = vector.extract_strided_slice %24 {offsets = [0, 96], sizes = [8, 32], strides = [1, 1]} : vector<8x128xf32> to vector<8x32xf32>
    %126 = arith.truncf %119 : vector<8x32xf32> to vector<8x32xbf16>
    %127 = arith.truncf %124 : vector<8x32xf32> to vector<8x32xbf16>
    %cst_39 = arith.constant dense<0.000000e+00> : vector<8x8xf32>
    %128 = tpu.matmul %126, %127, %cst_39 {dimension_numbers = #tpu.dot_dimension_numbers<[1], [1], [0], [0], [0, 0, 1, 0], [], []>} : vector<8x32xbf16>, vector<8x32xbf16>, vector<8x8xf32> -> vector<8x8xf32>
    %cst_40 = arith.constant 0.176776692 : f32
    %129 = vector.broadcast %cst_40 : f32 to vector<8x8xf32>
    %130 = arith.mulf %128, %129 : vector<8x8xf32>
    %131 = arith.addf %130, %6 : vector<8x8xf32>
    %cst_41 = arith.constant dense<0xFF800000> : vector<8xf32>
    %132 = vector.multi_reduction <maximumf>, %131, %cst_41 [1] : vector<8x8xf32> to vector<8xf32>
    %133 = vector.shape_cast %132 : vector<8xf32> to vector<8x1xf32>
    %134 = vector.broadcast %133 : vector<8x1xf32> to vector<8x8xf32>
    %135 = arith.subf %131, %134 : vector<8x8xf32>
    %136 = math.exp %135 : vector<8x8xf32>
    %cst_42 = arith.constant dense<0.000000e+00> : vector<8xf32>
    %137 = vector.multi_reduction <add>, %136, %cst_42 [1] : vector<8x8xf32> to vector<8xf32>
    %138 = vector.shape_cast %137 : vector<8xf32> to vector<8x1xf32>
    %139 = tpu.reciprocal %138 {approx = true} : vector<8x1xf32> -> vector<8x1xf32>
    %140 = vector.broadcast %139 : vector<8x1xf32> to vector<8x8xf32>
    %141 = arith.mulf %136, %140 : vector<8x8xf32>
    %142 = arith.truncf %141 : vector<8x8xf32> to vector<8x8xbf16>
    %143 = arith.truncf %125 : vector<8x32xf32> to vector<8x32xbf16>
    %cst_43 = arith.constant dense<0.000000e+00> : vector<8x32xf32>
    %144 = tpu.matmul %142, %143, %cst_43 {dimension_numbers = #tpu.dot_dimension_numbers<[1], [0], [0], [1], [0, 0, 1, 1], [], []>} : vector<8x8xbf16>, vector<8x32xbf16>, vector<8x32xf32> -> vector<8x32xf32>
    %145 = tpu.concatenate %54, %84, %114, %144 in 1 : vector<8x32xf32>, vector<8x32xf32>, vector<8x32xf32>, vector<8x32xf32> -> vector<8x128xf32>
    %146 = arith.truncf %145 : vector<8x128xf32> to vector<8x128xbf16>
    %c0_44 = arith.constant 0 : index
    %c0_45 = arith.constant 0 : index
    %147 = vector.load %arg4[%c0_44, %c0_45] : memref<128x128xbf16, #tpu.memory_space<vmem>>, vector<128x128xbf16>
    %cst_46 = arith.constant dense<0.000000e+00> : vector<8x128xf32>
    %148 = tpu.matmul %146, %147, %cst_46 {dimension_numbers = #tpu.dot_dimension_numbers<[1], [0], [0], [1], [0, 0, 1, 1], [], []>} : vector<8x128xbf16>, vector<128x128xbf16>, vector<8x128xf32> -> vector<8x128xf32>
    %149 = arith.addf %1, %148 : vector<8x128xf32>
    %150 = arith.mulf %149, %149 : vector<8x128xf32>
    %cst_47 = arith.constant dense<0.000000e+00> : vector<8xf32>
    %151 = vector.multi_reduction <add>, %150, %cst_47 [1] : vector<8x128xf32> to vector<8xf32>
    %152 = vector.shape_cast %151 : vector<8xf32> to vector<8x1xf32>
    %cst_48 = arith.constant 1.280000e+02 : f32
    %153 = vector.broadcast %cst_48 : f32 to vector<8x1xf32>
    %154 = arith.divf %152, %153 : vector<8x1xf32>
    %cst_49 = arith.constant 9.99999997E-7 : f32
    %155 = vector.broadcast %cst_49 : f32 to vector<8x1xf32>
    %156 = arith.addf %154, %155 : vector<8x1xf32>
    %157 = math.rsqrt %156 : vector<8x1xf32>
    %158 = vector.broadcast %157 : vector<8x1xf32> to vector<8x128xf32>
    %159 = arith.mulf %149, %158 : vector<8x128xf32>
    %160 = vector.broadcast %3 : vector<1x128xf32> to vector<8x128xf32>
    %161 = arith.mulf %159, %160 : vector<8x128xf32>
    %162 = arith.truncf %161 : vector<8x128xf32> to vector<8x128xbf16>
    %c0_50 = arith.constant 0 : index
    %c0_51 = arith.constant 0 : index
    %163 = vector.load %arg6[%c0_50, %c0_51] : memref<128x512xbf16, #tpu.memory_space<vmem>>, vector<128x512xbf16>
    %cst_52 = arith.constant dense<0.000000e+00> : vector<8x512xf32>
    %164 = tpu.matmul %162, %163, %cst_52 {dimension_numbers = #tpu.dot_dimension_numbers<[1], [0], [0], [1], [0, 0, 1, 1], [], []>} : vector<8x128xbf16>, vector<128x512xbf16>, vector<8x512xf32> -> vector<8x512xf32>
    %165 = vector.extract_strided_slice %164 {offsets = [0, 0], sizes = [8, 256], strides = [1, 1]} : vector<8x512xf32> to vector<8x256xf32>
    %166 = vector.extract_strided_slice %164 {offsets = [0, 256], sizes = [8, 256], strides = [1, 1]} : vector<8x512xf32> to vector<8x256xf32>
    %167 = arith.negf %165 : vector<8x256xf32>
    %168 = math.exp %167 : vector<8x256xf32>
    %cst_53 = arith.constant 1.000000e+00 : f32
    %169 = vector.broadcast %cst_53 : f32 to vector<8x256xf32>
    %170 = arith.addf %169, %168 : vector<8x256xf32>
    %171 = arith.divf %169, %170 : vector<8x256xf32>
    %172 = arith.mulf %165, %171 : vector<8x256xf32>
    %173 = arith.mulf %172, %166 : vector<8x256xf32>
    %174 = arith.truncf %173 : vector<8x256xf32> to vector<8x256xbf16>
    %c0_54 = arith.constant 0 : index
    %c0_55 = arith.constant 0 : index
    %175 = vector.load %arg7[%c0_54, %c0_55] : memref<256x128xbf16, #tpu.memory_space<vmem>>, vector<256x128xbf16>
    %cst_56 = arith.constant dense<0.000000e+00> : vector<8x128xf32>
    %176 = tpu.matmul %174, %175, %cst_56 {dimension_numbers = #tpu.dot_dimension_numbers<[1], [0], [0], [1], [0, 0, 1, 1], [], []>} : vector<8x256xbf16>, vector<256x128xbf16>, vector<8x128xf32> -> vector<8x128xf32>
    %177 = arith.addf %149, %176 : vector<8x128xf32>
    %c0_57 = arith.constant 0 : index
    %c0_58 = arith.constant 0 : index
    %c0_59 = arith.constant 0 : index
    %178 = vector.load %arg11[%c0_57, %c0_58, %c0_59] : memref<1x8x128xf32, #tpu.memory_space<vmem>>, vector<1x8x128xf32>
    %179 = vector.shape_cast %178 : vector<1x8x128xf32> to vector<8x128xf32>
    %180 = vector.shape_cast %177 : vector<8x128xf32> to vector<1x8x128xf32>
    tpu.vector_store %arg11[%c0_57, %c0_58, %c0_59], %180 {strides = array<i32>} : memref<1x8x128xf32, #tpu.memory_space<vmem>>, vector<1x8x128xf32>,
    return
  }
  func.func @transform_0(%arg0: i32) -> (i32, i32, i32) {
    %c0_i32 = arith.constant 0 : i32
    %c0_i32_0 = arith.constant 0 : i32
    %c0_i32_1 = arith.constant 0 : i32
    return %arg0, %c0_i32, %c0_i32_0 : i32, i32, i32
  }
  func.func @transform_1(%arg0: i32) -> (i32, i32) {
    %c0_i32 = arith.constant 0 : i32
    %c0_i32_0 = arith.constant 0 : i32
    %c0_i32_1 = arith.constant 0 : i32
    return %c0_i32, %c0_i32_0 : i32, i32
  }
  func.func @transform_2(%arg0: i32) -> (i32, i32) {
    %c0_i32 = arith.constant 0 : i32
    %c0_i32_0 = arith.constant 0 : i32
    %c0_i32_1 = arith.constant 0 : i32
    return %c0_i32, %c0_i32_0 : i32, i32
  }
  func.func @transform_3(%arg0: i32) -> (i32, i32) {
    %c0_i32 = arith.constant 0 : i32
    %c0_i32_0 = arith.constant 0 : i32
    %c0_i32_1 = arith.constant 0 : i32
    return %c0_i32, %c0_i32_0 : i32, i32
  }
  func.func @transform_4(%arg0: i32) -> (i32, i32) {
    %c0_i32 = arith.constant 0 : i32
    %c0_i32_0 = arith.constant 0 : i32
    %c0_i32_1 = arith.constant 0 : i32
    return %c0_i32, %c0_i32_0 : i32, i32
  }
  func.func @transform_5(%arg0: i32) -> (i32, i32) {
    %c0_i32 = arith.constant 0 : i32
    %c0_i32_0 = arith.constant 0 : i32
    %c0_i32_1 = arith.constant 0 : i32
    return %c0_i32, %c0_i32_0 : i32, i32
  }
  func.func @transform_6(%arg0: i32) -> (i32, i32) {
    %c0_i32 = arith.constant 0 : i32
    %c0_i32_0 = arith.constant 0 : i32
    %c0_i32_1 = arith.constant 0 : i32
    return %c0_i32, %c0_i32_0 : i32, i32
  }
  func.func @transform_7(%arg0: i32) -> (i32, i32) {
    %c0_i32 = arith.constant 0 : i32
    %c0_i32_0 = arith.constant 0 : i32
    %c0_i32_1 = arith.constant 0 : i32
    return %c0_i32, %c0_i32_0 : i32, i32
  }
  func.func @transform_8(%arg0: i32) -> (i32, i32) {
    %c0_i32 = arith.constant 0 : i32
    %c0_i32_0 = arith.constant 0 : i32
    %c0_i32_1 = arith.constant 0 : i32
    return %c0_i32, %c0_i32_0 : i32, i32
  }
  func.func @transform_9(%arg0: i32) -> (i32, i32) {
    %c0_i32 = arith.constant 0 : i32
    %c0_i32_0 = arith.constant 0 : i32
    %c0_i32_1 = arith.constant 0 : i32
    return %c0_i32, %c0_i32_0 : i32, i32
  }
  func.func @transform_10(%arg0: i32) -> (i32, i32, i32) {
    %c0_i32 = arith.constant 0 : i32
    %c0_i32_0 = arith.constant 0 : i32
    %c0_i32_1 = arith.constant 0 : i32
    return %arg0, %c0_i32, %c0_i32_0 : i32, i32, i32
  }
}

module attributes {stable_mosaic.version = 11 : i64} {
  func.func @_classifier_kernel(%arg0: i32, %arg1: memref<2x8x128xf32, #tpu.memory_space<vmem>>, %arg2: memref<128x1024xbf16, #tpu.memory_space<vmem>>, %arg3: memref<1x1024xf32, #tpu.memory_space<vmem>>, %arg4: memref<1024x256xbf16, #tpu.memory_space<vmem>>, %arg5: memref<1x256xf32, #tpu.memory_space<vmem>>, %arg6: memref<256x128xbf16, #tpu.memory_space<vmem>>, %arg7: memref<1x128xf32, #tpu.memory_space<vmem>>, %arg8: memref<2x128xf32, #tpu.memory_space<vmem>>) attributes {dimension_semantics = [#tpu.dimension_semantics<arbitrary>], iteration_bounds = array<i64: 1>, scalar_prefetch = 0 : i64, scratch_operands = 0 : i64, tpu.core_type = #tpu.core_type<tc>, window_params = [{pipeline_mode = #tpu.pipeline_mode<synchronous>, transform_indices = @transform_0, window_bounds = array<i64: 2, 8, 128>}, {pipeline_mode = #tpu.pipeline_mode<synchronous>, transform_indices = @transform_1, window_bounds = array<i64: 128, 1024>}, {pipeline_mode = #tpu.pipeline_mode<synchronous>, transform_indices = @transform_2, window_bounds = array<i64: 1, 1024>}, {pipeline_mode = #tpu.pipeline_mode<synchronous>, transform_indices = @transform_3, window_bounds = array<i64: 1024, 256>}, {pipeline_mode = #tpu.pipeline_mode<synchronous>, transform_indices = @transform_4, window_bounds = array<i64: 1, 256>}, {pipeline_mode = #tpu.pipeline_mode<synchronous>, transform_indices = @transform_5, window_bounds = array<i64: 256, 128>}, {pipeline_mode = #tpu.pipeline_mode<synchronous>, transform_indices = @transform_6, window_bounds = array<i64: 1, 128>}, {pipeline_mode = #tpu.pipeline_mode<synchronous>, transform_indices = @transform_7, window_bounds = array<i64: 2, 128>}]} {
    %c0 = arith.constant 0 : index
    %c0_0 = arith.constant 0 : index
    %c0_1 = arith.constant 0 : index
    %0 = vector.load %arg1[%c0, %c0_0, %c0_1] : memref<2x8x128xf32, #tpu.memory_space<vmem>>, vector<2x8x128xf32>
    %cst = arith.constant dense<0.000000e+00> : vector<2x128xf32>
    %1 = vector.multi_reduction <add>, %0, %cst [1] : vector<2x8x128xf32> to vector<2x128xf32>
    %cst_2 = arith.constant 8.000000e+00 : f32
    %2 = vector.broadcast %cst_2 : f32 to vector<2x128xf32>
    %3 = arith.divf %1, %2 : vector<2x128xf32>
    %4 = arith.truncf %3 : vector<2x128xf32> to vector<2x128xbf16>
    %c0_3 = arith.constant 0 : index
    %c0_4 = arith.constant 0 : index
    %5 = vector.load %arg2[%c0_3, %c0_4] : memref<128x1024xbf16, #tpu.memory_space<vmem>>, vector<128x1024xbf16>
    %cst_5 = arith.constant dense<0.000000e+00> : vector<2x1024xf32>
    %6 = tpu.matmul %4, %5, %cst_5 {dimension_numbers = #tpu.dot_dimension_numbers<[1], [0], [0], [1], [0, 0, 1, 1], [], []>} : vector<2x128xbf16>, vector<128x1024xbf16>, vector<2x1024xf32> -> vector<2x1024xf32>
    %c0_6 = arith.constant 0 : index
    %c0_7 = arith.constant 0 : index
    %7 = vector.load %arg3[%c0_6, %c0_7] : memref<1x1024xf32, #tpu.memory_space<vmem>>, vector<1x1024xf32>
    %8 = vector.broadcast %7 : vector<1x1024xf32> to vector<2x1024xf32>
    %9 = arith.addf %6, %8 : vector<2x1024xf32>
    %cst_8 = arith.constant 0.000000e+00 : f32
    %10 = vector.broadcast %cst_8 : f32 to vector<2x1024xf32>
    %11 = arith.maximumf %9, %10 : vector<2x1024xf32>
    %12 = arith.truncf %11 : vector<2x1024xf32> to vector<2x1024xbf16>
    %c0_9 = arith.constant 0 : index
    %c0_10 = arith.constant 0 : index
    %13 = vector.load %arg4[%c0_9, %c0_10] : memref<1024x256xbf16, #tpu.memory_space<vmem>>, vector<1024x256xbf16>
    %cst_11 = arith.constant dense<0.000000e+00> : vector<2x256xf32>
    %14 = tpu.matmul %12, %13, %cst_11 {dimension_numbers = #tpu.dot_dimension_numbers<[1], [0], [0], [1], [0, 0, 1, 1], [], []>} : vector<2x1024xbf16>, vector<1024x256xbf16>, vector<2x256xf32> -> vector<2x256xf32>
    %c0_12 = arith.constant 0 : index
    %c0_13 = arith.constant 0 : index
    %15 = vector.load %arg5[%c0_12, %c0_13] : memref<1x256xf32, #tpu.memory_space<vmem>>, vector<1x256xf32>
    %16 = vector.broadcast %15 : vector<1x256xf32> to vector<2x256xf32>
    %17 = arith.addf %14, %16 : vector<2x256xf32>
    %cst_14 = arith.constant 0.000000e+00 : f32
    %18 = vector.broadcast %cst_14 : f32 to vector<2x256xf32>
    %19 = arith.maximumf %17, %18 : vector<2x256xf32>
    %20 = arith.truncf %19 : vector<2x256xf32> to vector<2x256xbf16>
    %c0_15 = arith.constant 0 : index
    %c0_16 = arith.constant 0 : index
    %21 = vector.load %arg6[%c0_15, %c0_16] : memref<256x128xbf16, #tpu.memory_space<vmem>>, vector<256x128xbf16>
    %cst_17 = arith.constant dense<0.000000e+00> : vector<2x128xf32>
    %22 = tpu.matmul %20, %21, %cst_17 {dimension_numbers = #tpu.dot_dimension_numbers<[1], [0], [0], [1], [0, 0, 1, 1], [], []>} : vector<2x256xbf16>, vector<256x128xbf16>, vector<2x128xf32> -> vector<2x128xf32>
    %c0_18 = arith.constant 0 : index
    %c0_19 = arith.constant 0 : index
    %23 = vector.load %arg7[%c0_18, %c0_19] : memref<1x128xf32, #tpu.memory_space<vmem>>, vector<1x128xf32>
    %24 = vector.broadcast %23 : vector<1x128xf32> to vector<2x128xf32>
    %25 = arith.addf %22, %24 : vector<2x128xf32>
    %c0_20 = arith.constant 0 : index
    %c0_21 = arith.constant 0 : index
    %26 = vector.load %arg8[%c0_20, %c0_21] : memref<2x128xf32, #tpu.memory_space<vmem>>, vector<2x128xf32>
    tpu.vector_store %arg8[%c0_20, %c0_21], %25 {strides = array<i32>} : memref<2x128xf32, #tpu.memory_space<vmem>>, vector<2x128xf32>,
    return
  }
  func.func @transform_0(%arg0: i32) -> (i32, i32, i32) {
    %c0_i32 = arith.constant 0 : i32
    %c0_i32_0 = arith.constant 0 : i32
    %c0_i32_1 = arith.constant 0 : i32
    %c0_i32_2 = arith.constant 0 : i32
    return %c0_i32, %c0_i32_0, %c0_i32_1 : i32, i32, i32
  }
  func.func @transform_1(%arg0: i32) -> (i32, i32) {
    %c0_i32 = arith.constant 0 : i32
    %c0_i32_0 = arith.constant 0 : i32
    %c0_i32_1 = arith.constant 0 : i32
    return %c0_i32, %c0_i32_0 : i32, i32
  }
  func.func @transform_2(%arg0: i32) -> (i32, i32) {
    %c0_i32 = arith.constant 0 : i32
    %c0_i32_0 = arith.constant 0 : i32
    %c0_i32_1 = arith.constant 0 : i32
    return %c0_i32, %c0_i32_0 : i32, i32
  }
  func.func @transform_3(%arg0: i32) -> (i32, i32) {
    %c0_i32 = arith.constant 0 : i32
    %c0_i32_0 = arith.constant 0 : i32
    %c0_i32_1 = arith.constant 0 : i32
    return %c0_i32, %c0_i32_0 : i32, i32
  }
  func.func @transform_4(%arg0: i32) -> (i32, i32) {
    %c0_i32 = arith.constant 0 : i32
    %c0_i32_0 = arith.constant 0 : i32
    %c0_i32_1 = arith.constant 0 : i32
    return %c0_i32, %c0_i32_0 : i32, i32
  }
  func.func @transform_5(%arg0: i32) -> (i32, i32) {
    %c0_i32 = arith.constant 0 : i32
    %c0_i32_0 = arith.constant 0 : i32
    %c0_i32_1 = arith.constant 0 : i32
    return %c0_i32, %c0_i32_0 : i32, i32
  }
  func.func @transform_6(%arg0: i32) -> (i32, i32) {
    %c0_i32 = arith.constant 0 : i32
    %c0_i32_0 = arith.constant 0 : i32
    %c0_i32_1 = arith.constant 0 : i32
    return %c0_i32, %c0_i32_0 : i32, i32
  }
  func.func @transform_7(%arg0: i32) -> (i32, i32) {
    %c0_i32 = arith.constant 0 : i32
    %c0_i32_0 = arith.constant 0 : i32
    %c0_i32_1 = arith.constant 0 : i32
    return %c0_i32, %c0_i32_0 : i32, i32
  }
}

</mosaic_0001>

<llo_original>
// kernel: recurrent_forward.9
$region0: #{recurrent_forward.9}
  #allocation0 [shape = 'u32[]', space=smem, size = 0x4, offset = 0x4, fixed_abs, tag = 'smem constant byte address 0x4 - core index']
  #allocation1 [shape = 'u32[144,128]{1,0:T(1,128)}', space=vmem, size = 0x12000, scoped, tag = 'internal scratch']
  %s0 = inlined_call_operand.hbm [shape: f32[2,8,128], index: 0, kind: input, shape index: {}]
  %s1 = inlined_call_operand.hbm [shape: f32[1,128], index: 1, kind: input, shape index: {}]
  %s2 = inlined_call_operand.hbm [shape: bf16[128,384], index: 2, kind: input, shape index: {}]
  %s3 = inlined_call_operand.hbm [shape: bf16[128,128], index: 3, kind: input, shape index: {}]
  %s4 = inlined_call_operand.hbm [shape: f32[1,128], index: 4, kind: input, shape index: {}]
  %s5 = inlined_call_operand.hbm [shape: bf16[128,512], index: 5, kind: input, shape index: {}]
  %s6 = inlined_call_operand.hbm [shape: bf16[256,128], index: 6, kind: input, shape index: {}]
  %s7 = inlined_call_operand.hbm [shape: f32[8,32], index: 7, kind: input, shape index: {}]
  %s8 = inlined_call_operand.hbm [shape: f32[8,32], index: 8, kind: input, shape index: {}]
  %s9 = inlined_call_operand.hbm [shape: f32[8,8], index: 9, kind: input, shape index: {}]
  %s10 = inlined_call_operand.hbm [shape: f32[2,8,128], index: 10, kind: output, shape index: {}]
  %s11 = sld [smem:[#allocation0]]
  $region113: #{recurrent_forward.9} parent=0
    _
  %s13 = ssub.s32 1, %s11
  %s14 = scalar_select 0, %s13, %s11
  $region1: #{recurrent_forward.9} parent=0
    #allocation2 [shape = 'u8[8192]{0}', space=vmem, size = 0x2000, scoped, tag = 'input window, operand 0']
    #allocation3 [shape = 's32[2]{0}', space=sflag, size = 0x8, scoped, tag = 'scoped memory for recurrent_forward.9']
    #allocation4 [shape = 's32[2]{0}', space=sflag, size = 0x8, scoped, tag = 'scoped memory for recurrent_forward.9']
    #allocation5 [shape = 'u8[512]{0}', space=vmem, size = 0x400, scoped, tag = 'input window, operand 1, single buffered']
    #allocation6 [shape = 's32[1]{0}', space=sflag, size = 0x4, scoped, tag = 'scoped memory for recurrent_forward.9']
    #allocation7 [shape = 'u8[98304]{0}', space=vmem, size = 0x18000, scoped, tag = 'input window, operand 2, single buffered']
    #allocation8 [shape = 'u8[32768]{0}', space=vmem, size = 0x8000, scoped, tag = 'input window, operand 3, single buffered']
    #allocation9 [shape = 's32[1]{0}', space=sflag, size = 0x4, scoped, tag = 'scoped memory for recurrent_forward.9']
    #allocation10 [shape = 'u8[512]{0}', space=vmem, size = 0x400, scoped, tag = 'input window, operand 4, single buffered']
    #allocation11 [shape = 'u8[131072]{0}', space=vmem, size = 0x20000, scoped, tag = 'input window, operand 5, single buffered']
    #allocation12 [shape = 's32[1]{0}', space=sflag, size = 0x4, scoped, tag = 'scoped memory for recurrent_forward.9']
    #allocation13 [shape = 'u8[65536]{0}', space=vmem, size = 0x10000, scoped, tag = 'input window, operand 6, single buffered']
    #allocation14 [shape = 'u8[4096]{0}', space=vmem, size = 0x1000, scoped, tag = 'input window, operand 7, single buffered']
    #allocation15 [shape = 's32[1]{0}', space=sflag, size = 0x4, scoped, tag = 'scoped memory for recurrent_forward.9']
    #allocation16 [shape = 'u8[4096]{0}', space=vmem, size = 0x1000, scoped, tag = 'input window, operand 8, single buffered']
    #allocation17 [shape = 'u8[4096]{0}', space=vmem, size = 0x1000, scoped, tag = 'input window, operand 9, single buffered']
    #allocation18 [shape = 's32[1]{0}', space=sflag, size = 0x4, scoped, tag = 'scoped memory for recurrent_forward.9']
    #allocation19 [shape = 'u8[8192]{0}', space=vmem, size = 0x2000, scoped, tag = 'output window, operand 0']
    %15 = vsyncpa [#allocation3], 0
    %s16 = scalar_lea.sflag [#allocation3], 1
    %17 = vsyncpa %s16, 0
    %18 = vsyncpa [#allocation6], 0
    %19 = vsyncpa [#allocation9], 0
    %20 = vsyncpa [#allocation12], 0
    %21 = vsyncpa [#allocation15], 0
    %22 = vsyncpa [#allocation18], 0
    %23 = vsyncpa [#allocation4], 0
    %s24 = scalar_lea.sflag [#allocation4], 1
    %25 = vsyncpa %s24, 0
    loop: start=0, step=1, limit=4
    $region2: #{recurrent_forward.9} parent=1 // loop_pre_header
      _
    $region3: #{recurrent_forward.9} parent=1 // loop_header
      %s27 = sphi 0, %s31
      %p28 = scmp.ge.s32.totalorder %s27, 4
      %s37 = sphi 0, %s39
      %s40 = sphi 0, %s37
      %s41 = sphi 0, %s40
      %s57 = sphi 0, %s41
      %s61 = sphi 0, %s61
      %s63 = sphi 0, %s61
      %s64 = sphi 0, %s63
      %s78 = sphi 0, %s64
      %s82 = sphi 0, %s82
      %s84 = sphi 0, %s82
      %s85 = sphi 0, %s84
      %s99 = sphi 0, %s85
      %s103 = sphi 0, %s103
      %s105 = sphi 0, %s103
      %s106 = sphi 0, %s105
      %s120 = sphi 0, %s106
      %s124 = sphi 0, %s124
      %s126 = sphi 0, %s124
      %s127 = sphi 0, %s126
      %s141 = sphi 0, %s127
      %s145 = sphi 0, %s145
      %s147 = sphi 0, %s145
      %s148 = sphi 0, %s147
      %s162 = sphi 0, %s148
      %s166 = sphi 0, %s166
      %s168 = sphi 0, %s166
      %s169 = sphi 0, %s168
      %s183 = sphi 0, %s169
      %s187 = sphi 0, %s187
      %s189 = sphi 0, %s187
      %s190 = sphi 0, %s189
      %s204 = sphi 0, %s190
      %s208 = sphi 0, %s208
      %s210 = sphi 0, %s208
      %s211 = sphi 0, %s210
      %s225 = sphi 0, %s211
      %s229 = sphi 0, %s229
      %s231 = sphi 0, %s229
      %s232 = sphi 0, %s231
      %s246 = sphi 0, %s232
      %s252 = sphi 0, %s254
      %s255 = sphi 0, %s252
      %s256 = sphi 0, %s255
      %s272 = sphi 0, %s256
    $region4: #{recurrent_forward.9} parent=1 // loop_header_branch
      %30 = sbr.rel (%p28) target = $region8
    $region5: #{recurrent_forward.9} parent=1 // loop_body
      %s32 = ssub.s32 %s27, 1
      %s33 = ssub.s32 %s27, 2
      %s34 = sadd.s32 %s27, 1
      %s35 = ssub.s32 %s27, %s34
      %p36 = scmp.eq.s32.totalorder %s35, 0
      %s38 = sadd.s32 %s37, 1
      %s39 = scalar_select %p36, %s37, %s38
      %p42 = pneg %p36
      %p43 = scmp.eq.s32.totalorder %s27, 1
      %p44 = por %p42, %p43
      %p45 = scmp.ne.s32.totalorder %s37, %s40
      %p46 = scmp.eq.s32.totalorder %s27, 0
      %p47 = por %p45, %p46
      %p48 = scmp.ne.s32.totalorder %s37, %s40
      %p49 = scmp.eq.s32.totalorder %s32, 1
      %p50 = por %p48, %p49
      %p51 = scmp.ne.s32.totalorder %s40, %s41
      %p52 = scmp.eq.s32.totalorder %s32, 0
      %p53 = por %p51, %p52
      %p54 = scmp.ne.s32.totalorder %s40, %s41
      %p55 = scmp.eq.s32.totalorder %s33, 1
      %p56 = por %p54, %p55
      %p58 = scmp.ne.s32.totalorder %s41, %s57
      %p59 = scmp.eq.s32.totalorder %s33, 0
      %p60 = por %p58, %p59
      %s62 = sadd.s32 %s61, 1
      %p65 = scmp.eq.s32.totalorder %s27, 1
      %p66 = scmp.ne.s32.totalorder %s61, %s63
      %p67 = scmp.eq.s32.totalorder %s27, 0
      %p68 = por %p66, %p67
      %p69 = scmp.ne.s32.totalorder %s61, %s63
      %p70 = scmp.eq.s32.totalorder %s32, 1
      %p71 = por %p69, %p70
      %p72 = scmp.ne.s32.totalorder %s63, %s64
      %p73 = scmp.eq.s32.totalorder %s32, 0
      %p74 = por %p72, %p73
      %p75 = scmp.ne.s32.totalorder %s63, %s64
      %p76 = scmp.eq.s32.totalorder %s33, 1
      %p77 = por %p75, %p76
      %p79 = scmp.ne.s32.totalorder %s64, %s78
      %p80 = scmp.eq.s32.totalorder %s33, 0
      %p81 = por %p79, %p80
      %s83 = sadd.s32 %s82, 1
      %p86 = scmp.eq.s32.totalorder %s27, 1
      %p87 = scmp.ne.s32.totalorder %s82, %s84
      %p88 = scmp.eq.s32.totalorder %s27, 0
      %p89 = por %p87, %p88
      %p90 = scmp.ne.s32.totalorder %s82, %s84
      %p91 = scmp.eq.s32.totalorder %s32, 1
      %p92 = por %p90, %p91
      %p93 = scmp.ne.s32.totalorder %s84, %s85
      %p94 = scmp.eq.s32.totalorder %s32, 0
      %p95 = por %p93, %p94
      %p96 = scmp.ne.s32.totalorder %s84, %s85
      %p97 = scmp.eq.s32.totalorder %s33, 1
      %p98 = por %p96, %p97
      %p100 = scmp.ne.s32.totalorder %s85, %s99
      %p101 = scmp.eq.s32.totalorder %s33, 0
      %p102 = por %p100, %p101
      %s104 = sadd.s32 %s103, 1
      %p107 = scmp.eq.s32.totalorder %s27, 1
      %p108 = scmp.ne.s32.totalorder %s103, %s105
      %p109 = scmp.eq.s32.totalorder %s27, 0
      %p110 = por %p108, %p109
      %p111 = scmp.ne.s32.totalorder %s103, %s105
      %p112 = scmp.eq.s32.totalorder %s32, 1
      %p113 = por %p111, %p112
      %p114 = scmp.ne.s32.totalorder %s105, %s106
      %p115 = scmp.eq.s32.totalorder %s32, 0
      %p116 = por %p114, %p115
      %p117 = scmp.ne.s32.totalorder %s105, %s106
      %p118 = scmp.eq.s32.totalorder %s33, 1
      %p119 = por %p117, %p118
      %p121 = scmp.ne.s32.totalorder %s106, %s120
      %p122 = scmp.eq.s32.totalorder %s33, 0
      %p123 = por %p121, %p122
      %s125 = sadd.s32 %s124, 1
      %p128 = scmp.eq.s32.totalorder %s27, 1
      %p129 = scmp.ne.s32.totalorder %s124, %s126
      %p130 = scmp.eq.s32.totalorder %s27, 0
      %p131 = por %p129, %p130
      %p132 = scmp.ne.s32.totalorder %s124, %s126
      %p133 = scmp.eq.s32.totalorder %s32, 1
      %p134 = por %p132, %p133
      %p135 = scmp.ne.s32.totalorder %s126, %s127
      %p136 = scmp.eq.s32.totalorder %s32, 0
      %p137 = por %p135, %p136
      %p138 = scmp.ne.s32.totalorder %s126, %s127
      %p139 = scmp.eq.s32.totalorder %s33, 1
      %p140 = por %p138, %p139
      %p142 = scmp.ne.s32.totalorder %s127, %s141
      %p143 = scmp.eq.s32.totalorder %s33, 0
      %p144 = por %p142, %p143
      %s146 = sadd.s32 %s145, 1
      %p149 = scmp.eq.s32.totalorder %s27, 1
      %p150 = scmp.ne.s32.totalorder %s145, %s147
      %p151 = scmp.eq.s32.totalorder %s27, 0
      %p152 = por %p150, %p151
      %p153 = scmp.ne.s32.totalorder %s145, %s147
      %p154 = scmp.eq.s32.totalorder %s32, 1
      %p155 = por %p153, %p154
      %p156 = scmp.ne.s32.totalorder %s147, %s148
      %p157 = scmp.eq.s32.totalorder %s32, 0
      %p158 = por %p156, %p157
      %p159 = scmp.ne.s32.totalorder %s147, %s148
      %p160 = scmp.eq.s32.totalorder %s33, 1
      %p161 = por %p159, %p160
      %p163 = scmp.ne.s32.totalorder %s148, %s162
      %p164 = scmp.eq.s32.totalorder %s33, 0
      %p165 = por %p163, %p164
      %s167 = sadd.s32 %s166, 1
      %p170 = scmp.eq.s32.totalorder %s27, 1
      %p171 = scmp.ne.s32.totalorder %s166, %s168
      %p172 = scmp.eq.s32.totalorder %s27, 0
      %p173 = por %p171, %p172
      %p174 = scmp.ne.s32.totalorder %s166, %s168
      %p175 = scmp.eq.s32.totalorder %s32, 1
      %p176 = por %p174, %p175
      %p177 = scmp.ne.s32.totalorder %s168, %s169
      %p178 = scmp.eq.s32.totalorder %s32, 0
      %p179 = por %p177, %p178
      %p180 = scmp.ne.s32.totalorder %s168, %s169
      %p181 = scmp.eq.s32.totalorder %s33, 1
      %p182 = por %p180, %p181
      %p184 = scmp.ne.s32.totalorder %s169, %s183
      %p185 = scmp.eq.s32.totalorder %s33, 0
      %p186 = por %p184, %p185
      %s188 = sadd.s32 %s187, 1
      %p191 = scmp.eq.s32.totalorder %s27, 1
      %p192 = scmp.ne.s32.totalorder %s187, %s189
      %p193 = scmp.eq.s32.totalorder %s27, 0
      %p194 = por %p192, %p193
      %p195 = scmp.ne.s32.totalorder %s187, %s189
      %p196 = scmp.eq.s32.totalorder %s32, 1
      %p197 = por %p195, %p196
      %p198 = scmp.ne.s32.totalorder %s189, %s190
      %p199 = scmp.eq.s32.totalorder %s32, 0
      %p200 = por %p198, %p199
      %p201 = scmp.ne.s32.totalorder %s189, %s190
      %p202 = scmp.eq.s32.totalorder %s33, 1
      %p203 = por %p201, %p202
      %p205 = scmp.ne.s32.totalorder %s190, %s204
      %p206 = scmp.eq.s32.totalorder %s33, 0
      %p207 = por %p205, %p206
      %s209 = sadd.s32 %s208, 1
      %p212 = scmp.eq.s32.totalorder %s27, 1
      %p213 = scmp.ne.s32.totalorder %s208, %s210
      %p214 = scmp.eq.s32.totalorder %s27, 0
      %p215 = por %p213, %p214
      %p216 = scmp.ne.s32.totalorder %s208, %s210
      %p217 = scmp.eq.s32.totalorder %s32, 1
      %p218 = por %p216, %p217
      %p219 = scmp.ne.s32.totalorder %s210, %s211
      %p220 = scmp.eq.s32.totalorder %s32, 0
      %p221 = por %p219, %p220
      %p222 = scmp.ne.s32.totalorder %s210, %s211
      %p223 = scmp.eq.s32.totalorder %s33, 1
      %p224 = por %p222, %p223
      %p226 = scmp.ne.s32.totalorder %s211, %s225
      %p227 = scmp.eq.s32.totalorder %s33, 0
      %p228 = por %p226, %p227
      %s230 = sadd.s32 %s229, 1
      %p233 = scmp.eq.s32.totalorder %s27, 1
      %p234 = scmp.ne.s32.totalorder %s229, %s231
      %p235 = scmp.eq.s32.totalorder %s27, 0
      %p236 = por %p234, %p235
      %p237 = scmp.ne.s32.totalorder %s229, %s231
      %p238 = scmp.eq.s32.totalorder %s32, 1
      %p239 = por %p237, %p238
      %p240 = scmp.ne.s32.totalorder %s231, %s232
      %p241 = scmp.eq.s32.totalorder %s32, 0
      %p242 = por %p240, %p241
      %p243 = scmp.ne.s32.totalorder %s231, %s232
      %p244 = scmp.eq.s32.totalorder %s33, 1
      %p245 = por %p243, %p244
      %p247 = scmp.ne.s32.totalorder %s232, %s246
      %p248 = scmp.eq.s32.totalorder %s33, 0
      %p249 = por %p247, %p248
      %s250 = ssub.s32 %s27, %s34
      %p251 = scmp.eq.s32.totalorder %s250, 0
      %s253 = sadd.s32 %s252, 1
      %s254 = scalar_select %p251, %s252, %s253
      %p257 = pneg %p251
      %p258 = scmp.eq.s32.totalorder %s27, 1
      %p259 = por %p257, %p258
      %p260 = scmp.ne.s32.totalorder %s252, %s255
      %p261 = scmp.eq.s32.totalorder %s27, 0
      %p262 = por %p260, %p261
      %p263 = scmp.ne.s32.totalorder %s252, %s255
      %p264 = scmp.eq.s32.totalorder %s32, 1
      %p265 = por %p263, %p264
      %p266 = scmp.ne.s32.totalorder %s255, %s256
      %p267 = scmp.eq.s32.totalorder %s32, 0
      %p268 = por %p266, %p267
      %p269 = scmp.ne.s32.totalorder %s255, %s256
      %p270 = scmp.eq.s32.totalorder %s33, 1
      %p271 = por %p269, %p270
      %p273 = scmp.ne.s32.totalorder %s256, %s272
      %p274 = scmp.eq.s32.totalorder %s33, 0
      %p275 = por %p273, %p274
      %p276 = scmp.le.s32.totalorder 1, %s27
      %p277 = scmp.lt.s32.totalorder %s27, 3
      %p278 = pnand %p276, %p277
      %p279 = pneg %p278
      // Predicated region
      $region9: #{recurrent_forward.9} parent=5 // pred_check
        _
      $region10: #{recurrent_forward.9} parent=5 // pred_check_branch
        %281 = sbr.rel (%p278) target = $region12
      $region11: #{recurrent_forward.9} parent=5 // pred_region
        %s282 = ssub.s32 %s27, 1
        // Predicated region
        $region13: #{recurrent_forward.9} parent=11 // pred_check
          %p283 = pneg %p74
        $region14: #{recurrent_forward.9} parent=11 // pred_check_branch
          %285 = sbr.rel (%p283) target = $region16
        $region15: #{recurrent_forward.9} parent=11 // pred_region
          %s287 = ssub.s32 16, 16
          %288 = vsyncadd [#allocation6], %s287
          %s290 = sshll.u32 [#allocation5], 4
          %s291 = int_to_ptr.vmem [resolvable:$true] %s290
          %293 = dma.hbm_to_vmem [thread:$0]  %s1, 16, %s291, [#allocation6]
        $region16: #{recurrent_forward.9} parent=11 // pred_fallthru
          _
        // Predicated region
        $region17: #{recurrent_forward.9} parent=11 // pred_check
          %p294 = pneg %p95
        $region18: #{recurrent_forward.9} parent=11 // pred_check_branch
          %296 = sbr.rel (%p294) target = $region20
        $region19: #{recurrent_forward.9} parent=11 // pred_region
          %s298 = ssub.s32 3072, 3072
          %299 = vsyncadd [#allocation6], %s298
          %s300 = sshll.u32 [#allocation7], 4
          %s301 = int_to_ptr.vmem [resolvable:$true] %s300
          %306 = dma.hbm_to_vmem [thread:$0]  %s2, 3072, %s301, [#allocation6], 192, 192, 12
        $region20: #{recurrent_forward.9} parent=11 // pred_fallthru
          _
        // Predicated region
        $region21: #{recurrent_forward.9} parent=11 // pred_check
          %p307 = pneg %p116
        $region22: #{recurrent_forward.9} parent=11 // pred_check_branch
          %309 = sbr.rel (%p307) target = $region24
        $region23: #{recurrent_forward.9} parent=11 // pred_region
          %s311 = ssub.s32 1024, 1024
          %312 = vsyncadd [#allocation9], %s311
          %s313 = sshll.u32 [#allocation8], 4
          %s314 = int_to_ptr.vmem [resolvable:$true] %s313
          %319 = dma.hbm_to_vmem [thread:$0]  %s3, 1024, %s314, [#allocation9], 64, 64, 4
        $region24: #{recurrent_forward.9} parent=11 // pred_fallthru
          _
        // Predicated region
        $region25: #{recurrent_forward.9} parent=11 // pred_check
          %p320 = pneg %p137
        $region26: #{recurrent_forward.9} parent=11 // pred_check_branch
          %322 = sbr.rel (%p320) target = $region28
        $region27: #{recurrent_forward.9} parent=11 // pred_region
          %s324 = ssub.s32 16, 16
          %325 = vsyncadd [#allocation9], %s324
          %s327 = sshll.u32 [#allocation10], 4
          %s328 = int_to_ptr.vmem [resolvable:$true] %s327
          %330 = dma.hbm_to_vmem [thread:$0]  %s4, 16, %s328, [#allocation9]
        $region28: #{recurrent_forward.9} parent=11 // pred_fallthru
          _
        // Predicated region
        $region29: #{recurrent_forward.9} parent=11 // pred_check
          %p331 = pneg %p158
        $region30: #{recurrent_forward.9} parent=11 // pred_check_branch
          %333 = sbr.rel (%p331) target = $region32
        $region31: #{recurrent_forward.9} parent=11 // pred_region
          %s335 = ssub.s32 4096, 4096
          %336 = vsyncadd [#allocation12], %s335
          %s337 = sshll.u32 [#allocation11], 4
          %s338 = int_to_ptr.vmem [resolvable:$true] %s337
          %343 = dma.hbm_to_vmem [thread:$0]  %s5, 4096, %s338, [#allocation12], 256, 256, 16
        $region32: #{recurrent_forward.9} parent=11 // pred_fallthru
          _
        // Predicated region
        $region33: #{recurrent_forward.9} parent=11 // pred_check
          %p344 = pneg %p179
        $region34: #{recurrent_forward.9} parent=11 // pred_check_branch
          %346 = sbr.rel (%p344) target = $region36
        $region35: #{recurrent_forward.9} parent=11 // pred_region
          %s348 = ssub.s32 2048, 2048
          %349 = vsyncadd [#allocation12], %s348
          %s350 = sshll.u32 [#allocation13], 4
          %s351 = int_to_ptr.vmem [resolvable:$true] %s350
          %356 = dma.hbm_to_vmem [thread:$0]  %s6, 2048, %s351, [#allocation12], 64, 64, 4
        $region36: #{recurrent_forward.9} parent=11 // pred_fallthru
          _
        // Predicated region
        $region37: #{recurrent_forward.9} parent=11 // pred_check
          %p357 = pneg %p200
        $region38: #{recurrent_forward.9} parent=11 // pred_check_branch
          %359 = sbr.rel (%p357) target = $region40
        $region39: #{recurrent_forward.9} parent=11 // pred_region
          %s361 = ssub.s32 128, 128
          %362 = vsyncadd [#allocation15], %s361
          %s364 = sshll.u32 [#allocation14], 4
          %s365 = int_to_ptr.vmem [resolvable:$true] %s364
          %367 = dma.hbm_to_vmem [thread:$0]  %s7, 128, %s365, [#allocation15]
        $region40: #{recurrent_forward.9} parent=11 // pred_fallthru
          _
        // Predicated region
        $region41: #{recurrent_forward.9} parent=11 // pred_check
          %p368 = pneg %p221
        $region42: #{recurrent_forward.9} parent=11 // pred_check_branch
          %370 = sbr.rel (%p368) target = $region44
        $region43: #{recurrent_forward.9} parent=11 // pred_region
          %s372 = ssub.s32 128, 128
          %373 = vsyncadd [#allocation15], %s372
          %s375 = sshll.u32 [#allocation16], 4
          %s376 = int_to_ptr.vmem [resolvable:$true] %s375
          %378 = dma.hbm_to_vmem [thread:$0]  %s8, 128, %s376, [#allocation15]
        $region44: #{recurrent_forward.9} parent=11 // pred_fallthru
          _
        // Predicated region
        $region45: #{recurrent_forward.9} parent=11 // pred_check
          %p379 = pneg %p242
        $region46: #{recurrent_forward.9} parent=11 // pred_check_branch
          %381 = sbr.rel (%p379) target = $region48
        $region47: #{recurrent_forward.9} parent=11 // pred_region
          %s383 = ssub.s32 128, 128
          %384 = vsyncadd [#allocation18], %s383
          %s386 = sshll.u32 [#allocation17], 4
          %s387 = int_to_ptr.vmem [resolvable:$true] %s386
          %389 = dma.hbm_to_vmem [thread:$0]  %s9, 128, %s387, [#allocation18]
        $region48: #{recurrent_forward.9} parent=11 // pred_fallthru
          _
      $region12: #{recurrent_forward.9} parent=5 // pred_fallthru
        _
      %p390 = scmp.lt.s32.totalorder %s27, 2
      // Predicated region
      $region49: #{recurrent_forward.9} parent=5 // pred_check
        %p391 = pneg %p390
      $region50: #{recurrent_forward.9} parent=5 // pred_check_branch
        %393 = sbr.rel (%p391) target = $region52
      $region51: #{recurrent_forward.9} parent=5 // pred_region
        // Predicated region
        $region53: #{recurrent_forward.9} parent=51 // pred_check
          %p394 = pneg %p47
        $region54: #{recurrent_forward.9} parent=51 // pred_check_branch
          %396 = sbr.rel (%p394) target = $region56
        $region55: #{recurrent_forward.9} parent=51 // pred_region
          %s397 = sand.u32 %s37, 1
          %s398 = scalar_lea.sflag [#allocation3], %s397
          %s399 = sand.u32 %s37, 1
          %s400 = smul.addr %s399, 8
          %s401 = scalar_lea.vmem [#allocation2], %s400
          %s403 = ssub.s32 128, 128
          %404 = vsyncadd %s398, %s403
          %s405 = smul.addr %s27, 128
          %s406 = scalar_lea.hbm %s0, %s405
          %s408 = sshll.u32 %s401, 4
          %s409 = int_to_ptr.vmem [resolvable:$true] %s408
          %411 = dma.hbm_to_vmem [thread:$0]  %s406, 128, %s409, %s398
        $region56: #{recurrent_forward.9} parent=51 // pred_fallthru
          _
      $region52: #{recurrent_forward.9} parent=5 // pred_fallthru
        _
      %p412 = scmp.le.s32.totalorder 1, %s27
      %p413 = scmp.lt.s32.totalorder %s27, 3
      %p414 = pnand %p412, %p413
      %p415 = pneg %p414
      // Predicated region
      $region57: #{recurrent_forward.9} parent=5 // pred_check
        _
      $region58: #{recurrent_forward.9} parent=5 // pred_check_branch
        %417 = sbr.rel (%p414) target = $region60
      $region59: #{recurrent_forward.9} parent=5 // pred_region
        %s418 = ssub.s32 %s27, 1
        %s419 = sand.u32 %s40, 1
        %s420 = scalar_lea.sflag [#allocation3], %s419
        %s421 = sand.u32 %s40, 1
        %s422 = smul.addr %s421, 8
        %s423 = scalar_lea.vmem [#allocation2], %s422
        // Predicated region
        $region61: #{recurrent_forward.9} parent=59 // pred_check
          %p424 = pneg %p53
        $region62: #{recurrent_forward.9} parent=59 // pred_check_branch
          %426 = sbr.rel (%p424) target = $region64
        $region63: #{recurrent_forward.9} parent=59 // pred_region
          %427 = dma.done %s420, 128
        $region64: #{recurrent_forward.9} parent=59 // pred_fallthru
          _
        // Predicated region
        $region65: #{recurrent_forward.9} parent=59 // pred_check
          %p428 = pneg %p74
        $region66: #{recurrent_forward.9} parent=59 // pred_check_branch
          %430 = sbr.rel (%p428) target = $region68
        $region67: #{recurrent_forward.9} parent=59 // pred_region
          %431 = dma.done [#allocation6], 16
        $region68: #{recurrent_forward.9} parent=59 // pred_fallthru
          _
        // Predicated region
        $region69: #{recurrent_forward.9} parent=59 // pred_check
          %p432 = pneg %p95
        $region70: #{recurrent_forward.9} parent=59 // pred_check_branch
          %434 = sbr.rel (%p432) target = $region72
        $region71: #{recurrent_forward.9} parent=59 // pred_region
          %435 = dma.done [#allocation6], 3072
        $region72: #{recurrent_forward.9} parent=59 // pred_fallthru
          _
        // Predicated region
        $region73: #{recurrent_forward.9} parent=59 // pred_check
          %p436 = pneg %p116
        $region74: #{recurrent_forward.9} parent=59 // pred_check_branch
          %438 = sbr.rel (%p436) target = $region76
        $region75: #{recurrent_forward.9} parent=59 // pred_region
          %439 = dma.done [#allocation9], 1024
        $region76: #{recurrent_forward.9} parent=59 // pred_fallthru
          _
        // Predicated region
        $region77: #{recurrent_forward.9} parent=59 // pred_check
          %p440 = pneg %p137
        $region78: #{recurrent_forward.9} parent=59 // pred_check_branch
          %442 = sbr.rel (%p440) target = $region80
        $region79: #{recurrent_forward.9} parent=59 // pred_region
          %443 = dma.done [#allocation9], 16
        $region80: #{recurrent_forward.9} parent=59 // pred_fallthru
          _
        // Predicated region
        $region81: #{recurrent_forward.9} parent=59 // pred_check
          %p444 = pneg %p158
        $region82: #{recurrent_forward.9} parent=59 // pred_check_branch
          %446 = sbr.rel (%p444) target = $region84
        $region83: #{recurrent_forward.9} parent=59 // pred_region
          %447 = dma.done [#allocation12], 4096
        $region84: #{recurrent_forward.9} parent=59 // pred_fallthru
          _
        // Predicated region
        $region85: #{recurrent_forward.9} parent=59 // pred_check
          %p448 = pneg %p179
        $region86: #{recurrent_forward.9} parent=59 // pred_check_branch
          %450 = sbr.rel (%p448) target = $region88
        $region87: #{recurrent_forward.9} parent=59 // pred_region
          %451 = dma.done [#allocation12], 2048
        $region88: #{recurrent_forward.9} parent=59 // pred_fallthru
          _
        // Predicated region
        $region89: #{recurrent_forward.9} parent=59 // pred_check
          %p452 = pneg %p200
        $region90: #{recurrent_forward.9} parent=59 // pred_check_branch
          %454 = sbr.rel (%p452) target = $region92
        $region91: #{recurrent_forward.9} parent=59 // pred_region
          %455 = dma.done [#allocation15], 128
        $region92: #{recurrent_forward.9} parent=59 // pred_fallthru
          _
        // Predicated region
        $region93: #{recurrent_forward.9} parent=59 // pred_check
          %p456 = pneg %p221
        $region94: #{recurrent_forward.9} parent=59 // pred_check_branch
          %458 = sbr.rel (%p456) target = $region96
        $region95: #{recurrent_forward.9} parent=59 // pred_region
          %459 = dma.done [#allocation15], 128
        $region96: #{recurrent_forward.9} parent=59 // pred_fallthru
          _
        // Predicated region
        $region97: #{recurrent_forward.9} parent=59 // pred_check
          %p460 = pneg %p242
        $region98: #{recurrent_forward.9} parent=59 // pred_check_branch
          %462 = sbr.rel (%p460) target = $region100
        $region99: #{recurrent_forward.9} parent=59 // pred_region
          %463 = dma.done [#allocation18], 128
        $region100: #{recurrent_forward.9} parent=59 // pred_fallthru
          _
        %s464 = sand.u32 %s40, 1
        %s465 = scalar_lea.sflag [#allocation3], %s464
        %s466 = sand.u32 %s40, 1
        %s467 = smul.addr %s466, 8
        %s468 = scalar_lea.vmem [#allocation2], %s467
        %p469 = pneg %p53
        %p470 = pneg %p50
        %p471 = pneg %p74
        %p472 = pneg %p71
        %p473 = pneg %p95
        %p474 = pneg %p92
        %p475 = pneg %p116
        %p476 = pneg %p113
        %p477 = pneg %p137
        %p478 = pneg %p134
        %p479 = pneg %p158
        %p480 = pneg %p155
        %p481 = pneg %p179
        %p482 = pneg %p176
        %p483 = pneg %p200
        %p484 = pneg %p197
        %p485 = pneg %p221
        %p486 = pneg %p218
        %p487 = pneg %p242
        %p488 = pneg %p239
        %p489 = pneg %p268
        %p490 = pneg %p265
        %s491 = sand.u32 %s255, 1
        %s492 = scalar_lea.sflag [#allocation4], %s491
        %s493 = sand.u32 %s255, 1
        %s494 = smul.addr %s493, 8
        %s495 = scalar_lea.vmem [#allocation19], %s494
        %v497 = vld [vmem:[%s423] sm:$0xff]
        %v498 = vld [vmem:[#allocation5] sm:$0x1]
        %v499 = vld [vmem:[#allocation10] sm:$0x1]
        %v500 = vld [vmem:[#allocation14] sm:$0xff]
        %v501 = vld [vmem:[#allocation16] sm:$0xff]
        %v502 = vld [vmem:[#allocation17] sm:$0xff]
        %v503 = vmul.f32 %v497, %v497
        %504 = vadd.xlane.f32.xlu0 %v503
        %v505 = vpop.xlane.xlu0 %504
        %v506 = vrcp.pop 128.0
        %v507 = vmul.f32 %v505, %v506
        %v508 = vadd.f32 %v507, 1e-06
        %v509 = vrsqrt.pop %v508
        %v510 = vmul.f32 %v497, %v509
        %v512 = vlaneseq
        %v513 = vshrl.u32 %v512, 7
        %v514 = vsub.s32 0, %v513
        %v515 = vrot.slane %v498, %v514
        %v517 = vmul.f32 %v510, %v515
        %v518 = vpack.c.bf16 %v517, %v517
        %v519 = vld [vmem:[#allocation7] sm:$0xff]
        %v520 = vld [vmem:[#allocation7 + $0x8] sm:$0xf]
        %v521 = vld [vmem:[#allocation7 + $0xc] sm:$0xff]
        %v522 = vld [vmem:[#allocation7 + $0x14] sm:$0xf]
        %v523 = vld [vmem:[#allocation7 + $0x18] sm:$0xff]
        %v524 = vld [vmem:[#allocation7 + $0x20] sm:$0xf]
        %v525 = vld [vmem:[#allocation7 + $0x24] sm:$0xff]
        %v526 = vld [vmem:[#allocation7 + $0x2c] sm:$0xf]
        %v527 = vld [vmem:[#allocation7 + $0x30] sm:$0xff]
        %v528 = vld [vmem:[#allocation7 + $0x38] sm:$0xf]
        %v529 = vld [vmem:[#allocation7 + $0x3c] sm:$0xff]
        %v530 = vld [vmem:[#allocation7 + $0x44] sm:$0xf]
        %v531 = vld [vmem:[#allocation7 + $0x48] sm:$0xff]
        %v532 = vld [vmem:[#allocation7 + $0x50] sm:$0xf]
        %v533 = vld [vmem:[#allocation7 + $0x54] sm:$0xff]
        %v534 = vld [vmem:[#allocation7 + $0x5c] sm:$0xf]
        %v535 = vld [vmem:[#allocation7 + $0x60] sm:$0xff]
        %v536 = vld [vmem:[#allocation7 + $0x68] sm:$0xf]
        %v537 = vld [vmem:[#allocation7 + $0x6c] sm:$0xff]
        %v538 = vld [vmem:[#allocation7 + $0x74] sm:$0xf]
        %v539 = vld [vmem:[#allocation7 + $0x78] sm:$0xff]
        %v540 = vld [vmem:[#allocation7 + $0x80] sm:$0xf]
        %v541 = vld [vmem:[#allocation7 + $0x84] sm:$0xff]
        %v542 = vld [vmem:[#allocation7 + $0x8c] sm:$0xf]
        %v543 = vld [vmem:[#allocation7 + $0x90] sm:$0xff]
        %v544 = vld [vmem:[#allocation7 + $0x98] sm:$0xf]
        %v545 = vld [vmem:[#allocation7 + $0x9c] sm:$0xff]
        %v546 = vld [vmem:[#allocation7 + $0xa4] sm:$0xf]
        %v547 = vld [vmem:[#allocation7 + $0xa8] sm:$0xff]
        %v548 = vld [vmem:[#allocation7 + $0xb0] sm:$0xf]
        %v549 = vld [vmem:[#allocation7 + $0xb4] sm:$0xff]
        %v550 = vld [vmem:[#allocation7 + $0xbc] sm:$0xf]
        %v583 = vunpack.c.l.b16 %v519
        %v584 = vunpack.c.h.b16 %v519
        %v585 = vunpack.c.l.b16 %v520
        %v586 = vunpack.c.l.b16 %v521
        %v587 = vunpack.c.h.b16 %v521
        %v588 = vunpack.c.l.b16 %v522
        %v589 = vunpack.c.l.b16 %v523
        %v590 = vunpack.c.h.b16 %v523
        %v591 = vunpack.c.l.b16 %v524
        %v592 = vunpack.c.l.b16 %v525
        %v593 = vunpack.c.h.b16 %v525
        %v594 = vunpack.c.l.b16 %v526
        %v595 = vunpack.c.l.b16 %v527
        %v596 = vunpack.c.h.b16 %v527
        %v597 = vunpack.c.l.b16 %v528
        %v598 = vunpack.c.l.b16 %v529
        %v599 = vunpack.c.h.b16 %v529
        %v600 = vunpack.c.l.b16 %v530
        %v601 = vunpack.c.l.b16 %v531
        %v602 = vunpack.c.h.b16 %v531
        %v603 = vunpack.c.l.b16 %v532
        %v604 = vunpack.c.l.b16 %v533
        %v605 = vunpack.c.h.b16 %v533
        %v606 = vunpack.c.l.b16 %v534
        %v607 = vunpack.c.l.b16 %v535
        %v608 = vunpack.c.h.b16 %v535
        %v609 = vunpack.c.l.b16 %v536
        %v610 = vunpack.c.l.b16 %v537
        %v611 = vunpack.c.h.b16 %v537
        %v612 = vunpack.c.l.b16 %v538
        %v613 = vunpack.c.l.b16 %v539
        %v614 = vunpack.c.h.b16 %v539
        %v615 = vunpack.c.l.b16 %v540
        %v616 = vunpack.c.l.b16 %v541
        %v617 = vunpack.c.h.b16 %v541
        %v618 = vunpack.c.l.b16 %v542
        %v619 = vunpack.c.l.b16 %v543
        %v620 = vunpack.c.h.b16 %v543
        %v621 = vunpack.c.l.b16 %v544
        %v622 = vunpack.c.l.b16 %v545
        %v623 = vunpack.c.h.b16 %v545
        %v624 = vunpack.c.l.b16 %v546
        %v625 = vunpack.c.l.b16 %v547
        %v626 = vunpack.c.h.b16 %v547
        %v627 = vunpack.c.l.b16 %v548
        %v628 = vunpack.c.l.b16 %v549
        %v629 = vunpack.c.h.b16 %v549
        %v630 = vunpack.c.l.b16 %v550
        %v631 = vpack.c.b16 %v586, %v583
        %v632 = vpack.c.b16 %v587, %v584
        %v633 = vpack.c.b16 %v588, %v585
        %v634 = vpack.c.b16 %v592, %v589
        %v635 = vpack.c.b16 %v593, %v590
        %v636 = vpack.c.b16 %v594, %v591
        %v637 = vpack.c.b16 %v598, %v595
        %v638 = vpack.c.b16 %v599, %v596
        %v639 = vpack.c.b16 %v600, %v597
        %v640 = vpack.c.b16 %v604, %v601
        %v641 = vpack.c.b16 %v605, %v602
        %v642 = vpack.c.b16 %v606, %v603
        %v643 = vpack.c.b16 %v610, %v607
        %v644 = vpack.c.b16 %v611, %v608
        %v645 = vpack.c.b16 %v612, %v609
        %v646 = vpack.c.b16 %v616, %v613
        %v647 = vpack.c.b16 %v617, %v614
        %v648 = vpack.c.b16 %v618, %v615
        %v649 = vpack.c.b16 %v622, %v619
        %v650 = vpack.c.b16 %v623, %v620
        %v651 = vpack.c.b16 %v624, %v621
        %v652 = vpack.c.b16 %v628, %v625
        %v653 = vpack.c.b16 %v629, %v626
        %v654 = vpack.c.b16 %v630, %v627
        %679 = vmatprep.subr.bf16.mxu0 %v632
        %680 = vmatpush1.bf16.msra.mxu0 %v631
        %681 = vmatprep.subr.bf16.mxu0 %v635
        %682 = vmatpush1.bf16.msra.mxu0 %v634
        %683 = vmatprep.subr.bf16.mxu0 %v638
        %684 = vmatpush1.bf16.msra.mxu0 %v637
        %685 = vmatprep.subr.bf16.mxu0 %v641
        %686 = vmatpush1.bf16.msra.mxu0 %v640
        %687 = vmatprep.subr.bf16.mxu0 %v644
        %688 = vmatpush1.bf16.msra.mxu0 %v643
        %689 = vmatprep.subr.bf16.mxu0 %v647
        %690 = vmatpush1.bf16.msra.mxu0 %v646
        %691 = vmatprep.subr.bf16.mxu0 %v650
        %692 = vmatpush1.bf16.msra.mxu0 %v649
        %693 = vmatprep.subr.bf16.mxu0 %v653
        %694 = vmatpush1.bf16.msra.mxu0 %v652
        %695 = vmatprep.subr.bf16.mxu0 0
        %696 = vmatpush1.bf16.msra.mxu0 0
        %697 = vmatprep.subr.bf16.mxu0 0
        %698 = vmatpush1.bf16.msra.mxu0 0
        %699 = vmatprep.subr.bf16.mxu0 0
        %700 = vmatpush1.bf16.msra.mxu0 0
        %701 = vmatprep.subr.bf16.mxu0 0
        %702 = vmatpush1.bf16.msra.mxu0 0
        %703 = vmatprep.subr.bf16.mxu0 0
        %704 = vmatpush1.bf16.msra.mxu0 0
        %705 = vmatprep.subr.bf16.mxu0 0
        %706 = vmatpush1.bf16.msra.mxu0 0
        %707 = vmatprep.subr.bf16.mxu0 0
        %708 = vmatpush1.bf16.msra.mxu0 0
        %709 = vmatprep.subr.bf16.mxu0 0
        %710 = vmatpush1.bf16.msra.mxu0 0
        %711 = vmatprep.mubr.bf16.mxu0 0
        %712 = vmatmul.mubr.bf16.gmra.mrb[0].mxu0 %v518
        %v713 = vpop.f32.mrb[0].mxu0
        %v714 = vadd.f32 0.0, %v713
        %v715 = vpop.f32.mrb[0].mxu0
        %v716 = vadd.f32 0.0, %v715
        %v717 = vpop.f32.mrb[0].mxu0
        %v718 = vpop.f32.mrb[0].mxu0
        %719 = vdwg.mxu0
        %720 = vmatprep.subr.bf16.mxu0 0
        %721 = vmatpush1.bf16.msra.mxu0 %v633
        %722 = vmatprep.subr.bf16.mxu0 0
        %723 = vmatpush1.bf16.msra.mxu0 %v636
        %724 = vmatprep.subr.bf16.mxu0 0
        %725 = vmatpush1.bf16.msra.mxu0 %v639
        %726 = vmatprep.subr.bf16.mxu0 0
        %727 = vmatpush1.bf16.msra.mxu0 %v642
        %728 = vmatprep.subr.bf16.mxu0 0
        %729 = vmatpush1.bf16.msra.mxu0 %v645
        %730 = vmatprep.subr.bf16.mxu0 0
        %731 = vmatpush1.bf16.msra.mxu0 %v648
        %732 = vmatprep.subr.bf16.mxu0 0
        %733 = vmatpush1.bf16.msra.mxu0 %v651
        %734 = vmatprep.subr.bf16.mxu0 0
        %735 = vmatpush1.bf16.msra.mxu0 %v654
        %736 = vmatprep.subr.bf16.mxu0 0
        %737 = vmatpush1.bf16.msra.mxu0 0
        %738 = vmatprep.subr.bf16.mxu0 0
        %739 = vmatpush1.bf16.msra.mxu0 0
        %740 = vmatprep.subr.bf16.mxu0 0
        %741 = vmatpush1.bf16.msra.mxu0 0
        %742 = vmatprep.subr.bf16.mxu0 0
        %743 = vmatpush1.bf16.msra.mxu0 0
        %744 = vmatprep.subr.bf16.mxu0 0
        %745 = vmatpush1.bf16.msra.mxu0 0
        %746 = vmatprep.subr.bf16.mxu0 0
        %747 = vmatpush1.bf16.msra.mxu0 0
        %748 = vmatprep.subr.bf16.mxu0 0
        %749 = vmatpush1.bf16.msra.mxu0 0
        %750 = vmatprep.subr.bf16.mxu0 0
        %751 = vmatpush1.bf16.msra.mxu0 0
        %752 = vmatprep.mubr.bf16.mxu0 0
        %753 = vmatmul.mubr.bf16.gmra.mrb[0].mxu0 %v518
        %v754 = vpop.f32.mrb[0].mxu0
        %v755 = vadd.f32 0.0, %v754
        %v756 = vpop.f32.mrb[0].mxu0
        %v757 = vpop.f32.mrb[0].mxu0
        %v758 = vpop.f32.mrb[0].mxu0
        %759 = vdwg.mxu0
        %vm760 = vcmask 1047808
        %761 = vrot.lane.b32.xlu0 %v714, 32
        %v762 = vpop.permute.xlu0 %761
        %v763 = vsel %vm760, %v762, %v714
        %764 = vrot.lane.b32.xlu0 %v763, 32
        %v765 = vpop.permute.xlu0 %764
        %v766 = vsel %vm760, %v765, %v714
        %v767 = vmul.f32 %v714, %v500
        %769 = vrot.lane.b32.xlu0 %v501, 16
        %v770 = vpop.permute.xlu0 %769
        %v772 = vmul.f32 %v766, %v770
        %774 = vrot.lane.b32.xlu0 %v772, 112
        %v775 = vpop.permute.xlu0 %774
        %v777 = vadd.f32 %v767, %v775
        %778 = vrot.lane.b32.xlu0 %v716, 32
        %v779 = vpop.permute.xlu0 %778
        %v780 = vsel %vm760, %v779, %v716
        %781 = vrot.lane.b32.xlu0 %v780, 32
        %v782 = vpop.permute.xlu0 %781
        %v783 = vsel %vm760, %v782, %v716
        %v784 = vmul.f32 %v716, %v500
        %v785 = vmul.f32 %v783, %v770
        %787 = vrot.lane.b32.xlu0 %v785, 112
        %v788 = vpop.permute.xlu0 %787
        %v790 = vadd.f32 %v784, %v788
        %v791 = vpack.c.bf16 %v777, %v777
        %v792 = vpack.c.bf16 %v790, %v790
        %vm793 = vcmask 261120
        %v795 = vsel %vm793, %v791, 0
        %v798 = vsel %vm793, %v792, 0
        %800 = vmatprep.subr.bf16.mxu0 0
        %801 = vmatpush1.bf16.xpose.msra.mxu0 %v798
        %802 = vmatprep.subr.bf16.mxu0 0
        %803 = vmatpush1.bf16.xpose.msra.mxu0 0
        %804 = vmatprep.subr.bf16.mxu0 0
        %805 = vmatpush1.bf16.xpose.msra.mxu0 0
        %806 = vmatprep.subr.bf16.mxu0 0
        %807 = vmatpush1.bf16.xpose.msra.mxu0 0
        %808 = vmatprep.subr.bf16.mxu0 0
        %809 = vmatpush1.bf16.xpose.msra.mxu0 0
        %810 = vmatprep.subr.bf16.mxu0 0
        %811 = vmatpush1.bf16.xpose.msra.mxu0 0
        %812 = vmatprep.subr.bf16.mxu0 0
        %813 = vmatpush1.bf16.xpose.msra.mxu0 0
        %814 = vmatprep.subr.bf16.mxu0 0
        %815 = vmatpush1.bf16.xpose.msra.mxu0 0
        %816 = vmatprep.subr.bf16.mxu0 0
        %817 = vmatpush1.bf16.xpose.msra.mxu0 0
        %818 = vmatprep.subr.bf16.mxu0 0
        %819 = vmatpush1.bf16.xpose.msra.mxu0 0
        %820 = vmatprep.subr.bf16.mxu0 0
        %821 = vmatpush1.bf16.xpose.msra.mxu0 0
        %822 = vmatprep.subr.bf16.mxu0 0
        %823 = vmatpush1.bf16.xpose.msra.mxu0 0
        %824 = vmatprep.subr.bf16.mxu0 0
        %825 = vmatpush1.bf16.xpose.msra.mxu0 0
        %826 = vmatprep.subr.bf16.mxu0 0
        %827 = vmatpush1.bf16.xpose.msra.mxu0 0
        %828 = vmatprep.subr.bf16.mxu0 0
        %829 = vmatpush1.bf16.xpose.msra.mxu0 0
        %830 = vmatprep.subr.bf16.mxu0 0
        %831 = vmatpush1.bf16.xpose.msra.mxu0 0
        %832 = vmatprep.mubr.bf16.mxu0 0
        %833 = vmatmul.mubr.bf16.gmra.mrb[0].mxu0 %v795
        %v834 = vpop.f32.mrb[0].mxu0
        %v835 = vadd.f32 0.0, %v834
        %v836 = vpop.f32.mrb[0].mxu0
        %v837 = vpop.f32.mrb[0].mxu0
        %v838 = vpop.f32.mrb[0].mxu0
        %839 = vdwg.mxu0
        %v840 = vmul.f32 %v835, 0.17677669
        %v841 = vadd.f32 %v840, %v502
        %vm842 = vcmask 64512
        %v843 = vsel %vm842, %v841, -inf
        %844 = vmax.xlane.f32.xlu0 %v843
        %v845 = vpop.xlane.xlu0 %844
        %v846 = vsub.f32 %v841, %v845
        %v847 = vmul.f32 %v846, 1.442695
        %v848 = vpow.pop %v847
        %v849 = vsel %vm842, %v848, 0.0
        %850 = vadd.xlane.f32.xlu0 %v849
        %v851 = vpop.xlane.xlu0 %850
        %v852 = vrcp.pop %v851
        %v853 = vmul.f32 %v848, %v852
        %v854 = vpack.c.bf16 %v853, %v853
        %v855 = vpack.c.bf16 %v755, %v755
        %v857 = vsel %vm842, %v854, 0
        %vm859 = vcmask 1043456
        %v861 = vsel %vm859, %v855, 0
        %863 = vmatprep.subr.bf16.mxu0 0
        %864 = vmatpush1.bf16.msra.mxu0 %v861
        %865 = vmatprep.subr.bf16.mxu0 0
        %866 = vmatpush1.bf16.msra.mxu0 0
        %867 = vmatprep.subr.bf16.mxu0 0
        %868 = vmatpush1.bf16.msra.mxu0 0
        %869 = vmatprep.subr.bf16.mxu0 0
        %870 = vmatpush1.bf16.msra.mxu0 0
        %871 = vmatprep.subr.bf16.mxu0 0
        %872 = vmatpush1.bf16.msra.mxu0 0
        %873 = vmatprep.subr.bf16.mxu0 0
        %874 = vmatpush1.bf16.msra.mxu0 0
        %875 = vmatprep.subr.bf16.mxu0 0
        %876 = vmatpush1.bf16.msra.mxu0 0
        %877 = vmatprep.subr.bf16.mxu0 0
        %878 = vmatpush1.bf16.msra.mxu0 0
        %879 = vmatprep.subr.bf16.mxu0 0
        %880 = vmatpush1.bf16.msra.mxu0 0
        %881 = vmatprep.subr.bf16.mxu0 0
        %882 = vmatpush1.bf16.msra.mxu0 0
        %883 = vmatprep.subr.bf16.mxu0 0
        %884 = vmatpush1.bf16.msra.mxu0 0
        %885 = vmatprep.subr.bf16.mxu0 0
        %886 = vmatpush1.bf16.msra.mxu0 0
        %887 = vmatprep.subr.bf16.mxu0 0
        %888 = vmatpush1.bf16.msra.mxu0 0
        %889 = vmatprep.subr.bf16.mxu0 0
        %890 = vmatpush1.bf16.msra.mxu0 0
        %891 = vmatprep.subr.bf16.mxu0 0
        %892 = vmatpush1.bf16.msra.mxu0 0
        %893 = vmatprep.subr.bf16.mxu0 0
        %894 = vmatpush1.bf16.msra.mxu0 0
        %895 = vmatprep.mubr.bf16.mxu0 0
        %896 = vmatmul.mubr.bf16.gmra.mrb[0].mxu0 %v857
        %v897 = vpop.f32.mrb[0].mxu0
        %v898 = vadd.f32 0.0, %v897
        %v899 = vpop.f32.mrb[0].mxu0
        %v900 = vpop.f32.mrb[0].mxu0
        %v901 = vpop.f32.mrb[0].mxu0
        %902 = vdwg.mxu0
        %904 = vrot.lane.b32.xlu0 %v714, 96
        %v905 = vpop.permute.xlu0 %904
        %907 = vrot.lane.b32.xlu0 %v905, 32
        %v908 = vpop.permute.xlu0 %907
        %v909 = vsel %vm760, %v908, %v905
        %910 = vrot.lane.b32.xlu0 %v909, 32
        %v911 = vpop.permute.xlu0 %910
        %v912 = vsel %vm760, %v911, %v905
        %914 = vrot.lane.b32.xlu0 %v500, 32
        %v915 = vpop.permute.xlu0 %914
        %v917 = vmul.f32 %v714, %v915
        %v918 = vmul.f32 %v912, %v770
        %920 = vrot.lane.b32.xlu0 %v918, 16
        %v921 = vpop.permute.xlu0 %920
        %v923 = vadd.f32 %v917, %v921
        %925 = vrot.lane.b32.xlu0 %v716, 96
        %v926 = vpop.permute.xlu0 %925
        %928 = vrot.lane.b32.xlu0 %v926, 32
        %v929 = vpop.permute.xlu0 %928
        %v930 = vsel %vm760, %v929, %v926
        %931 = vrot.lane.b32.xlu0 %v930, 32
        %v932 = vpop.permute.xlu0 %931
        %v933 = vsel %vm760, %v932, %v926
        %v934 = vmul.f32 %v716, %v915
        %v935 = vmul.f32 %v933, %v770
        %937 = vrot.lane.b32.xlu0 %v935, 16
        %v938 = vpop.permute.xlu0 %937
        %v940 = vadd.f32 %v934, %v938
        %v941 = vpack.c.bf16 %v923, %v923
        %v942 = vpack.c.bf16 %v940, %v940
        %944 = vrot.lane.b32.xlu0 %v941, 96
        %v945 = vpop.permute.xlu0 %944
        %947 = vrot.lane.b32.xlu0 %v942, 96
        %v948 = vpop.permute.xlu0 %947
        %v950 = vsel %vm793, %v945, 0
        %v953 = vsel %vm793, %v948, 0
        %955 = vmatprep.subr.bf16.mxu0 0
        %956 = vmatpush1.bf16.xpose.msra.mxu0 %v953
        %957 = vmatprep.subr.bf16.mxu0 0
        %958 = vmatpush1.bf16.xpose.msra.mxu0 0
        %959 = vmatprep.subr.bf16.mxu0 0
        %960 = vmatpush1.bf16.xpose.msra.mxu0 0
        %961 = vmatprep.subr.bf16.mxu0 0
        %962 = vmatpush1.bf16.xpose.msra.mxu0 0
        %963 = vmatprep.subr.bf16.mxu0 0
        %964 = vmatpush1.bf16.xpose.msra.mxu0 0
        %965 = vmatprep.subr.bf16.mxu0 0
        %966 = vmatpush1.bf16.xpose.msra.mxu0 0
        %967 = vmatprep.subr.bf16.mxu0 0
        %968 = vmatpush1.bf16.xpose.msra.mxu0 0
        %969 = vmatprep.subr.bf16.mxu0 0
        %970 = vmatpush1.bf16.xpose.msra.mxu0 0
        %971 = vmatprep.subr.bf16.mxu0 0
        %972 = vmatpush1.bf16.xpose.msra.mxu0 0
        %973 = vmatprep.subr.bf16.mxu0 0
        %974 = vmatpush1.bf16.xpose.msra.mxu0 0
        %975 = vmatprep.subr.bf16.mxu0 0
        %976 = vmatpush1.bf16.xpose.msra.mxu0 0
        %977 = vmatprep.subr.bf16.mxu0 0
        %978 = vmatpush1.bf16.xpose.msra.mxu0 0
        %979 = vmatprep.subr.bf16.mxu0 0
        %980 = vmatpush1.bf16.xpose.msra.mxu0 0
        %981 = vmatprep.subr.bf16.mxu0 0
        %982 = vmatpush1.bf16.xpose.msra.mxu0 0
        %983 = vmatprep.subr.bf16.mxu0 0
        %984 = vmatpush1.bf16.xpose.msra.mxu0 0
        %985 = vmatprep.subr.bf16.mxu0 0
        %986 = vmatpush1.bf16.xpose.msra.mxu0 0
        %987 = vmatprep.mubr.bf16.mxu0 0
        %988 = vmatmul.mubr.bf16.gmra.mrb[0].mxu0 %v950
        %v989 = vpop.f32.mrb[0].mxu0
        %v990 = vadd.f32 0.0, %v989
        %v991 = vpop.f32.mrb[0].mxu0
        %v992 = vpop.f32.mrb[0].mxu0
        %v993 = vpop.f32.mrb[0].mxu0
        %994 = vdwg.mxu0
        %v995 = vmul.f32 %v990, 0.17677669
        %v996 = vadd.f32 %v995, %v502
        %v997 = vsel %vm842, %v996, -inf
        %998 = vmax.xlane.f32.xlu0 %v997
        %v999 = vpop.xlane.xlu0 %998
        %v1000 = vsub.f32 %v996, %v999
        %v1001 = vmul.f32 %v1000, 1.442695
        %v1002 = vpow.pop %v1001
        %v1003 = vsel %vm842, %v1002, 0.0
        %1004 = vadd.xlane.f32.xlu0 %v1003
        %v1005 = vpop.xlane.xlu0 %1004
        %v1006 = vrcp.pop %v1005
        %v1007 = vmul.f32 %v1002, %v1006
        %v1008 = vpack.c.bf16 %v1007, %v1007
        %1010 = vrot.lane.b32.xlu0 %v855, 96
        %v1011 = vpop.permute.xlu0 %1010
        %v1013 = vsel %vm842, %v1008, 0
        %v1016 = vsel %vm859, %v1011, 0
        %1018 = vmatprep.subr.bf16.mxu0 0
        %1019 = vmatpush1.bf16.msra.mxu0 %v1016
        %1020 = vmatprep.subr.bf16.mxu0 0
        %1021 = vmatpush1.bf16.msra.mxu0 0
        %1022 = vmatprep.subr.bf16.mxu0 0
        %1023 = vmatpush1.bf16.msra.mxu0 0
        %1024 = vmatprep.subr.bf16.mxu0 0
        %1025 = vmatpush1.bf16.msra.mxu0 0
        %1026 = vmatprep.subr.bf16.mxu0 0
        %1027 = vmatpush1.bf16.msra.mxu0 0
        %1028 = vmatprep.subr.bf16.mxu0 0
        %1029 = vmatpush1.bf16.msra.mxu0 0
        %1030 = vmatprep.subr.bf16.mxu0 0
        %1031 = vmatpush1.bf16.msra.mxu0 0
        %1032 = vmatprep.subr.bf16.mxu0 0
        %1033 = vmatpush1.bf16.msra.mxu0 0
        %1034 = vmatprep.subr.bf16.mxu0 0
        %1035 = vmatpush1.bf16.msra.mxu0 0
        %1036 = vmatprep.subr.bf16.mxu0 0
        %1037 = vmatpush1.bf16.msra.mxu0 0
        %1038 = vmatprep.subr.bf16.mxu0 0
        %1039 = vmatpush1.bf16.msra.mxu0 0
        %1040 = vmatprep.subr.bf16.mxu0 0
        %1041 = vmatpush1.bf16.msra.mxu0 0
        %1042 = vmatprep.subr.bf16.mxu0 0
        %1043 = vmatpush1.bf16.msra.mxu0 0
        %1044 = vmatprep.subr.bf16.mxu0 0
        %1045 = vmatpush1.bf16.msra.mxu0 0
        %1046 = vmatprep.subr.bf16.mxu0 0
        %1047 = vmatpush1.bf16.msra.mxu0 0
        %1048 = vmatprep.subr.bf16.mxu0 0
        %1049 = vmatpush1.bf16.msra.mxu0 0
        %1050 = vmatprep.mubr.bf16.mxu0 0
        %1051 = vmatmul.mubr.bf16.gmra.mrb[0].mxu0 %v1013
        %v1052 = vpop.f32.mrb[0].mxu0
        %v1053 = vadd.f32 0.0, %v1052
        %v1054 = vpop.f32.mrb[0].mxu0
        %v1055 = vpop.f32.mrb[0].mxu0
        %v1056 = vpop.f32.mrb[0].mxu0
        %1057 = vdwg.mxu0
        %1058 = vrot.lane.b32.xlu0 %v714, 64
        %v1059 = vpop.permute.xlu0 %1058
        %1061 = vrot.lane.b32.xlu0 %v1059, 32
        %v1062 = vpop.permute.xlu0 %1061
        %v1063 = vsel %vm760, %v1062, %v1059
        %1064 = vrot.lane.b32.xlu0 %v1063, 32
        %v1065 = vpop.permute.xlu0 %1064
        %v1066 = vsel %vm760, %v1065, %v1059
        %1067 = vrot.lane.b32.xlu0 %v500, 64
        %v1068 = vpop.permute.xlu0 %1067
        %v1070 = vmul.f32 %v714, %v1068
        %v1071 = vmul.f32 %v1066, %v770
        %1073 = vrot.lane.b32.xlu0 %v1071, 48
        %v1074 = vpop.permute.xlu0 %1073
        %v1076 = vadd.f32 %v1070, %v1074
        %1077 = vrot.lane.b32.xlu0 %v716, 64
        %v1078 = vpop.permute.xlu0 %1077
        %1080 = vrot.lane.b32.xlu0 %v1078, 32
        %v1081 = vpop.permute.xlu0 %1080
        %v1082 = vsel %vm760, %v1081, %v1078
        %1083 = vrot.lane.b32.xlu0 %v1082, 32
        %v1084 = vpop.permute.xlu0 %1083
        %v1085 = vsel %vm760, %v1084, %v1078
        %v1086 = vmul.f32 %v716, %v1068
        %v1087 = vmul.f32 %v1085, %v770
        %1089 = vrot.lane.b32.xlu0 %v1087, 48
        %v1090 = vpop.permute.xlu0 %1089
        %v1092 = vadd.f32 %v1086, %v1090
        %v1093 = vpack.c.bf16 %v1076, %v1076
        %v1094 = vpack.c.bf16 %v1092, %v1092
        %1096 = vrot.lane.b32.xlu0 %v1093, 64
        %v1097 = vpop.permute.xlu0 %1096
        %1099 = vrot.lane.b32.xlu0 %v1094, 64
        %v1100 = vpop.permute.xlu0 %1099
        %v1102 = vsel %vm793, %v1097, 0
        %v1105 = vsel %vm793, %v1100, 0
        %1107 = vmatprep.subr.bf16.mxu0 0
        %1108 = vmatpush1.bf16.xpose.msra.mxu0 %v1105
        %1109 = vmatprep.subr.bf16.mxu0 0
        %1110 = vmatpush1.bf16.xpose.msra.mxu0 0
        %1111 = vmatprep.subr.bf16.mxu0 0
        %1112 = vmatpush1.bf16.xpose.msra.mxu0 0
        %1113 = vmatprep.subr.bf16.mxu0 0
        %1114 = vmatpush1.bf16.xpose.msra.mxu0 0
        %1115 = vmatprep.subr.bf16.mxu0 0
        %1116 = vmatpush1.bf16.xpose.msra.mxu0 0
        %1117 = vmatprep.subr.bf16.mxu0 0
        %1118 = vmatpush1.bf16.xpose.msra.mxu0 0
        %1119 = vmatprep.subr.bf16.mxu0 0
        %1120 = vmatpush1.bf16.xpose.msra.mxu0 0
        %1121 = vmatprep.subr.bf16.mxu0 0
        %1122 = vmatpush1.bf16.xpose.msra.mxu0 0
        %1123 = vmatprep.subr.bf16.mxu0 0
        %1124 = vmatpush1.bf16.xpose.msra.mxu0 0
        %1125 = vmatprep.subr.bf16.mxu0 0
        %1126 = vmatpush1.bf16.xpose.msra.mxu0 0
        %1127 = vmatprep.subr.bf16.mxu0 0
        %1128 = vmatpush1.bf16.xpose.msra.mxu0 0
        %1129 = vmatprep.subr.bf16.mxu0 0
        %1130 = vmatpush1.bf16.xpose.msra.mxu0 0
        %1131 = vmatprep.subr.bf16.mxu0 0
        %1132 = vmatpush1.bf16.xpose.msra.mxu0 0
        %1133 = vmatprep.subr.bf16.mxu0 0
        %1134 = vmatpush1.bf16.xpose.msra.mxu0 0
        %1135 = vmatprep.subr.bf16.mxu0 0
        %1136 = vmatpush1.bf16.xpose.msra.mxu0 0
        %1137 = vmatprep.subr.bf16.mxu0 0
        %1138 = vmatpush1.bf16.xpose.msra.mxu0 0
        %1139 = vmatprep.mubr.bf16.mxu0 0
        %1140 = vmatmul.mubr.bf16.gmra.mrb[0].mxu0 %v1102
        %v1141 = vpop.f32.mrb[0].mxu0
        %v1142 = vadd.f32 0.0, %v1141
        %v1143 = vpop.f32.mrb[0].mxu0
        %v1144 = vpop.f32.mrb[0].mxu0
        %v1145 = vpop.f32.mrb[0].mxu0
        %1146 = vdwg.mxu0
        %v1147 = vmul.f32 %v1142, 0.17677669
        %v1148 = vadd.f32 %v1147, %v502
        %v1149 = vsel %vm842, %v1148, -inf
        %1150 = vmax.xlane.f32.xlu0 %v1149
        %v1151 = vpop.xlane.xlu0 %1150
        %v1152 = vsub.f32 %v1148, %v1151
        %v1153 = vmul.f32 %v1152, 1.442695
        %v1154 = vpow.pop %v1153
        %v1155 = vsel %vm842, %v1154, 0.0
        %1156 = vadd.xlane.f32.xlu0 %v1155
        %v1157 = vpop.xlane.xlu0 %1156
        %v1158 = vrcp.pop %v1157
        %v1159 = vmul.f32 %v1154, %v1158
        %v1160 = vpack.c.bf16 %v1159, %v1159
        %1161 = vrot.lane.b32.xlu0 %v855, 64
        %v1162 = vpop.permute.xlu0 %1161
        %v1164 = vsel %vm842, %v1160, 0
        %v1167 = vsel %vm859, %v1162, 0
        %1169 = vmatprep.subr.bf16.mxu0 0
        %1170 = vmatpush1.bf16.msra.mxu0 %v1167
        %1171 = vmatprep.subr.bf16.mxu0 0
        %1172 = vmatpush1.bf16.msra.mxu0 0
        %1173 = vmatprep.subr.bf16.mxu0 0
        %1174 = vmatpush1.bf16.msra.mxu0 0
        %1175 = vmatprep.subr.bf16.mxu0 0
        %1176 = vmatpush1.bf16.msra.mxu0 0
        %1177 = vmatprep.subr.bf16.mxu0 0
        %1178 = vmatpush1.bf16.msra.mxu0 0
        %1179 = vmatprep.subr.bf16.mxu0 0
        %1180 = vmatpush1.bf16.msra.mxu0 0
        %1181 = vmatprep.subr.bf16.mxu0 0
        %1182 = vmatpush1.bf16.msra.mxu0 0
        %1183 = vmatprep.subr.bf16.mxu0 0
        %1184 = vmatpush1.bf16.msra.mxu0 0
        %1185 = vmatprep.subr.bf16.mxu0 0
        %1186 = vmatpush1.bf16.msra.mxu0 0
        %1187 = vmatprep.subr.bf16.mxu0 0
        %1188 = vmatpush1.bf16.msra.mxu0 0
        %1189 = vmatprep.subr.bf16.mxu0 0
        %1190 = vmatpush1.bf16.msra.mxu0 0
        %1191 = vmatprep.subr.bf16.mxu0 0
        %1192 = vmatpush1.bf16.msra.mxu0 0
        %1193 = vmatprep.subr.bf16.mxu0 0
        %1194 = vmatpush1.bf16.msra.mxu0 0
        %1195 = vmatprep.subr.bf16.mxu0 0
        %1196 = vmatpush1.bf16.msra.mxu0 0
        %1197 = vmatprep.subr.bf16.mxu0 0
        %1198 = vmatpush1.bf16.msra.mxu0 0
        %1199 = vmatprep.subr.bf16.mxu0 0
        %1200 = vmatpush1.bf16.msra.mxu0 0
        %1201 = vmatprep.mubr.bf16.mxu0 0
        %1202 = vmatmul.mubr.bf16.gmra.mrb[0].mxu0 %v1164
        %v1203 = vpop.f32.mrb[0].mxu0
        %v1204 = vadd.f32 0.0, %v1203
        %v1205 = vpop.f32.mrb[0].mxu0
        %v1206 = vpop.f32.mrb[0].mxu0
        %v1207 = vpop.f32.mrb[0].mxu0
        %1208 = vdwg.mxu0
        %1209 = vrot.lane.b32.xlu0 %v714, 32
        %v1210 = vpop.permute.xlu0 %1209
        %1212 = vrot.lane.b32.xlu0 %v1210, 32
        %v1213 = vpop.permute.xlu0 %1212
        %v1214 = vsel %vm760, %v1213, %v1210
        %1215 = vrot.lane.b32.xlu0 %v1214, 32
        %v1216 = vpop.permute.xlu0 %1215
        %v1217 = vsel %vm760, %v1216, %v1210
        %1218 = vrot.lane.b32.xlu0 %v500, 96
        %v1219 = vpop.permute.xlu0 %1218
        %v1221 = vmul.f32 %v714, %v1219
        %v1222 = vmul.f32 %v1217, %v770
        %1224 = vrot.lane.b32.xlu0 %v1222, 80
        %v1225 = vpop.permute.xlu0 %1224
        %v1227 = vadd.f32 %v1221, %v1225
        %1228 = vrot.lane.b32.xlu0 %v716, 32
        %v1229 = vpop.permute.xlu0 %1228
        %1231 = vrot.lane.b32.xlu0 %v1229, 32
        %v1232 = vpop.permute.xlu0 %1231
        %v1233 = vsel %vm760, %v1232, %v1229
        %1234 = vrot.lane.b32.xlu0 %v1233, 32
        %v1235 = vpop.permute.xlu0 %1234
        %v1236 = vsel %vm760, %v1235, %v1229
        %v1237 = vmul.f32 %v716, %v1219
        %v1238 = vmul.f32 %v1236, %v770
        %1240 = vrot.lane.b32.xlu0 %v1238, 80
        %v1241 = vpop.permute.xlu0 %1240
        %v1243 = vadd.f32 %v1237, %v1241
        %v1244 = vpack.c.bf16 %v1227, %v1227
        %v1245 = vpack.c.bf16 %v1243, %v1243
        %1247 = vrot.lane.b32.xlu0 %v1244, 32
        %v1248 = vpop.permute.xlu0 %1247
        %1250 = vrot.lane.b32.xlu0 %v1245, 32
        %v1251 = vpop.permute.xlu0 %1250
        %v1253 = vsel %vm793, %v1248, 0
        %v1256 = vsel %vm793, %v1251, 0
        %1258 = vmatprep.subr.bf16.mxu0 0
        %1259 = vmatpush1.bf16.xpose.msra.mxu0 %v1256
        %1260 = vmatprep.subr.bf16.mxu0 0
        %1261 = vmatpush1.bf16.xpose.msra.mxu0 0
        %1262 = vmatprep.subr.bf16.mxu0 0
        %1263 = vmatpush1.bf16.xpose.msra.mxu0 0
        %1264 = vmatprep.subr.bf16.mxu0 0
        %1265 = vmatpush1.bf16.xpose.msra.mxu0 0
        %1266 = vmatprep.subr.bf16.mxu0 0
        %1267 = vmatpush1.bf16.xpose.msra.mxu0 0
        %1268 = vmatprep.subr.bf16.mxu0 0
        %1269 = vmatpush1.bf16.xpose.msra.mxu0 0
        %1270 = vmatprep.subr.bf16.mxu0 0
        %1271 = vmatpush1.bf16.xpose.msra.mxu0 0
        %1272 = vmatprep.subr.bf16.mxu0 0
        %1273 = vmatpush1.bf16.xpose.msra.mxu0 0
        %1274 = vmatprep.subr.bf16.mxu0 0
        %1275 = vmatpush1.bf16.xpose.msra.mxu0 0
        %1276 = vmatprep.subr.bf16.mxu0 0
        %1277 = vmatpush1.bf16.xpose.msra.mxu0 0
        %1278 = vmatprep.subr.bf16.mxu0 0
        %1279 = vmatpush1.bf16.xpose.msra.mxu0 0
        %1280 = vmatprep.subr.bf16.mxu0 0
        %1281 = vmatpush1.bf16.xpose.msra.mxu0 0
        %1282 = vmatprep.subr.bf16.mxu0 0
        %1283 = vmatpush1.bf16.xpose.msra.mxu0 0
        %1284 = vmatprep.subr.bf16.mxu0 0
        %1285 = vmatpush1.bf16.xpose.msra.mxu0 0
        %1286 = vmatprep.subr.bf16.mxu0 0
        %1287 = vmatpush1.bf16.xpose.msra.mxu0 0
        %1288 = vmatprep.subr.bf16.mxu0 0
        %1289 = vmatpush1.bf16.xpose.msra.mxu0 0
        %1290 = vmatprep.mubr.bf16.mxu0 0
        %1291 = vmatmul.mubr.bf16.gmra.mrb[0].mxu0 %v1253
        %v1292 = vpop.f32.mrb[0].mxu0
        %v1293 = vadd.f32 0.0, %v1292
        %v1294 = vpop.f32.mrb[0].mxu0
        %v1295 = vpop.f32.mrb[0].mxu0
        %v1296 = vpop.f32.mrb[0].mxu0
        %1297 = vdwg.mxu0
        %v1298 = vmul.f32 %v1293, 0.17677669
        %v1299 = vadd.f32 %v1298, %v502
        %v1300 = vsel %vm842, %v1299, -inf
        %1301 = vmax.xlane.f32.xlu0 %v1300
        %v1302 = vpop.xlane.xlu0 %1301
        %v1303 = vsub.f32 %v1299, %v1302
        %v1304 = vmul.f32 %v1303, 1.442695
        %v1305 = vpow.pop %v1304
        %v1306 = vsel %vm842, %v1305, 0.0
        %1307 = vadd.xlane.f32.xlu0 %v1306
        %v1308 = vpop.xlane.xlu0 %1307
        %v1309 = vrcp.pop %v1308
        %v1310 = vmul.f32 %v1305, %v1309
        %v1311 = vpack.c.bf16 %v1310, %v1310
        %1312 = vrot.lane.b32.xlu0 %v855, 32
        %v1313 = vpop.permute.xlu0 %1312
        %v1315 = vsel %vm842, %v1311, 0
        %v1318 = vsel %vm859, %v1313, 0
        %1320 = vmatprep.subr.bf16.mxu0 0
        %1321 = vmatpush1.bf16.msra.mxu0 %v1318
        %1322 = vmatprep.subr.bf16.mxu0 0
        %1323 = vmatpush1.bf16.msra.mxu0 0
        %1324 = vmatprep.subr.bf16.mxu0 0
        %1325 = vmatpush1.bf16.msra.mxu0 0
        %1326 = vmatprep.subr.bf16.mxu0 0
        %1327 = vmatpush1.bf16.msra.mxu0 0
        %1328 = vmatprep.subr.bf16.mxu0 0
        %1329 = vmatpush1.bf16.msra.mxu0 0
        %1330 = vmatprep.subr.bf16.mxu0 0
        %1331 = vmatpush1.bf16.msra.mxu0 0
        %1332 = vmatprep.subr.bf16.mxu0 0
        %1333 = vmatpush1.bf16.msra.mxu0 0
        %1334 = vmatprep.subr.bf16.mxu0 0
        %1335 = vmatpush1.bf16.msra.mxu0 0
        %1336 = vmatprep.subr.bf16.mxu0 0
        %1337 = vmatpush1.bf16.msra.mxu0 0
        %1338 = vmatprep.subr.bf16.mxu0 0
        %1339 = vmatpush1.bf16.msra.mxu0 0
        %1340 = vmatprep.subr.bf16.mxu0 0
        %1341 = vmatpush1.bf16.msra.mxu0 0
        %1342 = vmatprep.subr.bf16.mxu0 0
        %1343 = vmatpush1.bf16.msra.mxu0 0
        %1344 = vmatprep.subr.bf16.mxu0 0
        %1345 = vmatpush1.bf16.msra.mxu0 0
        %1346 = vmatprep.subr.bf16.mxu0 0
        %1347 = vmatpush1.bf16.msra.mxu0 0
        %1348 = vmatprep.subr.bf16.mxu0 0
        %1349 = vmatpush1.bf16.msra.mxu0 0
        %1350 = vmatprep.subr.bf16.mxu0 0
        %1351 = vmatpush1.bf16.msra.mxu0 0
        %1352 = vmatprep.mubr.bf16.mxu0 0
        %1353 = vmatmul.mubr.bf16.gmra.mrb[0].mxu0 %v1315
        %v1354 = vpop.f32.mrb[0].mxu0
        %v1355 = vadd.f32 0.0, %v1354
        %v1356 = vpop.f32.mrb[0].mxu0
        %v1357 = vpop.f32.mrb[0].mxu0
        %v1358 = vpop.f32.mrb[0].mxu0
        %1359 = vdwg.mxu0
        %1361 = vrot.lane.b32.xlu0 %v1053, 32
        %v1362 = vpop.permute.xlu0 %1361
        %1365 = vrot.lane.b32.xlu0 %v1204, 64
        %v1366 = vpop.permute.xlu0 %1365
        %1369 = vrot.lane.b32.xlu0 %v1355, 96
        %v1370 = vpop.permute.xlu0 %1369
        %v1372 = vsel %vm793, %v898, %v1362
        %vm1373 = vcmask 523264
        %v1374 = vsel %vm1373, %v1372, %v1366
        %vm1375 = vcmask 785408
        %v1376 = vsel %vm1375, %v1374, %v1370
        %v1377 = vpack.c.bf16 %v1376, %v1376
        %v1378 = vld [vmem:[#allocation8] sm:$0xf]
        %v1379 = vld [vmem:[#allocation8 + $0x4] sm:$0xf]
        %v1380 = vld [vmem:[#allocation8 + $0x8] sm:$0xf]
        %v1381 = vld [vmem:[#allocation8 + $0xc] sm:$0xf]
        %v1382 = vld [vmem:[#allocation8 + $0x10] sm:$0xf]
        %v1383 = vld [vmem:[#allocation8 + $0x14] sm:$0xf]
        %v1384 = vld [vmem:[#allocation8 + $0x18] sm:$0xf]
        %v1385 = vld [vmem:[#allocation8 + $0x1c] sm:$0xf]
        %v1386 = vld [vmem:[#allocation8 + $0x20] sm:$0xf]
        %v1387 = vld [vmem:[#allocation8 + $0x24] sm:$0xf]
        %v1388 = vld [vmem:[#allocation8 + $0x28] sm:$0xf]
        %v1389 = vld [vmem:[#allocation8 + $0x2c] sm:$0xf]
        %v1390 = vld [vmem:[#allocation8 + $0x30] sm:$0xf]
        %v1391 = vld [vmem:[#allocation8 + $0x34] sm:$0xf]
        %v1392 = vld [vmem:[#allocation8 + $0x38] sm:$0xf]
        %v1393 = vld [vmem:[#allocation8 + $0x3c] sm:$0xf]
        %v1410 = vunpack.c.l.b16 %v1378
        %v1411 = vunpack.c.l.b16 %v1379
        %v1412 = vunpack.c.l.b16 %v1380
        %v1413 = vunpack.c.l.b16 %v1381
        %v1414 = vunpack.c.l.b16 %v1382
        %v1415 = vunpack.c.l.b16 %v1383
        %v1416 = vunpack.c.l.b16 %v1384
        %v1417 = vunpack.c.l.b16 %v1385
        %v1418 = vunpack.c.l.b16 %v1386
        %v1419 = vunpack.c.l.b16 %v1387
        %v1420 = vunpack.c.l.b16 %v1388
        %v1421 = vunpack.c.l.b16 %v1389
        %v1422 = vunpack.c.l.b16 %v1390
        %v1423 = vunpack.c.l.b16 %v1391
        %v1424 = vunpack.c.l.b16 %v1392
        %v1425 = vunpack.c.l.b16 %v1393
        %v1426 = vpack.c.b16 %v1411, %v1410
        %v1427 = vpack.c.b16 %v1413, %v1412
        %v1428 = vpack.c.b16 %v1415, %v1414
        %v1429 = vpack.c.b16 %v1417, %v1416
        %v1430 = vpack.c.b16 %v1419, %v1418
        %v1431 = vpack.c.b16 %v1421, %v1420
        %v1432 = vpack.c.b16 %v1423, %v1422
        %v1433 = vpack.c.b16 %v1425, %v1424
        %1442 = vmatprep.subr.bf16.mxu0 0
        %1443 = vmatpush1.bf16.msra.mxu0 %v1426
        %1444 = vmatprep.subr.bf16.mxu0 0
        %1445 = vmatpush1.bf16.msra.mxu0 %v1427
        %1446 = vmatprep.subr.bf16.mxu0 0
        %1447 = vmatpush1.bf16.msra.mxu0 %v1428
        %1448 = vmatprep.subr.bf16.mxu0 0
        %1449 = vmatpush1.bf16.msra.mxu0 %v1429
        %1450 = vmatprep.subr.bf16.mxu0 0
        %1451 = vmatpush1.bf16.msra.mxu0 %v1430
        %1452 = vmatprep.subr.bf16.mxu0 0
        %1453 = vmatpush1.bf16.msra.mxu0 %v1431
        %1454 = vmatprep.subr.bf16.mxu0 0
        %1455 = vmatpush1.bf16.msra.mxu0 %v1432
        %1456 = vmatprep.subr.bf16.mxu0 0
        %1457 = vmatpush1.bf16.msra.mxu0 %v1433
        %1458 = vmatprep.subr.bf16.mxu0 0
        %1459 = vmatpush1.bf16.msra.mxu0 0
        %1460 = vmatprep.subr.bf16.mxu0 0
        %1461 = vmatpush1.bf16.msra.mxu0 0
        %1462 = vmatprep.subr.bf16.mxu0 0
        %1463 = vmatpush1.bf16.msra.mxu0 0
        %1464 = vmatprep.subr.bf16.mxu0 0
        %1465 = vmatpush1.bf16.msra.mxu0 0
        %1466 = vmatprep.subr.bf16.mxu0 0
        %1467 = vmatpush1.bf16.msra.mxu0 0
        %1468 = vmatprep.subr.bf16.mxu0 0
        %1469 = vmatpush1.bf16.msra.mxu0 0
        %1470 = vmatprep.subr.bf16.mxu0 0
        %1471 = vmatpush1.bf16.msra.mxu0 0
        %1472 = vmatprep.subr.bf16.mxu0 0
        %1473 = vmatpush1.bf16.msra.mxu0 0
        %1474 = vmatprep.mubr.bf16.mxu0 0
        %1475 = vmatmul.mubr.bf16.gmra.mrb[0].mxu0 %v1377
        %v1476 = vpop.f32.mrb[0].mxu0
        %v1477 = vadd.f32 0.0, %v1476
        %v1478 = vpop.f32.mrb[0].mxu0
        %v1479 = vpop.f32.mrb[0].mxu0
        %v1480 = vpop.f32.mrb[0].mxu0
        %1481 = vdwg.mxu0
        %v1482 = vadd.f32 %v497, %v1477
        %v1483 = vmul.f32 %v1482, %v1482
        %1484 = vadd.xlane.f32.xlu0 %v1483
        %v1485 = vpop.xlane.xlu0 %1484
        %v1486 = vmul.f32 %v1485, %v506
        %v1487 = vadd.f32 %v1486, 1e-06
        %v1488 = vrsqrt.pop %v1487
        %v1489 = vmul.f32 %v1482, %v1488
        %v1491 = vlaneseq
        %v1492 = vshrl.u32 %v1491, 7
        %v1493 = vsub.s32 0, %v1492
        %v1494 = vrot.slane %v499, %v1493
        %v1496 = vmul.f32 %v1489, %v1494
        %v1497 = vpack.c.bf16 %v1496, %v1496
        %v1498 = vld [vmem:[#allocation11] sm:$0xff]
        %v1499 = vld [vmem:[#allocation11 + $0x8] sm:$0xff]
        %v1500 = vld [vmem:[#allocation11 + $0x10] sm:$0xff]
        %v1501 = vld [vmem:[#allocation11 + $0x18] sm:$0xff]
        %v1502 = vld [vmem:[#allocation11 + $0x20] sm:$0xff]
        %v1503 = vld [vmem:[#allocation11 + $0x28] sm:$0xff]
        %v1504 = vld [vmem:[#allocation11 + $0x30] sm:$0xff]
        %v1505 = vld [vmem:[#allocation11 + $0x38] sm:$0xff]
        %v1506 = vld [vmem:[#allocation11 + $0x40] sm:$0xff]
        %v1507 = vld [vmem:[#allocation11 + $0x48] sm:$0xff]
        %v1508 = vld [vmem:[#allocation11 + $0x50] sm:$0xff]
        %v1509 = vld [vmem:[#allocation11 + $0x58] sm:$0xff]
        %v1510 = vld [vmem:[#allocation11 + $0x60] sm:$0xff]
        %v1511 = vld [vmem:[#allocation11 + $0x68] sm:$0xff]
        %v1512 = vld [vmem:[#allocation11 + $0x70] sm:$0xff]
        %v1513 = vld [vmem:[#allocation11 + $0x78] sm:$0xff]
        %v1514 = vld [vmem:[#allocation11 + $0x80] sm:$0xff]
        %v1515 = vld [vmem:[#allocation11 + $0x88] sm:$0xff]
        %v1516 = vld [vmem:[#allocation11 + $0x90] sm:$0xff]
        %v1517 = vld [vmem:[#allocation11 + $0x98] sm:$0xff]
        %v1518 = vld [vmem:[#allocation11 + $0xa0] sm:$0xff]
        %v1519 = vld [vmem:[#allocation11 + $0xa8] sm:$0xff]
        %v1520 = vld [vmem:[#allocation11 + $0xb0] sm:$0xff]
        %v1521 = vld [vmem:[#allocation11 + $0xb8] sm:$0xff]
        %v1522 = vld [vmem:[#allocation11 + $0xc0] sm:$0xff]
        %v1523 = vld [vmem:[#allocation11 + $0xc8] sm:$0xff]
        %v1524 = vld [vmem:[#allocation11 + $0xd0] sm:$0xff]
        %v1525 = vld [vmem:[#allocation11 + $0xd8] sm:$0xff]
        %v1526 = vld [vmem:[#allocation11 + $0xe0] sm:$0xff]
        %v1527 = vld [vmem:[#allocation11 + $0xe8] sm:$0xff]
        %v1528 = vld [vmem:[#allocation11 + $0xf0] sm:$0xff]
        %v1529 = vld [vmem:[#allocation11 + $0xf8] sm:$0xff]
        %v1562 = vunpack.c.l.b16 %v1498
        %v1563 = vunpack.c.h.b16 %v1498
        %v1564 = vunpack.c.l.b16 %v1499
        %v1565 = vunpack.c.h.b16 %v1499
        %v1566 = vunpack.c.l.b16 %v1500
        %v1567 = vunpack.c.h.b16 %v1500
        %v1568 = vunpack.c.l.b16 %v1501
        %v1569 = vunpack.c.h.b16 %v1501
        %v1570 = vunpack.c.l.b16 %v1502
        %v1571 = vunpack.c.h.b16 %v1502
        %v1572 = vunpack.c.l.b16 %v1503
        %v1573 = vunpack.c.h.b16 %v1503
        %v1574 = vunpack.c.l.b16 %v1504
        %v1575 = vunpack.c.h.b16 %v1504
        %v1576 = vunpack.c.l.b16 %v1505
        %v1577 = vunpack.c.h.b16 %v1505
        %v1578 = vunpack.c.l.b16 %v1506
        %v1579 = vunpack.c.h.b16 %v1506
        %v1580 = vunpack.c.l.b16 %v1507
        %v1581 = vunpack.c.h.b16 %v1507
        %v1582 = vunpack.c.l.b16 %v1508
        %v1583 = vunpack.c.h.b16 %v1508
        %v1584 = vunpack.c.l.b16 %v1509
        %v1585 = vunpack.c.h.b16 %v1509
        %v1586 = vunpack.c.l.b16 %v1510
        %v1587 = vunpack.c.h.b16 %v1510
        %v1588 = vunpack.c.l.b16 %v1511
        %v1589 = vunpack.c.h.b16 %v1511
        %v1590 = vunpack.c.l.b16 %v1512
        %v1591 = vunpack.c.h.b16 %v1512
        %v1592 = vunpack.c.l.b16 %v1513
        %v1593 = vunpack.c.h.b16 %v1513
        %v1594 = vunpack.c.l.b16 %v1514
        %v1595 = vunpack.c.h.b16 %v1514
        %v1596 = vunpack.c.l.b16 %v1515
        %v1597 = vunpack.c.h.b16 %v1515
        %v1598 = vunpack.c.l.b16 %v1516
        %v1599 = vunpack.c.h.b16 %v1516
        %v1600 = vunpack.c.l.b16 %v1517
        %v1601 = vunpack.c.h.b16 %v1517
        %v1602 = vunpack.c.l.b16 %v1518
        %v1603 = vunpack.c.h.b16 %v1518
        %v1604 = vunpack.c.l.b16 %v1519
        %v1605 = vunpack.c.h.b16 %v1519
        %v1606 = vunpack.c.l.b16 %v1520
        %v1607 = vunpack.c.h.b16 %v1520
        %v1608 = vunpack.c.l.b16 %v1521
        %v1609 = vunpack.c.h.b16 %v1521
        %v1610 = vunpack.c.l.b16 %v1522
        %v1611 = vunpack.c.h.b16 %v1522
        %v1612 = vunpack.c.l.b16 %v1523
        %v1613 = vunpack.c.h.b16 %v1523
        %v1614 = vunpack.c.l.b16 %v1524
        %v1615 = vunpack.c.h.b16 %v1524
        %v1616 = vunpack.c.l.b16 %v1525
        %v1617 = vunpack.c.h.b16 %v1525
        %v1618 = vunpack.c.l.b16 %v1526
        %v1619 = vunpack.c.h.b16 %v1526
        %v1620 = vunpack.c.l.b16 %v1527
        %v1621 = vunpack.c.h.b16 %v1527
        %v1622 = vunpack.c.l.b16 %v1528
        %v1623 = vunpack.c.h.b16 %v1528
        %v1624 = vunpack.c.l.b16 %v1529
        %v1625 = vunpack.c.h.b16 %v1529
        %v1626 = vpack.c.b16 %v1566, %v1562
        %v1627 = vpack.c.b16 %v1567, %v1563
        %v1628 = vpack.c.b16 %v1568, %v1564
        %v1629 = vpack.c.b16 %v1569, %v1565
        %v1630 = vpack.c.b16 %v1574, %v1570
        %v1631 = vpack.c.b16 %v1575, %v1571
        %v1632 = vpack.c.b16 %v1576, %v1572
        %v1633 = vpack.c.b16 %v1577, %v1573
        %v1634 = vpack.c.b16 %v1582, %v1578
        %v1635 = vpack.c.b16 %v1583, %v1579
        %v1636 = vpack.c.b16 %v1584, %v1580
        %v1637 = vpack.c.b16 %v1585, %v1581
        %v1638 = vpack.c.b16 %v1590, %v1586
        %v1639 = vpack.c.b16 %v1591, %v1587
        %v1640 = vpack.c.b16 %v1592, %v1588
        %v1641 = vpack.c.b16 %v1593, %v1589
        %v1642 = vpack.c.b16 %v1598, %v1594
        %v1643 = vpack.c.b16 %v1599, %v1595
        %v1644 = vpack.c.b16 %v1600, %v1596
        %v1645 = vpack.c.b16 %v1601, %v1597
        %v1646 = vpack.c.b16 %v1606, %v1602
        %v1647 = vpack.c.b16 %v1607, %v1603
        %v1648 = vpack.c.b16 %v1608, %v1604
        %v1649 = vpack.c.b16 %v1609, %v1605
        %v1650 = vpack.c.b16 %v1614, %v1610
        %v1651 = vpack.c.b16 %v1615, %v1611
        %v1652 = vpack.c.b16 %v1616, %v1612
        %v1653 = vpack.c.b16 %v1617, %v1613
        %v1654 = vpack.c.b16 %v1622, %v1618
        %v1655 = vpack.c.b16 %v1623, %v1619
        %v1656 = vpack.c.b16 %v1624, %v1620
        %v1657 = vpack.c.b16 %v1625, %v1621
        %1690 = vmatprep.subr.bf16.mxu0 %v1627
        %1691 = vmatpush1.bf16.msra.mxu0 %v1626
        %1692 = vmatprep.subr.bf16.mxu0 %v1631
        %1693 = vmatpush1.bf16.msra.mxu0 %v1630
        %1694 = vmatprep.subr.bf16.mxu0 %v1635
        %1695 = vmatpush1.bf16.msra.mxu0 %v1634
        %1696 = vmatprep.subr.bf16.mxu0 %v1639
        %1697 = vmatpush1.bf16.msra.mxu0 %v1638
        %1698 = vmatprep.subr.bf16.mxu0 %v1643
        %1699 = vmatpush1.bf16.msra.mxu0 %v1642
        %1700 = vmatprep.subr.bf16.mxu0 %v1647
        %1701 = vmatpush1.bf16.msra.mxu0 %v1646
        %1702 = vmatprep.subr.bf16.mxu0 %v1651
        %1703 = vmatpush1.bf16.msra.mxu0 %v1650
        %1704 = vmatprep.subr.bf16.mxu0 %v1655
        %1705 = vmatpush1.bf16.msra.mxu0 %v1654
        %1706 = vmatprep.subr.bf16.mxu0 0
        %1707 = vmatpush1.bf16.msra.mxu0 0
        %1708 = vmatprep.subr.bf16.mxu0 0
        %1709 = vmatpush1.bf16.msra.mxu0 0
        %1710 = vmatprep.subr.bf16.mxu0 0
        %1711 = vmatpush1.bf16.msra.mxu0 0
        %1712 = vmatprep.subr.bf16.mxu0 0
        %1713 = vmatpush1.bf16.msra.mxu0 0
        %1714 = vmatprep.subr.bf16.mxu0 0
        %1715 = vmatpush1.bf16.msra.mxu0 0
        %1716 = vmatprep.subr.bf16.mxu0 0
        %1717 = vmatpush1.bf16.msra.mxu0 0
        %1718 = vmatprep.subr.bf16.mxu0 0
        %1719 = vmatpush1.bf16.msra.mxu0 0
        %1720 = vmatprep.subr.bf16.mxu0 0
        %1721 = vmatpush1.bf16.msra.mxu0 0
        %1722 = vmatprep.mubr.bf16.mxu0 0
        %1723 = vmatmul.mubr.bf16.gmra.mrb[0].mxu0 %v1497
        %v1724 = vpop.f32.mrb[0].mxu0
        %v1725 = vadd.f32 0.0, %v1724
        %v1726 = vpop.f32.mrb[0].mxu0
        %v1727 = vadd.f32 0.0, %v1726
        %v1728 = vpop.f32.mrb[0].mxu0
        %v1729 = vpop.f32.mrb[0].mxu0
        %1730 = vdwg.mxu0
        %1731 = vmatprep.subr.bf16.mxu0 %v1629
        %1732 = vmatpush1.bf16.msra.mxu0 %v1628
        %1733 = vmatprep.subr.bf16.mxu0 %v1633
        %1734 = vmatpush1.bf16.msra.mxu0 %v1632
        %1735 = vmatprep.subr.bf16.mxu0 %v1637
        %1736 = vmatpush1.bf16.msra.mxu0 %v1636
        %1737 = vmatprep.subr.bf16.mxu0 %v1641
        %1738 = vmatpush1.bf16.msra.mxu0 %v1640
        %1739 = vmatprep.subr.bf16.mxu0 %v1645
        %1740 = vmatpush1.bf16.msra.mxu0 %v1644
        %1741 = vmatprep.subr.bf16.mxu0 %v1649
        %1742 = vmatpush1.bf16.msra.mxu0 %v1648
        %1743 = vmatprep.subr.bf16.mxu0 %v1653
        %1744 = vmatpush1.bf16.msra.mxu0 %v1652
        %1745 = vmatprep.subr.bf16.mxu0 %v1657
        %1746 = vmatpush1.bf16.msra.mxu0 %v1656
        %1747 = vmatprep.subr.bf16.mxu0 0
        %1748 = vmatpush1.bf16.msra.mxu0 0
        %1749 = vmatprep.subr.bf16.mxu0 0
        %1750 = vmatpush1.bf16.msra.mxu0 0
        %1751 = vmatprep.subr.bf16.mxu0 0
        %1752 = vmatpush1.bf16.msra.mxu0 0
        %1753 = vmatprep.subr.bf16.mxu0 0
        %1754 = vmatpush1.bf16.msra.mxu0 0
        %1755 = vmatprep.subr.bf16.mxu0 0
        %1756 = vmatpush1.bf16.msra.mxu0 0
        %1757 = vmatprep.subr.bf16.mxu0 0
        %1758 = vmatpush1.bf16.msra.mxu0 0
        %1759 = vmatprep.subr.bf16.mxu0 0
        %1760 = vmatpush1.bf16.msra.mxu0 0
        %1761 = vmatprep.subr.bf16.mxu0 0
        %1762 = vmatpush1.bf16.msra.mxu0 0
        %1763 = vmatprep.mubr.bf16.mxu0 0
        %1764 = vmatmul.mubr.bf16.gmra.mrb[0].mxu0 %v1497
        %v1765 = vpop.f32.mrb[0].mxu0
        %v1766 = vadd.f32 0.0, %v1765
        %v1767 = vpop.f32.mrb[0].mxu0
        %v1768 = vadd.f32 0.0, %v1767
        %v1769 = vpop.f32.mrb[0].mxu0
        %v1770 = vpop.f32.mrb[0].mxu0
        %1771 = vdwg.mxu0
        %v1772 = vxor.u32 %v1725, 2147483648
        %v1773 = vxor.u32 %v1727, 2147483648
        %v1774 = vmul.f32 %v1772, 1.442695
        %v1775 = vpow.pop %v1774
        %v1776 = vmul.f32 %v1773, 1.442695
        %v1777 = vpow.pop %v1776
        %v1778 = vadd.f32 %v1775, 1.0
        %v1779 = vadd.f32 %v1777, 1.0
        %v1780 = vrcp.pop %v1778
        %v1781 = vmul.f32 1.0, %v1780
        %v1782 = vrcp.pop %v1779
        %v1783 = vmul.f32 1.0, %v1782
        %v1784 = vmul.f32 %v1725, %v1781
        %v1785 = vmul.f32 %v1727, %v1783
        %v1786 = vmul.f32 %v1784, %v1766
        %v1787 = vmul.f32 %v1785, %v1768
        %v1788 = vpack.c.bf16 %v1786, %v1786
        %v1789 = vpack.c.bf16 %v1787, %v1787
        %v1790 = vld [vmem:[#allocation13] sm:$0xf]
        %v1791 = vld [vmem:[#allocation13 + $0x4] sm:$0xf]
        %v1792 = vld [vmem:[#allocation13 + $0x8] sm:$0xf]
        %v1793 = vld [vmem:[#allocation13 + $0xc] sm:$0xf]
        %v1794 = vld [vmem:[#allocation13 + $0x10] sm:$0xf]
        %v1795 = vld [vmem:[#allocation13 + $0x14] sm:$0xf]
        %v1796 = vld [vmem:[#allocation13 + $0x18] sm:$0xf]
        %v1797 = vld [vmem:[#allocation13 + $0x1c] sm:$0xf]
        %v1798 = vld [vmem:[#allocation13 + $0x20] sm:$0xf]
        %v1799 = vld [vmem:[#allocation13 + $0x24] sm:$0xf]
        %v1800 = vld [vmem:[#allocation13 + $0x28] sm:$0xf]
        %v1801 = vld [vmem:[#allocation13 + $0x2c] sm:$0xf]
        %v1802 = vld [vmem:[#allocation13 + $0x30] sm:$0xf]
        %v1803 = vld [vmem:[#allocation13 + $0x34] sm:$0xf]
        %v1804 = vld [vmem:[#allocation13 + $0x38] sm:$0xf]
        %v1805 = vld [vmem:[#allocation13 + $0x3c] sm:$0xf]
        %v1806 = vld [vmem:[#allocation13 + $0x40] sm:$0xf]
        %v1807 = vld [vmem:[#allocation13 + $0x44] sm:$0xf]
        %v1808 = vld [vmem:[#allocation13 + $0x48] sm:$0xf]
        %v1809 = vld [vmem:[#allocation13 + $0x4c] sm:$0xf]
        %v1810 = vld [vmem:[#allocation13 + $0x50] sm:$0xf]
        %v1811 = vld [vmem:[#allocation13 + $0x54] sm:$0xf]
        %v1812 = vld [vmem:[#allocation13 + $0x58] sm:$0xf]
        %v1813 = vld [vmem:[#allocation13 + $0x5c] sm:$0xf]
        %v1814 = vld [vmem:[#allocation13 + $0x60] sm:$0xf]
        %v1815 = vld [vmem:[#allocation13 + $0x64] sm:$0xf]
        %v1816 = vld [vmem:[#allocation13 + $0x68] sm:$0xf]
        %v1817 = vld [vmem:[#allocation13 + $0x6c] sm:$0xf]
        %v1818 = vld [vmem:[#allocation13 + $0x70] sm:$0xf]
        %v1819 = vld [vmem:[#allocation13 + $0x74] sm:$0xf]
        %v1820 = vld [vmem:[#allocation13 + $0x78] sm:$0xf]
        %v1821 = vld [vmem:[#allocation13 + $0x7c] sm:$0xf]
        %v1854 = vunpack.c.l.b16 %v1790
        %v1855 = vunpack.c.l.b16 %v1791
        %v1856 = vunpack.c.l.b16 %v1792
        %v1857 = vunpack.c.l.b16 %v1793
        %v1858 = vunpack.c.l.b16 %v1794
        %v1859 = vunpack.c.l.b16 %v1795
        %v1860 = vunpack.c.l.b16 %v1796
        %v1861 = vunpack.c.l.b16 %v1797
        %v1862 = vunpack.c.l.b16 %v1798
        %v1863 = vunpack.c.l.b16 %v1799
        %v1864 = vunpack.c.l.b16 %v1800
        %v1865 = vunpack.c.l.b16 %v1801
        %v1866 = vunpack.c.l.b16 %v1802
        %v1867 = vunpack.c.l.b16 %v1803
        %v1868 = vunpack.c.l.b16 %v1804
        %v1869 = vunpack.c.l.b16 %v1805
        %v1870 = vunpack.c.l.b16 %v1806
        %v1871 = vunpack.c.l.b16 %v1807
        %v1872 = vunpack.c.l.b16 %v1808
        %v1873 = vunpack.c.l.b16 %v1809
        %v1874 = vunpack.c.l.b16 %v1810
        %v1875 = vunpack.c.l.b16 %v1811
        %v1876 = vunpack.c.l.b16 %v1812
        %v1877 = vunpack.c.l.b16 %v1813
        %v1878 = vunpack.c.l.b16 %v1814
        %v1879 = vunpack.c.l.b16 %v1815
        %v1880 = vunpack.c.l.b16 %v1816
        %v1881 = vunpack.c.l.b16 %v1817
        %v1882 = vunpack.c.l.b16 %v1818
        %v1883 = vunpack.c.l.b16 %v1819
        %v1884 = vunpack.c.l.b16 %v1820
        %v1885 = vunpack.c.l.b16 %v1821
        %v1886 = vpack.c.b16 %v1855, %v1854
        %v1887 = vpack.c.b16 %v1857, %v1856
        %v1888 = vpack.c.b16 %v1859, %v1858
        %v1889 = vpack.c.b16 %v1861, %v1860
        %v1890 = vpack.c.b16 %v1863, %v1862
        %v1891 = vpack.c.b16 %v1865, %v1864
        %v1892 = vpack.c.b16 %v1867, %v1866
        %v1893 = vpack.c.b16 %v1869, %v1868
        %v1894 = vpack.c.b16 %v1871, %v1870
        %v1895 = vpack.c.b16 %v1873, %v1872
        %v1896 = vpack.c.b16 %v1875, %v1874
        %v1897 = vpack.c.b16 %v1877, %v1876
        %v1898 = vpack.c.b16 %v1879, %v1878
        %v1899 = vpack.c.b16 %v1881, %v1880
        %v1900 = vpack.c.b16 %v1883, %v1882
        %v1901 = vpack.c.b16 %v1885, %v1884
        %1918 = vmatprep.subr.bf16.mxu0 0
        %1919 = vmatpush1.bf16.msra.mxu0 %v1886
        %1920 = vmatprep.subr.bf16.mxu0 0
        %1921 = vmatpush1.bf16.msra.mxu0 %v1887
        %1922 = vmatprep.subr.bf16.mxu0 0
        %1923 = vmatpush1.bf16.msra.mxu0 %v1888
        %1924 = vmatprep.subr.bf16.mxu0 0
        %1925 = vmatpush1.bf16.msra.mxu0 %v1889
        %1926 = vmatprep.subr.bf16.mxu0 0
        %1927 = vmatpush1.bf16.msra.mxu0 %v1890
        %1928 = vmatprep.subr.bf16.mxu0 0
        %1929 = vmatpush1.bf16.msra.mxu0 %v1891
        %1930 = vmatprep.subr.bf16.mxu0 0
        %1931 = vmatpush1.bf16.msra.mxu0 %v1892
        %1932 = vmatprep.subr.bf16.mxu0 0
        %1933 = vmatpush1.bf16.msra.mxu0 %v1893
        %1934 = vmatprep.subr.bf16.mxu0 0
        %1935 = vmatpush1.bf16.msra.mxu0 %v1894
        %1936 = vmatprep.subr.bf16.mxu0 0
        %1937 = vmatpush1.bf16.msra.mxu0 %v1895
        %1938 = vmatprep.subr.bf16.mxu0 0
        %1939 = vmatpush1.bf16.msra.mxu0 %v1896
        %1940 = vmatprep.subr.bf16.mxu0 0
        %1941 = vmatpush1.bf16.msra.mxu0 %v1897
        %1942 = vmatprep.subr.bf16.mxu0 0
        %1943 = vmatpush1.bf16.msra.mxu0 %v1898
        %1944 = vmatprep.subr.bf16.mxu0 0
        %1945 = vmatpush1.bf16.msra.mxu0 %v1899
        %1946 = vmatprep.subr.bf16.mxu0 0
        %1947 = vmatpush1.bf16.msra.mxu0 %v1900
        %1948 = vmatprep.subr.bf16.mxu0 0
        %1949 = vmatpush1.bf16.msra.mxu0 %v1901
        %1950 = vmatprep.mubr.bf16.mxu0 %v1789
        %1951 = vmatmul.mubr.bf16.gmra.mrb[0].mxu0 %v1788
        %v1952 = vpop.f32.mrb[0].mxu0
        %v1953 = vadd.f32 0.0, %v1952
        %v1954 = vpop.f32.mrb[0].mxu0
        %v1955 = vpop.f32.mrb[0].mxu0
        %v1956 = vpop.f32.mrb[0].mxu0
        %1957 = vdwg.mxu0
        %v1958 = vadd.f32 %v1482, %v1953
        %1959 = vst [vmem:[%s495] sm:$0xff] %v1958
        %s1960 = sand.u32 %s255, 1
        %s1961 = scalar_lea.sflag [#allocation4], %s1960
        %s1962 = sand.u32 %s255, 1
        %s1963 = smul.addr %s1962, 8
        %s1964 = scalar_lea.vmem [#allocation19], %s1963
        // Predicated region
        $region101: #{recurrent_forward.9} parent=59 // pred_check
          %p1965 = pneg %p265
        $region102: #{recurrent_forward.9} parent=59 // pred_check_branch
          %1967 = sbr.rel (%p1965) target = $region104
        $region103: #{recurrent_forward.9} parent=59 // pred_region
          %s1969 = ssub.s32 128, 128
          %1970 = vsyncadd %s1961, %s1969
          %s1971 = smul.addr %s32, 128
          %s1972 = scalar_lea.hbm %s10, %s1971
          %s1974 = sshll.u32 %s1964, 4
          %s1975 = int_to_ptr.vmem [resolvable:$true] %s1974
          %1977 = dma.vmem_to_hbm [thread:$0]  %s1975, 128, %s1972, %s1961
        $region104: #{recurrent_forward.9} parent=59 // pred_fallthru
          _
      $region60: #{recurrent_forward.9} parent=5 // pred_fallthru
        _
      %p1978 = scmp.le.s32.totalorder 2, %s27
      // Predicated region
      $region105: #{recurrent_forward.9} parent=5 // pred_check
        %p1979 = pneg %p1978
      $region106: #{recurrent_forward.9} parent=5 // pred_check_branch
        %1981 = sbr.rel (%p1979) target = $region108
      $region107: #{recurrent_forward.9} parent=5 // pred_region
        %s1982 = ssub.s32 %s27, 2
        // Predicated region
        $region109: #{recurrent_forward.9} parent=107 // pred_check
          %p1983 = pneg %p271
        $region110: #{recurrent_forward.9} parent=107 // pred_check_branch
          %1985 = sbr.rel (%p1983) target = $region112
        $region111: #{recurrent_forward.9} parent=107 // pred_region
          %s1986 = sand.u32 %s256, 1
          %s1987 = scalar_lea.sflag [#allocation4], %s1986
          %s1988 = sand.u32 %s256, 1
          %s1989 = smul.addr %s1988, 8
          %s1990 = scalar_lea.vmem [#allocation19], %s1989
          %1991 = dma.done %s1987, 128
        $region112: #{recurrent_forward.9} parent=107 // pred_fallthru
          _
      $region108: #{recurrent_forward.9} parent=5 // pred_fallthru
        _
    $region6: #{recurrent_forward.9} parent=1 // loop_footer
      %s31 = sadd.s32 1, %s27
    $region7: #{recurrent_forward.9} parent=1 // loop_footer_branch
      %26 = sbr.rel target = $region3
    $region8: #{recurrent_forward.9} parent=1 // loop_exit
      _
    %1992 = vsyncpa [#allocation3], 1
    %s1993 = scalar_lea.sflag [#allocation3], 1
    %1994 = vsyncpa %s1993, 1
    %1995 = vsyncpa [#allocation6], 1
    %1996 = vsyncpa [#allocation9], 1
    %1997 = vsyncpa [#allocation12], 1
    %1998 = vsyncpa [#allocation15], 1
    %1999 = vsyncpa [#allocation18], 1
    %2000 = vsyncpa [#allocation4], 1
    %s2001 = scalar_lea.sflag [#allocation4], 1
    %2002 = vsyncpa %s2001, 1

// kernel: recurrent_forward.11
$region0: #{recurrent_forward.11}
  #allocation0 [shape = 'u32[]', space=smem, size = 0x4, offset = 0x4, fixed_abs, tag = 'smem constant byte address 0x4 - core index']
  #allocation1 [shape = 'u32[144,128]{1,0:T(1,128)}', space=vmem, size = 0x12000, scoped, tag = 'internal scratch']
  %s0 = inlined_call_operand.hbm [shape: f32[2,8,128], index: 0, kind: input, shape index: {}]
  %s1 = inlined_call_operand.hbm [shape: bf16[128,1024], index: 1, kind: input, shape index: {}]
  %s2 = inlined_call_operand.hbm [shape: f32[1,1024], index: 2, kind: input, shape index: {}]
  %s3 = inlined_call_operand.hbm [shape: bf16[1024,256], index: 3, kind: input, shape index: {}]
  %s4 = inlined_call_operand.hbm [shape: f32[1,256], index: 4, kind: input, shape index: {}]
  %s5 = inlined_call_operand.hbm [shape: bf16[256,128], index: 5, kind: input, shape index: {}]
  %s6 = inlined_call_operand.hbm [shape: f32[1,128], index: 6, kind: input, shape index: {}]
  %s7 = inlined_call_operand.hbm [shape: f32[2,128], index: 7, kind: output, shape index: {}]
  %s8 = sld [smem:[#allocation0]]
  $region66: #{recurrent_forward.11} parent=0
    _
  %s10 = ssub.s32 1, %s8
  %s11 = scalar_select 0, %s10, %s8
  $region1: #{recurrent_forward.11} parent=0
    #allocation2 [shape = 'u8[8192]{0}', space=vmem, size = 0x2000, scoped, tag = 'input window, operand 0, single buffered']
    #allocation3 [shape = 's32[1]{0}', space=sflag, size = 0x4, scoped, tag = 'scoped memory for recurrent_forward.11']
    #allocation4 [shape = 's32[1]{0}', space=sflag, size = 0x4, scoped, tag = 'scoped memory for recurrent_forward.11']
    #allocation5 [shape = 'u8[262144]{0}', space=vmem, size = 0x40000, scoped, tag = 'input window, operand 1, single buffered']
    #allocation6 [shape = 's32[1]{0}', space=sflag, size = 0x4, scoped, tag = 'scoped memory for recurrent_forward.11']
    #allocation7 [shape = 'u8[4096]{0}', space=vmem, size = 0x1000, scoped, tag = 'input window, operand 2, single buffered']
    #allocation8 [shape = 'u8[524288]{0}', space=vmem, size = 0x80000, scoped, tag = 'input window, operand 3, single buffered']
    #allocation9 [shape = 's32[1]{0}', space=sflag, size = 0x4, scoped, tag = 'scoped memory for recurrent_forward.11']
    #allocation10 [shape = 'u8[1024]{0}', space=vmem, size = 0x400, scoped, tag = 'input window, operand 4, single buffered']
    #allocation11 [shape = 'u8[65536]{0}', space=vmem, size = 0x10000, scoped, tag = 'input window, operand 5, single buffered']
    #allocation12 [shape = 's32[1]{0}', space=sflag, size = 0x4, scoped, tag = 'scoped memory for recurrent_forward.11']
    #allocation13 [shape = 'u8[512]{0}', space=vmem, size = 0x400, scoped, tag = 'input window, operand 6, single buffered']
    #allocation14 [shape = 'u8[1024]{0}', space=vmem, size = 0x400, scoped, tag = 'output window, operand 0, single buffered']
    %12 = vsyncpa [#allocation3], 0
    %13 = vsyncpa [#allocation6], 0
    %14 = vsyncpa [#allocation9], 0
    %15 = vsyncpa [#allocation12], 0
    %16 = vsyncpa [#allocation4], 0
    // Predicated region
    $region2: #{recurrent_forward.11} parent=1 // pred_check
      _
    $region3: #{recurrent_forward.11} parent=1 // pred_check_branch
      %18 = sbr.rel (0) target = $region5
    $region4: #{recurrent_forward.11} parent=1 // pred_region
      %s20 = ssub.s32 256, 256
      %21 = vsyncadd [#allocation3], %s20
      %s22 = sshll.u32 [#allocation2], 4
      %s23 = int_to_ptr.vmem [resolvable:$true] %s22
      %28 = dma.hbm_to_vmem [thread:$0]  %s0, 256, %s23, [#allocation3], 128, 128, 8
    $region5: #{recurrent_forward.11} parent=1 // pred_fallthru
      _
    // Predicated region
    $region6: #{recurrent_forward.11} parent=1 // pred_check
      _
    $region7: #{recurrent_forward.11} parent=1 // pred_check_branch
      %30 = sbr.rel (0) target = $region9
    $region8: #{recurrent_forward.11} parent=1 // pred_region
      %s32 = ssub.s32 8192, 8192
      %33 = vsyncadd [#allocation6], %s32
      %s34 = sshll.u32 [#allocation5], 4
      %s35 = int_to_ptr.vmem [resolvable:$true] %s34
      %40 = dma.hbm_to_vmem [thread:$0]  %s1, 8192, %s35, [#allocation6], 512, 512, 32
    $region9: #{recurrent_forward.11} parent=1 // pred_fallthru
      _
    // Predicated region
    $region10: #{recurrent_forward.11} parent=1 // pred_check
      _
    $region11: #{recurrent_forward.11} parent=1 // pred_check_branch
      %42 = sbr.rel (0) target = $region13
    $region12: #{recurrent_forward.11} parent=1 // pred_region
      %s44 = ssub.s32 128, 128
      %45 = vsyncadd [#allocation6], %s44
      %s47 = sshll.u32 [#allocation7], 4
      %s48 = int_to_ptr.vmem [resolvable:$true] %s47
      %50 = dma.hbm_to_vmem [thread:$0]  %s2, 128, %s48, [#allocation6]
    $region13: #{recurrent_forward.11} parent=1 // pred_fallthru
      _
    // Predicated region
    $region14: #{recurrent_forward.11} parent=1 // pred_check
      _
    $region15: #{recurrent_forward.11} parent=1 // pred_check_branch
      %52 = sbr.rel (0) target = $region17
    $region16: #{recurrent_forward.11} parent=1 // pred_region
      %s54 = ssub.s32 16384, 16384
      %55 = vsyncadd [#allocation9], %s54
      %s56 = sshll.u32 [#allocation8], 4
      %s57 = int_to_ptr.vmem [resolvable:$true] %s56
      %62 = dma.hbm_to_vmem [thread:$0]  %s3, 16384, %s57, [#allocation9], 128, 128, 8
    $region17: #{recurrent_forward.11} parent=1 // pred_fallthru
      _
    // Predicated region
    $region18: #{recurrent_forward.11} parent=1 // pred_check
      _
    $region19: #{recurrent_forward.11} parent=1 // pred_check_branch
      %64 = sbr.rel (0) target = $region21
    $region20: #{recurrent_forward.11} parent=1 // pred_region
      %s66 = ssub.s32 32, 32
      %67 = vsyncadd [#allocation9], %s66
      %s69 = sshll.u32 [#allocation10], 4
      %s70 = int_to_ptr.vmem [resolvable:$true] %s69
      %72 = dma.hbm_to_vmem [thread:$0]  %s4, 32, %s70, [#allocation9]
    $region21: #{recurrent_forward.11} parent=1 // pred_fallthru
      _
    // Predicated region
    $region22: #{recurrent_forward.11} parent=1 // pred_check
      _
    $region23: #{recurrent_forward.11} parent=1 // pred_check_branch
      %74 = sbr.rel (0) target = $region25
    $region24: #{recurrent_forward.11} parent=1 // pred_region
      %s76 = ssub.s32 2048, 2048
      %77 = vsyncadd [#allocation12], %s76
      %s78 = sshll.u32 [#allocation11], 4
      %s79 = int_to_ptr.vmem [resolvable:$true] %s78
      %84 = dma.hbm_to_vmem [thread:$0]  %s5, 2048, %s79, [#allocation12], 64, 64, 4
    $region25: #{recurrent_forward.11} parent=1 // pred_fallthru
      _
    // Predicated region
    $region26: #{recurrent_forward.11} parent=1 // pred_check
      _
    $region27: #{recurrent_forward.11} parent=1 // pred_check_branch
      %86 = sbr.rel (0) target = $region29
    $region28: #{recurrent_forward.11} parent=1 // pred_region
      %s88 = ssub.s32 16, 16
      %89 = vsyncadd [#allocation12], %s88
      %s91 = sshll.u32 [#allocation13], 4
      %s92 = int_to_ptr.vmem [resolvable:$true] %s91
      %94 = dma.hbm_to_vmem [thread:$0]  %s6, 16, %s92, [#allocation12]
    $region29: #{recurrent_forward.11} parent=1 // pred_fallthru
      _
    // Predicated region
    $region30: #{recurrent_forward.11} parent=1 // pred_check
      _
    $region31: #{recurrent_forward.11} parent=1 // pred_check_branch
      %96 = sbr.rel (0) target = $region33
    $region32: #{recurrent_forward.11} parent=1 // pred_region
      %97 = dma.done [#allocation3], 256
    $region33: #{recurrent_forward.11} parent=1 // pred_fallthru
      _
    // Predicated region
    $region34: #{recurrent_forward.11} parent=1 // pred_check
      _
    $region35: #{recurrent_forward.11} parent=1 // pred_check_branch
      %99 = sbr.rel (0) target = $region37
    $region36: #{recurrent_forward.11} parent=1 // pred_region
      %100 = dma.done [#allocation6], 8192
    $region37: #{recurrent_forward.11} parent=1 // pred_fallthru
      _
    // Predicated region
    $region38: #{recurrent_forward.11} parent=1 // pred_check
      _
    $region39: #{recurrent_forward.11} parent=1 // pred_check_branch
      %102 = sbr.rel (0) target = $region41
    $region40: #{recurrent_forward.11} parent=1 // pred_region
      %103 = dma.done [#allocation6], 128
    $region41: #{recurrent_forward.11} parent=1 // pred_fallthru
      _
    // Predicated region
    $region42: #{recurrent_forward.11} parent=1 // pred_check
      _
    $region43: #{recurrent_forward.11} parent=1 // pred_check_branch
      %105 = sbr.rel (0) target = $region45
    $region44: #{recurrent_forward.11} parent=1 // pred_region
      %106 = dma.done [#allocation9], 16384
    $region45: #{recurrent_forward.11} parent=1 // pred_fallthru
      _
    // Predicated region
    $region46: #{recurrent_forward.11} parent=1 // pred_check
      _
    $region47: #{recurrent_forward.11} parent=1 // pred_check_branch
      %108 = sbr.rel (0) target = $region49
    $region48: #{recurrent_forward.11} parent=1 // pred_region
      %109 = dma.done [#allocation9], 32
    $region49: #{recurrent_forward.11} parent=1 // pred_fallthru
      _
    // Predicated region
    $region50: #{recurrent_forward.11} parent=1 // pred_check
      _
    $region51: #{recurrent_forward.11} parent=1 // pred_check_branch
      %111 = sbr.rel (0) target = $region53
    $region52: #{recurrent_forward.11} parent=1 // pred_region
      %112 = dma.done [#allocation12], 2048
    $region53: #{recurrent_forward.11} parent=1 // pred_fallthru
      _
    // Predicated region
    $region54: #{recurrent_forward.11} parent=1 // pred_check
      _
    $region55: #{recurrent_forward.11} parent=1 // pred_check_branch
      %114 = sbr.rel (0) target = $region57
    $region56: #{recurrent_forward.11} parent=1 // pred_region
      %115 = dma.done [#allocation12], 16
    $region57: #{recurrent_forward.11} parent=1 // pred_fallthru
      _
    %v117 = vld [vmem:[#allocation2] sm:$0xff]
    %v118 = vld [vmem:[#allocation2 + $0x8] sm:$0xff]
    %v119 = vrot.slane %v117, 4
    %v120 = vadd.f32 %v117, %v119
    %v121 = vrot.slane %v120, 2
    %v122 = vadd.f32 %v120, %v121
    %v123 = vrot.slane %v122, 1
    %v124 = vadd.f32 %v122, %v123
    %v125 = vrot.slane %v118, 4
    %v126 = vadd.f32 %v118, %v125
    %v127 = vrot.slane %v126, 2
    %v128 = vadd.f32 %v126, %v127
    %v129 = vrot.slane %v128, 1
    %v130 = vadd.f32 %v128, %v129
    %v131 = vrcp.pop 8.0
    %v132 = vmul.f32 %v124, %v131
    %v133 = vmul.f32 %v130, %v131
    %v134 = vpack.c.bf16 %v132, %v132
    %v135 = vpack.c.bf16 %v133, %v133
    %v136 = vld [vmem:[#allocation5] sm:$0xff]
    %v137 = vld [vmem:[#allocation5 + $0x8] sm:$0xff]
    %v138 = vld [vmem:[#allocation5 + $0x10] sm:$0xff]
    %v139 = vld [vmem:[#allocation5 + $0x18] sm:$0xff]
    %v140 = vld [vmem:[#allocation5 + $0x20] sm:$0xff]
    %v141 = vld [vmem:[#allocation5 + $0x28] sm:$0xff]
    %v142 = vld [vmem:[#allocation5 + $0x30] sm:$0xff]
    %v143 = vld [vmem:[#allocation5 + $0x38] sm:$0xff]
    %v144 = vld [vmem:[#allocation5 + $0x40] sm:$0xff]
    %v145 = vld [vmem:[#allocation5 + $0x48] sm:$0xff]
    %v146 = vld [vmem:[#allocation5 + $0x50] sm:$0xff]
    %v147 = vld [vmem:[#allocation5 + $0x58] sm:$0xff]
    %v148 = vld [vmem:[#allocation5 + $0x60] sm:$0xff]
    %v149 = vld [vmem:[#allocation5 + $0x68] sm:$0xff]
    %v150 = vld [vmem:[#allocation5 + $0x70] sm:$0xff]
    %v151 = vld [vmem:[#allocation5 + $0x78] sm:$0xff]
    %v152 = vld [vmem:[#allocation5 + $0x80] sm:$0xff]
    %v153 = vld [vmem:[#allocation5 + $0x88] sm:$0xff]
    %v154 = vld [vmem:[#allocation5 + $0x90] sm:$0xff]
    %v155 = vld [vmem:[#allocation5 + $0x98] sm:$0xff]
    %v156 = vld [vmem:[#allocation5 + $0xa0] sm:$0xff]
    %v157 = vld [vmem:[#allocation5 + $0xa8] sm:$0xff]
    %v158 = vld [vmem:[#allocation5 + $0xb0] sm:$0xff]
    %v159 = vld [vmem:[#allocation5 + $0xb8] sm:$0xff]
    %v160 = vld [vmem:[#allocation5 + $0xc0] sm:$0xff]
    %v161 = vld [vmem:[#allocation5 + $0xc8] sm:$0xff]
    %v162 = vld [vmem:[#allocation5 + $0xd0] sm:$0xff]
    %v163 = vld [vmem:[#allocation5 + $0xd8] sm:$0xff]
    %v164 = vld [vmem:[#allocation5 + $0xe0] sm:$0xff]
    %v165 = vld [vmem:[#allocation5 + $0xe8] sm:$0xff]
    %v166 = vld [vmem:[#allocation5 + $0xf0] sm:$0xff]
    %v167 = vld [vmem:[#allocation5 + $0xf8] sm:$0xff]
    %v168 = vld [vmem:[#allocation5 + $0x100] sm:$0xff]
    %v169 = vld [vmem:[#allocation5 + $0x108] sm:$0xff]
    %v170 = vld [vmem:[#allocation5 + $0x110] sm:$0xff]
    %v171 = vld [vmem:[#allocation5 + $0x118] sm:$0xff]
    %v172 = vld [vmem:[#allocation5 + $0x120] sm:$0xff]
    %v173 = vld [vmem:[#allocation5 + $0x128] sm:$0xff]
    %v174 = vld [vmem:[#allocation5 + $0x130] sm:$0xff]
    %v175 = vld [vmem:[#allocation5 + $0x138] sm:$0xff]
    %v176 = vld [vmem:[#allocation5 + $0x140] sm:$0xff]
    %v177 = vld [vmem:[#allocation5 + $0x148] sm:$0xff]
    %v178 = vld [vmem:[#allocation5 + $0x150] sm:$0xff]
    %v179 = vld [vmem:[#allocation5 + $0x158] sm:$0xff]
    %v180 = vld [vmem:[#allocation5 + $0x160] sm:$0xff]
    %v181 = vld [vmem:[#allocation5 + $0x168] sm:$0xff]
    %v182 = vld [vmem:[#allocation5 + $0x170] sm:$0xff]
    %v183 = vld [vmem:[#allocation5 + $0x178] sm:$0xff]
    %v184 = vld [vmem:[#allocation5 + $0x180] sm:$0xff]
    %v185 = vld [vmem:[#allocation5 + $0x188] sm:$0xff]
    %v186 = vld [vmem:[#allocation5 + $0x190] sm:$0xff]
    %v187 = vld [vmem:[#allocation5 + $0x198] sm:$0xff]
    %v188 = vld [vmem:[#allocation5 + $0x1a0] sm:$0xff]
    %v189 = vld [vmem:[#allocation5 + $0x1a8] sm:$0xff]
    %v190 = vld [vmem:[#allocation5 + $0x1b0] sm:$0xff]
    %v191 = vld [vmem:[#allocation5 + $0x1b8] sm:$0xff]
    %v192 = vld [vmem:[#allocation5 + $0x1c0] sm:$0xff]
    %v193 = vld [vmem:[#allocation5 + $0x1c8] sm:$0xff]
    %v194 = vld [vmem:[#allocation5 + $0x1d0] sm:$0xff]
    %v195 = vld [vmem:[#allocation5 + $0x1d8] sm:$0xff]
    %v196 = vld [vmem:[#allocation5 + $0x1e0] sm:$0xff]
    %v197 = vld [vmem:[#allocation5 + $0x1e8] sm:$0xff]
    %v198 = vld [vmem:[#allocation5 + $0x1f0] sm:$0xff]
    %v199 = vld [vmem:[#allocation5 + $0x1f8] sm:$0xff]
    %v200 = vld [vmem:[#allocation7] sm:$0xff]
    %v202 = vlaneseq
    %v203 = vshrl.u32 %v202, 7
    %v204 = vsub.s32 0, %v203
    %v205 = vrot.slane %v200, %v204
    %v206 = vlaneseq
    %v207 = vshrl.u32 %v206, 7
    %v208 = vsub.s32 1, %v207
    %v209 = vrot.slane %v200, %v208
    %v210 = vlaneseq
    %v211 = vshrl.u32 %v210, 7
    %v212 = vsub.s32 2, %v211
    %v213 = vrot.slane %v200, %v212
    %v214 = vlaneseq
    %v215 = vshrl.u32 %v214, 7
    %v216 = vsub.s32 3, %v215
    %v217 = vrot.slane %v200, %v216
    %v218 = vlaneseq
    %v219 = vshrl.u32 %v218, 7
    %v220 = vsub.s32 4, %v219
    %v221 = vrot.slane %v200, %v220
    %v222 = vlaneseq
    %v223 = vshrl.u32 %v222, 7
    %v224 = vsub.s32 5, %v223
    %v225 = vrot.slane %v200, %v224
    %v226 = vlaneseq
    %v227 = vshrl.u32 %v226, 7
    %v228 = vsub.s32 6, %v227
    %v229 = vrot.slane %v200, %v228
    %v230 = vlaneseq
    %v231 = vshrl.u32 %v230, 7
    %v232 = vsub.s32 7, %v231
    %v233 = vrot.slane %v200, %v232
    %v244 = vunpack.c.l.b16 %v134
    %v245 = vunpack.c.l.b16 %v135
    %vm246 = vcmask 1041409
    %v247 = vsel %vm246, %v245, %v244
    %v248 = vpack.c.b16 %v247, %v247
    %v314 = vunpack.c.l.b16 %v136
    %v315 = vunpack.c.h.b16 %v136
    %v316 = vunpack.c.l.b16 %v137
    %v317 = vunpack.c.h.b16 %v137
    %v318 = vunpack.c.l.b16 %v138
    %v319 = vunpack.c.h.b16 %v138
    %v320 = vunpack.c.l.b16 %v139
    %v321 = vunpack.c.h.b16 %v139
    %v322 = vunpack.c.l.b16 %v140
    %v323 = vunpack.c.h.b16 %v140
    %v324 = vunpack.c.l.b16 %v141
    %v325 = vunpack.c.h.b16 %v141
    %v326 = vunpack.c.l.b16 %v142
    %v327 = vunpack.c.h.b16 %v142
    %v328 = vunpack.c.l.b16 %v143
    %v329 = vunpack.c.h.b16 %v143
    %v330 = vunpack.c.l.b16 %v144
    %v331 = vunpack.c.h.b16 %v144
    %v332 = vunpack.c.l.b16 %v145
    %v333 = vunpack.c.h.b16 %v145
    %v334 = vunpack.c.l.b16 %v146
    %v335 = vunpack.c.h.b16 %v146
    %v336 = vunpack.c.l.b16 %v147
    %v337 = vunpack.c.h.b16 %v147
    %v338 = vunpack.c.l.b16 %v148
    %v339 = vunpack.c.h.b16 %v148
    %v340 = vunpack.c.l.b16 %v149
    %v341 = vunpack.c.h.b16 %v149
    %v342 = vunpack.c.l.b16 %v150
    %v343 = vunpack.c.h.b16 %v150
    %v344 = vunpack.c.l.b16 %v151
    %v345 = vunpack.c.h.b16 %v151
    %v346 = vunpack.c.l.b16 %v152
    %v347 = vunpack.c.h.b16 %v152
    %v348 = vunpack.c.l.b16 %v153
    %v349 = vunpack.c.h.b16 %v153
    %v350 = vunpack.c.l.b16 %v154
    %v351 = vunpack.c.h.b16 %v154
    %v352 = vunpack.c.l.b16 %v155
    %v353 = vunpack.c.h.b16 %v155
    %v354 = vunpack.c.l.b16 %v156
    %v355 = vunpack.c.h.b16 %v156
    %v356 = vunpack.c.l.b16 %v157
    %v357 = vunpack.c.h.b16 %v157
    %v358 = vunpack.c.l.b16 %v158
    %v359 = vunpack.c.h.b16 %v158
    %v360 = vunpack.c.l.b16 %v159
    %v361 = vunpack.c.h.b16 %v159
    %v362 = vunpack.c.l.b16 %v160
    %v363 = vunpack.c.h.b16 %v160
    %v364 = vunpack.c.l.b16 %v161
    %v365 = vunpack.c.h.b16 %v161
    %v366 = vunpack.c.l.b16 %v162
    %v367 = vunpack.c.h.b16 %v162
    %v368 = vunpack.c.l.b16 %v163
    %v369 = vunpack.c.h.b16 %v163
    %v370 = vunpack.c.l.b16 %v164
    %v371 = vunpack.c.h.b16 %v164
    %v372 = vunpack.c.l.b16 %v165
    %v373 = vunpack.c.h.b16 %v165
    %v374 = vunpack.c.l.b16 %v166
    %v375 = vunpack.c.h.b16 %v166
    %v376 = vunpack.c.l.b16 %v167
    %v377 = vunpack.c.h.b16 %v167
    %v378 = vunpack.c.l.b16 %v168
    %v379 = vunpack.c.h.b16 %v168
    %v380 = vunpack.c.l.b16 %v169
    %v381 = vunpack.c.h.b16 %v169
    %v382 = vunpack.c.l.b16 %v170
    %v383 = vunpack.c.h.b16 %v170
    %v384 = vunpack.c.l.b16 %v171
    %v385 = vunpack.c.h.b16 %v171
    %v386 = vunpack.c.l.b16 %v172
    %v387 = vunpack.c.h.b16 %v172
    %v388 = vunpack.c.l.b16 %v173
    %v389 = vunpack.c.h.b16 %v173
    %v390 = vunpack.c.l.b16 %v174
    %v391 = vunpack.c.h.b16 %v174
    %v392 = vunpack.c.l.b16 %v175
    %v393 = vunpack.c.h.b16 %v175
    %v394 = vunpack.c.l.b16 %v176
    %v395 = vunpack.c.h.b16 %v176
    %v396 = vunpack.c.l.b16 %v177
    %v397 = vunpack.c.h.b16 %v177
    %v398 = vunpack.c.l.b16 %v178
    %v399 = vunpack.c.h.b16 %v178
    %v400 = vunpack.c.l.b16 %v179
    %v401 = vunpack.c.h.b16 %v179
    %v402 = vunpack.c.l.b16 %v180
    %v403 = vunpack.c.h.b16 %v180
    %v404 = vunpack.c.l.b16 %v181
    %v405 = vunpack.c.h.b16 %v181
    %v406 = vunpack.c.l.b16 %v182
    %v407 = vunpack.c.h.b16 %v182
    %v408 = vunpack.c.l.b16 %v183
    %v409 = vunpack.c.h.b16 %v183
    %v410 = vunpack.c.l.b16 %v184
    %v411 = vunpack.c.h.b16 %v184
    %v412 = vunpack.c.l.b16 %v185
    %v413 = vunpack.c.h.b16 %v185
    %v414 = vunpack.c.l.b16 %v186
    %v415 = vunpack.c.h.b16 %v186
    %v416 = vunpack.c.l.b16 %v187
    %v417 = vunpack.c.h.b16 %v187
    %v418 = vunpack.c.l.b16 %v188
    %v419 = vunpack.c.h.b16 %v188
    %v420 = vunpack.c.l.b16 %v189
    %v421 = vunpack.c.h.b16 %v189
    %v422 = vunpack.c.l.b16 %v190
    %v423 = vunpack.c.h.b16 %v190
    %v424 = vunpack.c.l.b16 %v191
    %v425 = vunpack.c.h.b16 %v191
    %v426 = vunpack.c.l.b16 %v192
    %v427 = vunpack.c.h.b16 %v192
    %v428 = vunpack.c.l.b16 %v193
    %v429 = vunpack.c.h.b16 %v193
    %v430 = vunpack.c.l.b16 %v194
    %v431 = vunpack.c.h.b16 %v194
    %v432 = vunpack.c.l.b16 %v195
    %v433 = vunpack.c.h.b16 %v195
    %v434 = vunpack.c.l.b16 %v196
    %v435 = vunpack.c.h.b16 %v196
    %v436 = vunpack.c.l.b16 %v197
    %v437 = vunpack.c.h.b16 %v197
    %v438 = vunpack.c.l.b16 %v198
    %v439 = vunpack.c.h.b16 %v198
    %v440 = vunpack.c.l.b16 %v199
    %v441 = vunpack.c.h.b16 %v199
    %v442 = vpack.c.b16 %v322, %v314
    %v443 = vpack.c.b16 %v323, %v315
    %v444 = vpack.c.b16 %v324, %v316
    %v445 = vpack.c.b16 %v325, %v317
    %v446 = vpack.c.b16 %v326, %v318
    %v447 = vpack.c.b16 %v327, %v319
    %v448 = vpack.c.b16 %v328, %v320
    %v449 = vpack.c.b16 %v329, %v321
    %v450 = vpack.c.b16 %v338, %v330
    %v451 = vpack.c.b16 %v339, %v331
    %v452 = vpack.c.b16 %v340, %v332
    %v453 = vpack.c.b16 %v341, %v333
    %v454 = vpack.c.b16 %v342, %v334
    %v455 = vpack.c.b16 %v343, %v335
    %v456 = vpack.c.b16 %v344, %v336
    %v457 = vpack.c.b16 %v345, %v337
    %v458 = vpack.c.b16 %v354, %v346
    %v459 = vpack.c.b16 %v355, %v347
    %v460 = vpack.c.b16 %v356, %v348
    %v461 = vpack.c.b16 %v357, %v349
    %v462 = vpack.c.b16 %v358, %v350
    %v463 = vpack.c.b16 %v359, %v351
    %v464 = vpack.c.b16 %v360, %v352
    %v465 = vpack.c.b16 %v361, %v353
    %v466 = vpack.c.b16 %v370, %v362
    %v467 = vpack.c.b16 %v371, %v363
    %v468 = vpack.c.b16 %v372, %v364
    %v469 = vpack.c.b16 %v373, %v365
    %v470 = vpack.c.b16 %v374, %v366
    %v471 = vpack.c.b16 %v375, %v367
    %v472 = vpack.c.b16 %v376, %v368
    %v473 = vpack.c.b16 %v377, %v369
    %v474 = vpack.c.b16 %v386, %v378
    %v475 = vpack.c.b16 %v387, %v379
    %v476 = vpack.c.b16 %v388, %v380
    %v477 = vpack.c.b16 %v389, %v381
    %v478 = vpack.c.b16 %v390, %v382
    %v479 = vpack.c.b16 %v391, %v383
    %v480 = vpack.c.b16 %v392, %v384
    %v481 = vpack.c.b16 %v393, %v385
    %v482 = vpack.c.b16 %v402, %v394
    %v483 = vpack.c.b16 %v403, %v395
    %v484 = vpack.c.b16 %v404, %v396
    %v485 = vpack.c.b16 %v405, %v397
    %v486 = vpack.c.b16 %v406, %v398
    %v487 = vpack.c.b16 %v407, %v399
    %v488 = vpack.c.b16 %v408, %v400
    %v489 = vpack.c.b16 %v409, %v401
    %v490 = vpack.c.b16 %v418, %v410
    %v491 = vpack.c.b16 %v419, %v411
    %v492 = vpack.c.b16 %v420, %v412
    %v493 = vpack.c.b16 %v421, %v413
    %v494 = vpack.c.b16 %v422, %v414
    %v495 = vpack.c.b16 %v423, %v415
    %v496 = vpack.c.b16 %v424, %v416
    %v497 = vpack.c.b16 %v425, %v417
    %v498 = vpack.c.b16 %v434, %v426
    %v499 = vpack.c.b16 %v435, %v427
    %v500 = vpack.c.b16 %v436, %v428
    %v501 = vpack.c.b16 %v437, %v429
    %v502 = vpack.c.b16 %v438, %v430
    %v503 = vpack.c.b16 %v439, %v431
    %v504 = vpack.c.b16 %v440, %v432
    %v505 = vpack.c.b16 %v441, %v433
    %570 = vmatprep.subr.bf16.mxu0 %v443
    %571 = vmatpush1.bf16.msra.mxu0 %v442
    %572 = vmatprep.subr.bf16.mxu0 %v451
    %573 = vmatpush1.bf16.msra.mxu0 %v450
    %574 = vmatprep.subr.bf16.mxu0 %v459
    %575 = vmatpush1.bf16.msra.mxu0 %v458
    %576 = vmatprep.subr.bf16.mxu0 %v467
    %577 = vmatpush1.bf16.msra.mxu0 %v466
    %578 = vmatprep.subr.bf16.mxu0 %v475
    %579 = vmatpush1.bf16.msra.mxu0 %v474
    %580 = vmatprep.subr.bf16.mxu0 %v483
    %581 = vmatpush1.bf16.msra.mxu0 %v482
    %582 = vmatprep.subr.bf16.mxu0 %v491
    %583 = vmatpush1.bf16.msra.mxu0 %v490
    %584 = vmatprep.subr.bf16.mxu0 %v499
    %585 = vmatpush1.bf16.msra.mxu0 %v498
    %586 = vmatprep.subr.bf16.mxu0 0
    %587 = vmatpush1.bf16.msra.mxu0 0
    %588 = vmatprep.subr.bf16.mxu0 0
    %589 = vmatpush1.bf16.msra.mxu0 0
    %590 = vmatprep.subr.bf16.mxu0 0
    %591 = vmatpush1.bf16.msra.mxu0 0
    %592 = vmatprep.subr.bf16.mxu0 0
    %593 = vmatpush1.bf16.msra.mxu0 0
    %594 = vmatprep.subr.bf16.mxu0 0
    %595 = vmatpush1.bf16.msra.mxu0 0
    %596 = vmatprep.subr.bf16.mxu0 0
    %597 = vmatpush1.bf16.msra.mxu0 0
    %598 = vmatprep.subr.bf16.mxu0 0
    %599 = vmatpush1.bf16.msra.mxu0 0
    %600 = vmatprep.subr.bf16.mxu0 0
    %601 = vmatpush1.bf16.msra.mxu0 0
    %602 = vmatprep.mubr.bf16.mxu0 0
    %603 = vmatmul.mubr.bf16.gmra.mrb[0].mxu0 %v248
    %v604 = vpop.f32.mrb[0].mxu0
    %v605 = vadd.f32 %v205, %v604
    %v606 = vpop.f32.mrb[0].mxu0
    %v607 = vadd.f32 %v209, %v606
    %v608 = vpop.f32.mrb[0].mxu0
    %v609 = vpop.f32.mrb[0].mxu0
    %610 = vdwg.mxu0
    %611 = vmatprep.subr.bf16.mxu0 %v445
    %612 = vmatpush1.bf16.msra.mxu0 %v444
    %613 = vmatprep.subr.bf16.mxu0 %v453
    %614 = vmatpush1.bf16.msra.mxu0 %v452
    %615 = vmatprep.subr.bf16.mxu0 %v461
    %616 = vmatpush1.bf16.msra.mxu0 %v460
    %617 = vmatprep.subr.bf16.mxu0 %v469
    %618 = vmatpush1.bf16.msra.mxu0 %v468
    %619 = vmatprep.subr.bf16.mxu0 %v477
    %620 = vmatpush1.bf16.msra.mxu0 %v476
    %621 = vmatprep.subr.bf16.mxu0 %v485
    %622 = vmatpush1.bf16.msra.mxu0 %v484
    %623 = vmatprep.subr.bf16.mxu0 %v493
    %624 = vmatpush1.bf16.msra.mxu0 %v492
    %625 = vmatprep.subr.bf16.mxu0 %v501
    %626 = vmatpush1.bf16.msra.mxu0 %v500
    %627 = vmatprep.subr.bf16.mxu0 0
    %628 = vmatpush1.bf16.msra.mxu0 0
    %629 = vmatprep.subr.bf16.mxu0 0
    %630 = vmatpush1.bf16.msra.mxu0 0
    %631 = vmatprep.subr.bf16.mxu0 0
    %632 = vmatpush1.bf16.msra.mxu0 0
    %633 = vmatprep.subr.bf16.mxu0 0
    %634 = vmatpush1.bf16.msra.mxu0 0
    %635 = vmatprep.subr.bf16.mxu0 0
    %636 = vmatpush1.bf16.msra.mxu0 0
    %637 = vmatprep.subr.bf16.mxu0 0
    %638 = vmatpush1.bf16.msra.mxu0 0
    %639 = vmatprep.subr.bf16.mxu0 0
    %640 = vmatpush1.bf16.msra.mxu0 0
    %641 = vmatprep.subr.bf16.mxu0 0
    %642 = vmatpush1.bf16.msra.mxu0 0
    %643 = vmatprep.mubr.bf16.mxu0 0
    %644 = vmatmul.mubr.bf16.gmra.mrb[0].mxu0 %v248
    %v645 = vpop.f32.mrb[0].mxu0
    %v646 = vadd.f32 %v213, %v645
    %v647 = vpop.f32.mrb[0].mxu0
    %v648 = vadd.f32 %v217, %v647
    %v649 = vpop.f32.mrb[0].mxu0
    %v650 = vpop.f32.mrb[0].mxu0
    %651 = vdwg.mxu0
    %652 = vmatprep.subr.bf16.mxu0 %v447
    %653 = vmatpush1.bf16.msra.mxu0 %v446
    %654 = vmatprep.subr.bf16.mxu0 %v455
    %655 = vmatpush1.bf16.msra.mxu0 %v454
    %656 = vmatprep.subr.bf16.mxu0 %v463
    %657 = vmatpush1.bf16.msra.mxu0 %v462
    %658 = vmatprep.subr.bf16.mxu0 %v471
    %659 = vmatpush1.bf16.msra.mxu0 %v470
    %660 = vmatprep.subr.bf16.mxu0 %v479
    %661 = vmatpush1.bf16.msra.mxu0 %v478
    %662 = vmatprep.subr.bf16.mxu0 %v487
    %663 = vmatpush1.bf16.msra.mxu0 %v486
    %664 = vmatprep.subr.bf16.mxu0 %v495
    %665 = vmatpush1.bf16.msra.mxu0 %v494
    %666 = vmatprep.subr.bf16.mxu0 %v503
    %667 = vmatpush1.bf16.msra.mxu0 %v502
    %668 = vmatprep.subr.bf16.mxu0 0
    %669 = vmatpush1.bf16.msra.mxu0 0
    %670 = vmatprep.subr.bf16.mxu0 0
    %671 = vmatpush1.bf16.msra.mxu0 0
    %672 = vmatprep.subr.bf16.mxu0 0
    %673 = vmatpush1.bf16.msra.mxu0 0
    %674 = vmatprep.subr.bf16.mxu0 0
    %675 = vmatpush1.bf16.msra.mxu0 0
    %676 = vmatprep.subr.bf16.mxu0 0
    %677 = vmatpush1.bf16.msra.mxu0 0
    %678 = vmatprep.subr.bf16.mxu0 0
    %679 = vmatpush1.bf16.msra.mxu0 0
    %680 = vmatprep.subr.bf16.mxu0 0
    %681 = vmatpush1.bf16.msra.mxu0 0
    %682 = vmatprep.subr.bf16.mxu0 0
    %683 = vmatpush1.bf16.msra.mxu0 0
    %684 = vmatprep.mubr.bf16.mxu0 0
    %685 = vmatmul.mubr.bf16.gmra.mrb[0].mxu0 %v248
    %v686 = vpop.f32.mrb[0].mxu0
    %v687 = vadd.f32 %v221, %v686
    %v688 = vpop.f32.mrb[0].mxu0
    %v689 = vadd.f32 %v225, %v688
    %v690 = vpop.f32.mrb[0].mxu0
    %v691 = vpop.f32.mrb[0].mxu0
    %692 = vdwg.mxu0
    %693 = vmatprep.subr.bf16.mxu0 %v449
    %694 = vmatpush1.bf16.msra.mxu0 %v448
    %695 = vmatprep.subr.bf16.mxu0 %v457
    %696 = vmatpush1.bf16.msra.mxu0 %v456
    %697 = vmatprep.subr.bf16.mxu0 %v465
    %698 = vmatpush1.bf16.msra.mxu0 %v464
    %699 = vmatprep.subr.bf16.mxu0 %v473
    %700 = vmatpush1.bf16.msra.mxu0 %v472
    %701 = vmatprep.subr.bf16.mxu0 %v481
    %702 = vmatpush1.bf16.msra.mxu0 %v480
    %703 = vmatprep.subr.bf16.mxu0 %v489
    %704 = vmatpush1.bf16.msra.mxu0 %v488
    %705 = vmatprep.subr.bf16.mxu0 %v497
    %706 = vmatpush1.bf16.msra.mxu0 %v496
    %707 = vmatprep.subr.bf16.mxu0 %v505
    %708 = vmatpush1.bf16.msra.mxu0 %v504
    %709 = vmatprep.subr.bf16.mxu0 0
    %710 = vmatpush1.bf16.msra.mxu0 0
    %711 = vmatprep.subr.bf16.mxu0 0
    %712 = vmatpush1.bf16.msra.mxu0 0
    %713 = vmatprep.subr.bf16.mxu0 0
    %714 = vmatpush1.bf16.msra.mxu0 0
    %715 = vmatprep.subr.bf16.mxu0 0
    %716 = vmatpush1.bf16.msra.mxu0 0
    %717 = vmatprep.subr.bf16.mxu0 0
    %718 = vmatpush1.bf16.msra.mxu0 0
    %719 = vmatprep.subr.bf16.mxu0 0
    %720 = vmatpush1.bf16.msra.mxu0 0
    %721 = vmatprep.subr.bf16.mxu0 0
    %722 = vmatpush1.bf16.msra.mxu0 0
    %723 = vmatprep.subr.bf16.mxu0 0
    %724 = vmatpush1.bf16.msra.mxu0 0
    %725 = vmatprep.mubr.bf16.mxu0 0
    %726 = vmatmul.mubr.bf16.gmra.mrb[0].mxu0 %v248
    %v727 = vpop.f32.mrb[0].mxu0
    %v728 = vadd.f32 %v229, %v727
    %v729 = vpop.f32.mrb[0].mxu0
    %v730 = vadd.f32 %v233, %v729
    %v731 = vpop.f32.mrb[0].mxu0
    %v732 = vpop.f32.mrb[0].mxu0
    %733 = vdwg.mxu0
    %v734 = vmax.f32 %v605, 0.0
    %v735 = vmax.f32 %v607, 0.0
    %v736 = vmax.f32 %v646, 0.0
    %v737 = vmax.f32 %v648, 0.0
    %v738 = vmax.f32 %v687, 0.0
    %v739 = vmax.f32 %v689, 0.0
    %v740 = vmax.f32 %v728, 0.0
    %v741 = vmax.f32 %v730, 0.0
    %v742 = vpack.c.bf16 %v734, %v734
    %v743 = vpack.c.bf16 %v735, %v735
    %v744 = vpack.c.bf16 %v736, %v736
    %v745 = vpack.c.bf16 %v737, %v737
    %v746 = vpack.c.bf16 %v738, %v738
    %v747 = vpack.c.bf16 %v739, %v739
    %v748 = vpack.c.bf16 %v740, %v740
    %v749 = vpack.c.bf16 %v741, %v741
    %v750 = vld [vmem:[#allocation8] sm:$0xff]
    %v751 = vld [vmem:[#allocation8 + $0x8] sm:$0xff]
    %v752 = vld [vmem:[#allocation8 + $0x10] sm:$0xff]
    %v753 = vld [vmem:[#allocation8 + $0x18] sm:$0xff]
    %v754 = vld [vmem:[#allocation8 + $0x20] sm:$0xff]
    %v755 = vld [vmem:[#allocation8 + $0x28] sm:$0xff]
    %v756 = vld [vmem:[#allocation8 + $0x30] sm:$0xff]
    %v757 = vld [vmem:[#allocation8 + $0x38] sm:$0xff]
    %v758 = vld [vmem:[#allocation8 + $0x40] sm:$0xff]
    %v759 = vld [vmem:[#allocation8 + $0x48] sm:$0xff]
    %v760 = vld [vmem:[#allocation8 + $0x50] sm:$0xff]
    %v761 = vld [vmem:[#allocation8 + $0x58] sm:$0xff]
    %v762 = vld [vmem:[#allocation8 + $0x60] sm:$0xff]
    %v763 = vld [vmem:[#allocation8 + $0x68] sm:$0xff]
    %v764 = vld [vmem:[#allocation8 + $0x70] sm:$0xff]
    %v765 = vld [vmem:[#allocation8 + $0x78] sm:$0xff]
    %v766 = vld [vmem:[#allocation8 + $0x80] sm:$0xff]
    %v767 = vld [vmem:[#allocation8 + $0x88] sm:$0xff]
    %v768 = vld [vmem:[#allocation8 + $0x90] sm:$0xff]
    %v769 = vld [vmem:[#allocation8 + $0x98] sm:$0xff]
    %v770 = vld [vmem:[#allocation8 + $0xa0] sm:$0xff]
    %v771 = vld [vmem:[#allocation8 + $0xa8] sm:$0xff]
    %v772 = vld [vmem:[#allocation8 + $0xb0] sm:$0xff]
    %v773 = vld [vmem:[#allocation8 + $0xb8] sm:$0xff]
    %v774 = vld [vmem:[#allocation8 + $0xc0] sm:$0xff]
    %v775 = vld [vmem:[#allocation8 + $0xc8] sm:$0xff]
    %v776 = vld [vmem:[#allocation8 + $0xd0] sm:$0xff]
    %v777 = vld [vmem:[#allocation8 + $0xd8] sm:$0xff]
    %v778 = vld [vmem:[#allocation8 + $0xe0] sm:$0xff]
    %v779 = vld [vmem:[#allocation8 + $0xe8] sm:$0xff]
    %v780 = vld [vmem:[#allocation8 + $0xf0] sm:$0xff]
    %v781 = vld [vmem:[#allocation8 + $0xf8] sm:$0xff]
    %v782 = vld [vmem:[#allocation8 + $0x100] sm:$0xff]
    %v783 = vld [vmem:[#allocation8 + $0x108] sm:$0xff]
    %v784 = vld [vmem:[#allocation8 + $0x110] sm:$0xff]
    %v785 = vld [vmem:[#allocation8 + $0x118] sm:$0xff]
    %v786 = vld [vmem:[#allocation8 + $0x120] sm:$0xff]
    %v787 = vld [vmem:[#allocation8 + $0x128] sm:$0xff]
    %v788 = vld [vmem:[#allocation8 + $0x130] sm:$0xff]
    %v789 = vld [vmem:[#allocation8 + $0x138] sm:$0xff]
    %v790 = vld [vmem:[#allocation8 + $0x140] sm:$0xff]
    %v791 = vld [vmem:[#allocation8 + $0x148] sm:$0xff]
    %v792 = vld [vmem:[#allocation8 + $0x150] sm:$0xff]
    %v793 = vld [vmem:[#allocation8 + $0x158] sm:$0xff]
    %v794 = vld [vmem:[#allocation8 + $0x160] sm:$0xff]
    %v795 = vld [vmem:[#allocation8 + $0x168] sm:$0xff]
    %v796 = vld [vmem:[#allocation8 + $0x170] sm:$0xff]
    %v797 = vld [vmem:[#allocation8 + $0x178] sm:$0xff]
    %v798 = vld [vmem:[#allocation8 + $0x180] sm:$0xff]
    %v799 = vld [vmem:[#allocation8 + $0x188] sm:$0xff]
    %v800 = vld [vmem:[#allocation8 + $0x190] sm:$0xff]
    %v801 = vld [vmem:[#allocation8 + $0x198] sm:$0xff]
    %v802 = vld [vmem:[#allocation8 + $0x1a0] sm:$0xff]
    %v803 = vld [vmem:[#allocation8 + $0x1a8] sm:$0xff]
    %v804 = vld [vmem:[#allocation8 + $0x1b0] sm:$0xff]
    %v805 = vld [vmem:[#allocation8 + $0x1b8] sm:$0xff]
    %v806 = vld [vmem:[#allocation8 + $0x1c0] sm:$0xff]
    %v807 = vld [vmem:[#allocation8 + $0x1c8] sm:$0xff]
    %v808 = vld [vmem:[#allocation8 + $0x1d0] sm:$0xff]
    %v809 = vld [vmem:[#allocation8 + $0x1d8] sm:$0xff]
    %v810 = vld [vmem:[#allocation8 + $0x1e0] sm:$0xff]
    %v811 = vld [vmem:[#allocation8 + $0x1e8] sm:$0xff]
    %v812 = vld [vmem:[#allocation8 + $0x1f0] sm:$0xff]
    %v813 = vld [vmem:[#allocation8 + $0x1f8] sm:$0xff]
    %v814 = vld [vmem:[#allocation8 + $0x200] sm:$0xff]
    %v815 = vld [vmem:[#allocation8 + $0x208] sm:$0xff]
    %v816 = vld [vmem:[#allocation8 + $0x210] sm:$0xff]
    %v817 = vld [vmem:[#allocation8 + $0x218] sm:$0xff]
    %v818 = vld [vmem:[#allocation8 + $0x220] sm:$0xff]
    %v819 = vld [vmem:[#allocation8 + $0x228] sm:$0xff]
    %v820 = vld [vmem:[#allocation8 + $0x230] sm:$0xff]
    %v821 = vld [vmem:[#allocation8 + $0x238] sm:$0xff]
    %v822 = vld [vmem:[#allocation8 + $0x240] sm:$0xff]
    %v823 = vld [vmem:[#allocation8 + $0x248] sm:$0xff]
    %v824 = vld [vmem:[#allocation8 + $0x250] sm:$0xff]
    %v825 = vld [vmem:[#allocation8 + $0x258] sm:$0xff]
    %v826 = vld [vmem:[#allocation8 + $0x260] sm:$0xff]
    %v827 = vld [vmem:[#allocation8 + $0x268] sm:$0xff]
    %v828 = vld [vmem:[#allocation8 + $0x270] sm:$0xff]
    %v829 = vld [vmem:[#allocation8 + $0x278] sm:$0xff]
    %v830 = vld [vmem:[#allocation8 + $0x280] sm:$0xff]
    %v831 = vld [vmem:[#allocation8 + $0x288] sm:$0xff]
    %v832 = vld [vmem:[#allocation8 + $0x290] sm:$0xff]
    %v833 = vld [vmem:[#allocation8 + $0x298] sm:$0xff]
    %v834 = vld [vmem:[#allocation8 + $0x2a0] sm:$0xff]
    %v835 = vld [vmem:[#allocation8 + $0x2a8] sm:$0xff]
    %v836 = vld [vmem:[#allocation8 + $0x2b0] sm:$0xff]
    %v837 = vld [vmem:[#allocation8 + $0x2b8] sm:$0xff]
    %v838 = vld [vmem:[#allocation8 + $0x2c0] sm:$0xff]
    %v839 = vld [vmem:[#allocation8 + $0x2c8] sm:$0xff]
    %v840 = vld [vmem:[#allocation8 + $0x2d0] sm:$0xff]
    %v841 = vld [vmem:[#allocation8 + $0x2d8] sm:$0xff]
    %v842 = vld [vmem:[#allocation8 + $0x2e0] sm:$0xff]
    %v843 = vld [vmem:[#allocation8 + $0x2e8] sm:$0xff]
    %v844 = vld [vmem:[#allocation8 + $0x2f0] sm:$0xff]
    %v845 = vld [vmem:[#allocation8 + $0x2f8] sm:$0xff]
    %v846 = vld [vmem:[#allocation8 + $0x300] sm:$0xff]
    %v847 = vld [vmem:[#allocation8 + $0x308] sm:$0xff]
    %v848 = vld [vmem:[#allocation8 + $0x310] sm:$0xff]
    %v849 = vld [vmem:[#allocation8 + $0x318] sm:$0xff]
    %v850 = vld [vmem:[#allocation8 + $0x320] sm:$0xff]
    %v851 = vld [vmem:[#allocation8 + $0x328] sm:$0xff]
    %v852 = vld [vmem:[#allocation8 + $0x330] sm:$0xff]
    %v853 = vld [vmem:[#allocation8 + $0x338] sm:$0xff]
    %v854 = vld [vmem:[#allocation8 + $0x340] sm:$0xff]
    %v855 = vld [vmem:[#allocation8 + $0x348] sm:$0xff]
    %v856 = vld [vmem:[#allocation8 + $0x350] sm:$0xff]
    %v857 = vld [vmem:[#allocation8 + $0x358] sm:$0xff]
    %v858 = vld [vmem:[#allocation8 + $0x360] sm:$0xff]
    %v859 = vld [vmem:[#allocation8 + $0x368] sm:$0xff]
    %v860 = vld [vmem:[#allocation8 + $0x370] sm:$0xff]
    %v861 = vld [vmem:[#allocation8 + $0x378] sm:$0xff]
    %v862 = vld [vmem:[#allocation8 + $0x380] sm:$0xff]
    %v863 = vld [vmem:[#allocation8 + $0x388] sm:$0xff]
    %v864 = vld [vmem:[#allocation8 + $0x390] sm:$0xff]
    %v865 = vld [vmem:[#allocation8 + $0x398] sm:$0xff]
    %v866 = vld [vmem:[#allocation8 + $0x3a0] sm:$0xff]
    %v867 = vld [vmem:[#allocation8 + $0x3a8] sm:$0xff]
    %v868 = vld [vmem:[#allocation8 + $0x3b0] sm:$0xff]
    %v869 = vld [vmem:[#allocation8 + $0x3b8] sm:$0xff]
    %v870 = vld [vmem:[#allocation8 + $0x3c0] sm:$0xff]
    %v871 = vld [vmem:[#allocation8 + $0x3c8] sm:$0xff]
    %v872 = vld [vmem:[#allocation8 + $0x3d0] sm:$0xff]
    %v873 = vld [vmem:[#allocation8 + $0x3d8] sm:$0xff]
    %v874 = vld [vmem:[#allocation8 + $0x3e0] sm:$0xff]
    %v875 = vld [vmem:[#allocation8 + $0x3e8] sm:$0xff]
    %v876 = vld [vmem:[#allocation8 + $0x3f0] sm:$0xff]
    %v877 = vld [vmem:[#allocation8 + $0x3f8] sm:$0xff]
    %v878 = vld [vmem:[#allocation10] sm:$0x3]
    %v880 = vlaneseq
    %v881 = vshrl.u32 %v880, 7
    %v882 = vsub.s32 0, %v881
    %v883 = vrot.slane %v878, %v882
    %v884 = vlaneseq
    %v885 = vshrl.u32 %v884, 7
    %v886 = vsub.s32 1, %v885
    %v887 = vrot.slane %v878, %v886
    %v1018 = vunpack.c.l.b16 %v750
    %v1019 = vunpack.c.h.b16 %v750
    %v1020 = vunpack.c.l.b16 %v751
    %v1021 = vunpack.c.h.b16 %v751
    %v1022 = vunpack.c.l.b16 %v752
    %v1023 = vunpack.c.h.b16 %v752
    %v1024 = vunpack.c.l.b16 %v753
    %v1025 = vunpack.c.h.b16 %v753
    %v1026 = vunpack.c.l.b16 %v754
    %v1027 = vunpack.c.h.b16 %v754
    %v1028 = vunpack.c.l.b16 %v755
    %v1029 = vunpack.c.h.b16 %v755
    %v1030 = vunpack.c.l.b16 %v756
    %v1031 = vunpack.c.h.b16 %v756
    %v1032 = vunpack.c.l.b16 %v757
    %v1033 = vunpack.c.h.b16 %v757
    %v1034 = vunpack.c.l.b16 %v758
    %v1035 = vunpack.c.h.b16 %v758
    %v1036 = vunpack.c.l.b16 %v759
    %v1037 = vunpack.c.h.b16 %v759
    %v1038 = vunpack.c.l.b16 %v760
    %v1039 = vunpack.c.h.b16 %v760
    %v1040 = vunpack.c.l.b16 %v761
    %v1041 = vunpack.c.h.b16 %v761
    %v1042 = vunpack.c.l.b16 %v762
    %v1043 = vunpack.c.h.b16 %v762
    %v1044 = vunpack.c.l.b16 %v763
    %v1045 = vunpack.c.h.b16 %v763
    %v1046 = vunpack.c.l.b16 %v764
    %v1047 = vunpack.c.h.b16 %v764
    %v1048 = vunpack.c.l.b16 %v765
    %v1049 = vunpack.c.h.b16 %v765
    %v1050 = vunpack.c.l.b16 %v766
    %v1051 = vunpack.c.h.b16 %v766
    %v1052 = vunpack.c.l.b16 %v767
    %v1053 = vunpack.c.h.b16 %v767
    %v1054 = vunpack.c.l.b16 %v768
    %v1055 = vunpack.c.h.b16 %v768
    %v1056 = vunpack.c.l.b16 %v769
    %v1057 = vunpack.c.h.b16 %v769
    %v1058 = vunpack.c.l.b16 %v770
    %v1059 = vunpack.c.h.b16 %v770
    %v1060 = vunpack.c.l.b16 %v771
    %v1061 = vunpack.c.h.b16 %v771
    %v1062 = vunpack.c.l.b16 %v772
    %v1063 = vunpack.c.h.b16 %v772
    %v1064 = vunpack.c.l.b16 %v773
    %v1065 = vunpack.c.h.b16 %v773
    %v1066 = vunpack.c.l.b16 %v774
    %v1067 = vunpack.c.h.b16 %v774
    %v1068 = vunpack.c.l.b16 %v775
    %v1069 = vunpack.c.h.b16 %v775
    %v1070 = vunpack.c.l.b16 %v776
    %v1071 = vunpack.c.h.b16 %v776
    %v1072 = vunpack.c.l.b16 %v777
    %v1073 = vunpack.c.h.b16 %v777
    %v1074 = vunpack.c.l.b16 %v778
    %v1075 = vunpack.c.h.b16 %v778
    %v1076 = vunpack.c.l.b16 %v779
    %v1077 = vunpack.c.h.b16 %v779
    %v1078 = vunpack.c.l.b16 %v780
    %v1079 = vunpack.c.h.b16 %v780
    %v1080 = vunpack.c.l.b16 %v781
    %v1081 = vunpack.c.h.b16 %v781
    %v1082 = vunpack.c.l.b16 %v782
    %v1083 = vunpack.c.h.b16 %v782
    %v1084 = vunpack.c.l.b16 %v783
    %v1085 = vunpack.c.h.b16 %v783
    %v1086 = vunpack.c.l.b16 %v784
    %v1087 = vunpack.c.h.b16 %v784
    %v1088 = vunpack.c.l.b16 %v785
    %v1089 = vunpack.c.h.b16 %v785
    %v1090 = vunpack.c.l.b16 %v786
    %v1091 = vunpack.c.h.b16 %v786
    %v1092 = vunpack.c.l.b16 %v787
    %v1093 = vunpack.c.h.b16 %v787
    %v1094 = vunpack.c.l.b16 %v788
    %v1095 = vunpack.c.h.b16 %v788
    %v1096 = vunpack.c.l.b16 %v789
    %v1097 = vunpack.c.h.b16 %v789
    %v1098 = vunpack.c.l.b16 %v790
    %v1099 = vunpack.c.h.b16 %v790
    %v1100 = vunpack.c.l.b16 %v791
    %v1101 = vunpack.c.h.b16 %v791
    %v1102 = vunpack.c.l.b16 %v792
    %v1103 = vunpack.c.h.b16 %v792
    %v1104 = vunpack.c.l.b16 %v793
    %v1105 = vunpack.c.h.b16 %v793
    %v1106 = vunpack.c.l.b16 %v794
    %v1107 = vunpack.c.h.b16 %v794
    %v1108 = vunpack.c.l.b16 %v795
    %v1109 = vunpack.c.h.b16 %v795
    %v1110 = vunpack.c.l.b16 %v796
    %v1111 = vunpack.c.h.b16 %v796
    %v1112 = vunpack.c.l.b16 %v797
    %v1113 = vunpack.c.h.b16 %v797
    %v1114 = vunpack.c.l.b16 %v798
    %v1115 = vunpack.c.h.b16 %v798
    %v1116 = vunpack.c.l.b16 %v799
    %v1117 = vunpack.c.h.b16 %v799
    %v1118 = vunpack.c.l.b16 %v800
    %v1119 = vunpack.c.h.b16 %v800
    %v1120 = vunpack.c.l.b16 %v801
    %v1121 = vunpack.c.h.b16 %v801
    %v1122 = vunpack.c.l.b16 %v802
    %v1123 = vunpack.c.h.b16 %v802
    %v1124 = vunpack.c.l.b16 %v803
    %v1125 = vunpack.c.h.b16 %v803
    %v1126 = vunpack.c.l.b16 %v804
    %v1127 = vunpack.c.h.b16 %v804
    %v1128 = vunpack.c.l.b16 %v805
    %v1129 = vunpack.c.h.b16 %v805
    %v1130 = vunpack.c.l.b16 %v806
    %v1131 = vunpack.c.h.b16 %v806
    %v1132 = vunpack.c.l.b16 %v807
    %v1133 = vunpack.c.h.b16 %v807
    %v1134 = vunpack.c.l.b16 %v808
    %v1135 = vunpack.c.h.b16 %v808
    %v1136 = vunpack.c.l.b16 %v809
    %v1137 = vunpack.c.h.b16 %v809
    %v1138 = vunpack.c.l.b16 %v810
    %v1139 = vunpack.c.h.b16 %v810
    %v1140 = vunpack.c.l.b16 %v811
    %v1141 = vunpack.c.h.b16 %v811
    %v1142 = vunpack.c.l.b16 %v812
    %v1143 = vunpack.c.h.b16 %v812
    %v1144 = vunpack.c.l.b16 %v813
    %v1145 = vunpack.c.h.b16 %v813
    %v1146 = vunpack.c.l.b16 %v814
    %v1147 = vunpack.c.h.b16 %v814
    %v1148 = vunpack.c.l.b16 %v815
    %v1149 = vunpack.c.h.b16 %v815
    %v1150 = vunpack.c.l.b16 %v816
    %v1151 = vunpack.c.h.b16 %v816
    %v1152 = vunpack.c.l.b16 %v817
    %v1153 = vunpack.c.h.b16 %v817
    %v1154 = vunpack.c.l.b16 %v818
    %v1155 = vunpack.c.h.b16 %v818
    %v1156 = vunpack.c.l.b16 %v819
    %v1157 = vunpack.c.h.b16 %v819
    %v1158 = vunpack.c.l.b16 %v820
    %v1159 = vunpack.c.h.b16 %v820
    %v1160 = vunpack.c.l.b16 %v821
    %v1161 = vunpack.c.h.b16 %v821
    %v1162 = vunpack.c.l.b16 %v822
    %v1163 = vunpack.c.h.b16 %v822
    %v1164 = vunpack.c.l.b16 %v823
    %v1165 = vunpack.c.h.b16 %v823
    %v1166 = vunpack.c.l.b16 %v824
    %v1167 = vunpack.c.h.b16 %v824
    %v1168 = vunpack.c.l.b16 %v825
    %v1169 = vunpack.c.h.b16 %v825
    %v1170 = vunpack.c.l.b16 %v826
    %v1171 = vunpack.c.h.b16 %v826
    %v1172 = vunpack.c.l.b16 %v827
    %v1173 = vunpack.c.h.b16 %v827
    %v1174 = vunpack.c.l.b16 %v828
    %v1175 = vunpack.c.h.b16 %v828
    %v1176 = vunpack.c.l.b16 %v829
    %v1177 = vunpack.c.h.b16 %v829
    %v1178 = vunpack.c.l.b16 %v830
    %v1179 = vunpack.c.h.b16 %v830
    %v1180 = vunpack.c.l.b16 %v831
    %v1181 = vunpack.c.h.b16 %v831
    %v1182 = vunpack.c.l.b16 %v832
    %v1183 = vunpack.c.h.b16 %v832
    %v1184 = vunpack.c.l.b16 %v833
    %v1185 = vunpack.c.h.b16 %v833
    %v1186 = vunpack.c.l.b16 %v834
    %v1187 = vunpack.c.h.b16 %v834
    %v1188 = vunpack.c.l.b16 %v835
    %v1189 = vunpack.c.h.b16 %v835
    %v1190 = vunpack.c.l.b16 %v836
    %v1191 = vunpack.c.h.b16 %v836
    %v1192 = vunpack.c.l.b16 %v837
    %v1193 = vunpack.c.h.b16 %v837
    %v1194 = vunpack.c.l.b16 %v838
    %v1195 = vunpack.c.h.b16 %v838
    %v1196 = vunpack.c.l.b16 %v839
    %v1197 = vunpack.c.h.b16 %v839
    %v1198 = vunpack.c.l.b16 %v840
    %v1199 = vunpack.c.h.b16 %v840
    %v1200 = vunpack.c.l.b16 %v841
    %v1201 = vunpack.c.h.b16 %v841
    %v1202 = vunpack.c.l.b16 %v842
    %v1203 = vunpack.c.h.b16 %v842
    %v1204 = vunpack.c.l.b16 %v843
    %v1205 = vunpack.c.h.b16 %v843
    %v1206 = vunpack.c.l.b16 %v844
    %v1207 = vunpack.c.h.b16 %v844
    %v1208 = vunpack.c.l.b16 %v845
    %v1209 = vunpack.c.h.b16 %v845
    %v1210 = vunpack.c.l.b16 %v846
    %v1211 = vunpack.c.h.b16 %v846
    %v1212 = vunpack.c.l.b16 %v847
    %v1213 = vunpack.c.h.b16 %v847
    %v1214 = vunpack.c.l.b16 %v848
    %v1215 = vunpack.c.h.b16 %v848
    %v1216 = vunpack.c.l.b16 %v849
    %v1217 = vunpack.c.h.b16 %v849
    %v1218 = vunpack.c.l.b16 %v850
    %v1219 = vunpack.c.h.b16 %v850
    %v1220 = vunpack.c.l.b16 %v851
    %v1221 = vunpack.c.h.b16 %v851
    %v1222 = vunpack.c.l.b16 %v852
    %v1223 = vunpack.c.h.b16 %v852
    %v1224 = vunpack.c.l.b16 %v853
    %v1225 = vunpack.c.h.b16 %v853
    %v1226 = vunpack.c.l.b16 %v854
    %v1227 = vunpack.c.h.b16 %v854
    %v1228 = vunpack.c.l.b16 %v855
    %v1229 = vunpack.c.h.b16 %v855
    %v1230 = vunpack.c.l.b16 %v856
    %v1231 = vunpack.c.h.b16 %v856
    %v1232 = vunpack.c.l.b16 %v857
    %v1233 = vunpack.c.h.b16 %v857
    %v1234 = vunpack.c.l.b16 %v858
    %v1235 = vunpack.c.h.b16 %v858
    %v1236 = vunpack.c.l.b16 %v859
    %v1237 = vunpack.c.h.b16 %v859
    %v1238 = vunpack.c.l.b16 %v860
    %v1239 = vunpack.c.h.b16 %v860
    %v1240 = vunpack.c.l.b16 %v861
    %v1241 = vunpack.c.h.b16 %v861
    %v1242 = vunpack.c.l.b16 %v862
    %v1243 = vunpack.c.h.b16 %v862
    %v1244 = vunpack.c.l.b16 %v863
    %v1245 = vunpack.c.h.b16 %v863
    %v1246 = vunpack.c.l.b16 %v864
    %v1247 = vunpack.c.h.b16 %v864
    %v1248 = vunpack.c.l.b16 %v865
    %v1249 = vunpack.c.h.b16 %v865
    %v1250 = vunpack.c.l.b16 %v866
    %v1251 = vunpack.c.h.b16 %v866
    %v1252 = vunpack.c.l.b16 %v867
    %v1253 = vunpack.c.h.b16 %v867
    %v1254 = vunpack.c.l.b16 %v868
    %v1255 = vunpack.c.h.b16 %v868
    %v1256 = vunpack.c.l.b16 %v869
    %v1257 = vunpack.c.h.b16 %v869
    %v1258 = vunpack.c.l.b16 %v870
    %v1259 = vunpack.c.h.b16 %v870
    %v1260 = vunpack.c.l.b16 %v871
    %v1261 = vunpack.c.h.b16 %v871
    %v1262 = vunpack.c.l.b16 %v872
    %v1263 = vunpack.c.h.b16 %v872
    %v1264 = vunpack.c.l.b16 %v873
    %v1265 = vunpack.c.h.b16 %v873
    %v1266 = vunpack.c.l.b16 %v874
    %v1267 = vunpack.c.h.b16 %v874
    %v1268 = vunpack.c.l.b16 %v875
    %v1269 = vunpack.c.h.b16 %v875
    %v1270 = vunpack.c.l.b16 %v876
    %v1271 = vunpack.c.h.b16 %v876
    %v1272 = vunpack.c.l.b16 %v877
    %v1273 = vunpack.c.h.b16 %v877
    %v1274 = vpack.c.b16 %v1020, %v1018
    %v1275 = vpack.c.b16 %v1021, %v1019
    %v1276 = vpack.c.b16 %v1024, %v1022
    %v1277 = vpack.c.b16 %v1025, %v1023
    %v1278 = vpack.c.b16 %v1028, %v1026
    %v1279 = vpack.c.b16 %v1029, %v1027
    %v1280 = vpack.c.b16 %v1032, %v1030
    %v1281 = vpack.c.b16 %v1033, %v1031
    %v1282 = vpack.c.b16 %v1036, %v1034
    %v1283 = vpack.c.b16 %v1037, %v1035
    %v1284 = vpack.c.b16 %v1040, %v1038
    %v1285 = vpack.c.b16 %v1041, %v1039
    %v1286 = vpack.c.b16 %v1044, %v1042
    %v1287 = vpack.c.b16 %v1045, %v1043
    %v1288 = vpack.c.b16 %v1048, %v1046
    %v1289 = vpack.c.b16 %v1049, %v1047
    %v1290 = vpack.c.b16 %v1052, %v1050
    %v1291 = vpack.c.b16 %v1053, %v1051
    %v1292 = vpack.c.b16 %v1056, %v1054
    %v1293 = vpack.c.b16 %v1057, %v1055
    %v1294 = vpack.c.b16 %v1060, %v1058
    %v1295 = vpack.c.b16 %v1061, %v1059
    %v1296 = vpack.c.b16 %v1064, %v1062
    %v1297 = vpack.c.b16 %v1065, %v1063
    %v1298 = vpack.c.b16 %v1068, %v1066
    %v1299 = vpack.c.b16 %v1069, %v1067
    %v1300 = vpack.c.b16 %v1072, %v1070
    %v1301 = vpack.c.b16 %v1073, %v1071
    %v1302 = vpack.c.b16 %v1076, %v1074
    %v1303 = vpack.c.b16 %v1077, %v1075
    %v1304 = vpack.c.b16 %v1080, %v1078
    %v1305 = vpack.c.b16 %v1081, %v1079
    %v1306 = vpack.c.b16 %v1084, %v1082
    %v1307 = vpack.c.b16 %v1085, %v1083
    %v1308 = vpack.c.b16 %v1088, %v1086
    %v1309 = vpack.c.b16 %v1089, %v1087
    %v1310 = vpack.c.b16 %v1092, %v1090
    %v1311 = vpack.c.b16 %v1093, %v1091
    %v1312 = vpack.c.b16 %v1096, %v1094
    %v1313 = vpack.c.b16 %v1097, %v1095
    %v1314 = vpack.c.b16 %v1100, %v1098
    %v1315 = vpack.c.b16 %v1101, %v1099
    %v1316 = vpack.c.b16 %v1104, %v1102
    %v1317 = vpack.c.b16 %v1105, %v1103
    %v1318 = vpack.c.b16 %v1108, %v1106
    %v1319 = vpack.c.b16 %v1109, %v1107
    %v1320 = vpack.c.b16 %v1112, %v1110
    %v1321 = vpack.c.b16 %v1113, %v1111
    %v1322 = vpack.c.b16 %v1116, %v1114
    %v1323 = vpack.c.b16 %v1117, %v1115
    %v1324 = vpack.c.b16 %v1120, %v1118
    %v1325 = vpack.c.b16 %v1121, %v1119
    %v1326 = vpack.c.b16 %v1124, %v1122
    %v1327 = vpack.c.b16 %v1125, %v1123
    %v1328 = vpack.c.b16 %v1128, %v1126
    %v1329 = vpack.c.b16 %v1129, %v1127
    %v1330 = vpack.c.b16 %v1132, %v1130
    %v1331 = vpack.c.b16 %v1133, %v1131
    %v1332 = vpack.c.b16 %v1136, %v1134
    %v1333 = vpack.c.b16 %v1137, %v1135
    %v1334 = vpack.c.b16 %v1140, %v1138
    %v1335 = vpack.c.b16 %v1141, %v1139
    %v1336 = vpack.c.b16 %v1144, %v1142
    %v1337 = vpack.c.b16 %v1145, %v1143
    %v1338 = vpack.c.b16 %v1148, %v1146
    %v1339 = vpack.c.b16 %v1149, %v1147
    %v1340 = vpack.c.b16 %v1152, %v1150
    %v1341 = vpack.c.b16 %v1153, %v1151
    %v1342 = vpack.c.b16 %v1156, %v1154
    %v1343 = vpack.c.b16 %v1157, %v1155
    %v1344 = vpack.c.b16 %v1160, %v1158
    %v1345 = vpack.c.b16 %v1161, %v1159
    %v1346 = vpack.c.b16 %v1164, %v1162
    %v1347 = vpack.c.b16 %v1165, %v1163
    %v1348 = vpack.c.b16 %v1168, %v1166
    %v1349 = vpack.c.b16 %v1169, %v1167
    %v1350 = vpack.c.b16 %v1172, %v1170
    %v1351 = vpack.c.b16 %v1173, %v1171
    %v1352 = vpack.c.b16 %v1176, %v1174
    %v1353 = vpack.c.b16 %v1177, %v1175
    %v1354 = vpack.c.b16 %v1180, %v1178
    %v1355 = vpack.c.b16 %v1181, %v1179
    %v1356 = vpack.c.b16 %v1184, %v1182
    %v1357 = vpack.c.b16 %v1185, %v1183
    %v1358 = vpack.c.b16 %v1188, %v1186
    %v1359 = vpack.c.b16 %v1189, %v1187
    %v1360 = vpack.c.b16 %v1192, %v1190
    %v1361 = vpack.c.b16 %v1193, %v1191
    %v1362 = vpack.c.b16 %v1196, %v1194
    %v1363 = vpack.c.b16 %v1197, %v1195
    %v1364 = vpack.c.b16 %v1200, %v1198
    %v1365 = vpack.c.b16 %v1201, %v1199
    %v1366 = vpack.c.b16 %v1204, %v1202
    %v1367 = vpack.c.b16 %v1205, %v1203
    %v1368 = vpack.c.b16 %v1208, %v1206
    %v1369 = vpack.c.b16 %v1209, %v1207
    %v1370 = vpack.c.b16 %v1212, %v1210
    %v1371 = vpack.c.b16 %v1213, %v1211
    %v1372 = vpack.c.b16 %v1216, %v1214
    %v1373 = vpack.c.b16 %v1217, %v1215
    %v1374 = vpack.c.b16 %v1220, %v1218
    %v1375 = vpack.c.b16 %v1221, %v1219
    %v1376 = vpack.c.b16 %v1224, %v1222
    %v1377 = vpack.c.b16 %v1225, %v1223
    %v1378 = vpack.c.b16 %v1228, %v1226
    %v1379 = vpack.c.b16 %v1229, %v1227
    %v1380 = vpack.c.b16 %v1232, %v1230
    %v1381 = vpack.c.b16 %v1233, %v1231
    %v1382 = vpack.c.b16 %v1236, %v1234
    %v1383 = vpack.c.b16 %v1237, %v1235
    %v1384 = vpack.c.b16 %v1240, %v1238
    %v1385 = vpack.c.b16 %v1241, %v1239
    %v1386 = vpack.c.b16 %v1244, %v1242
    %v1387 = vpack.c.b16 %v1245, %v1243
    %v1388 = vpack.c.b16 %v1248, %v1246
    %v1389 = vpack.c.b16 %v1249, %v1247
    %v1390 = vpack.c.b16 %v1252, %v1250
    %v1391 = vpack.c.b16 %v1253, %v1251
    %v1392 = vpack.c.b16 %v1256, %v1254
    %v1393 = vpack.c.b16 %v1257, %v1255
    %v1394 = vpack.c.b16 %v1260, %v1258
    %v1395 = vpack.c.b16 %v1261, %v1259
    %v1396 = vpack.c.b16 %v1264, %v1262
    %v1397 = vpack.c.b16 %v1265, %v1263
    %v1398 = vpack.c.b16 %v1268, %v1266
    %v1399 = vpack.c.b16 %v1269, %v1267
    %v1400 = vpack.c.b16 %v1272, %v1270
    %v1401 = vpack.c.b16 %v1273, %v1271
    %1530 = vmatprep.subr.bf16.mxu0 %v1275
    %1531 = vmatpush1.bf16.msra.mxu0 %v1274
    %1532 = vmatprep.subr.bf16.mxu0 %v1277
    %1533 = vmatpush1.bf16.msra.mxu0 %v1276
    %1534 = vmatprep.subr.bf16.mxu0 %v1279
    %1535 = vmatpush1.bf16.msra.mxu0 %v1278
    %1536 = vmatprep.subr.bf16.mxu0 %v1281
    %1537 = vmatpush1.bf16.msra.mxu0 %v1280
    %1538 = vmatprep.subr.bf16.mxu0 %v1283
    %1539 = vmatpush1.bf16.msra.mxu0 %v1282
    %1540 = vmatprep.subr.bf16.mxu0 %v1285
    %1541 = vmatpush1.bf16.msra.mxu0 %v1284
    %1542 = vmatprep.subr.bf16.mxu0 %v1287
    %1543 = vmatpush1.bf16.msra.mxu0 %v1286
    %1544 = vmatprep.subr.bf16.mxu0 %v1289
    %1545 = vmatpush1.bf16.msra.mxu0 %v1288
    %1546 = vmatprep.subr.bf16.mxu0 %v1291
    %1547 = vmatpush1.bf16.msra.mxu0 %v1290
    %1548 = vmatprep.subr.bf16.mxu0 %v1293
    %1549 = vmatpush1.bf16.msra.mxu0 %v1292
    %1550 = vmatprep.subr.bf16.mxu0 %v1295
    %1551 = vmatpush1.bf16.msra.mxu0 %v1294
    %1552 = vmatprep.subr.bf16.mxu0 %v1297
    %1553 = vmatpush1.bf16.msra.mxu0 %v1296
    %1554 = vmatprep.subr.bf16.mxu0 %v1299
    %1555 = vmatpush1.bf16.msra.mxu0 %v1298
    %1556 = vmatprep.subr.bf16.mxu0 %v1301
    %1557 = vmatpush1.bf16.msra.mxu0 %v1300
    %1558 = vmatprep.subr.bf16.mxu0 %v1303
    %1559 = vmatpush1.bf16.msra.mxu0 %v1302
    %1560 = vmatprep.subr.bf16.mxu0 %v1305
    %1561 = vmatpush1.bf16.msra.mxu0 %v1304
    %1562 = vmatprep.mubr.bf16.mxu0 %v743
    %1563 = vmatmul.mubr.bf16.gmra.mrb[0].mxu0 %v742
    %v1564 = vpop.f32.mrb[0].mxu0
    %v1565 = vadd.f32 %v883, %v1564
    %v1566 = vpop.f32.mrb[0].mxu0
    %v1567 = vadd.f32 %v887, %v1566
    %v1568 = vpop.f32.mrb[0].mxu0
    %v1569 = vpop.f32.mrb[0].mxu0
    %1570 = vdwg.mxu0
    %1571 = vmatprep.subr.bf16.mxu0 %v1307
    %1572 = vmatpush1.bf16.msra.mxu0 %v1306
    %1573 = vmatprep.subr.bf16.mxu0 %v1309
    %1574 = vmatpush1.bf16.msra.mxu0 %v1308
    %1575 = vmatprep.subr.bf16.mxu0 %v1311
    %1576 = vmatpush1.bf16.msra.mxu0 %v1310
    %1577 = vmatprep.subr.bf16.mxu0 %v1313
    %1578 = vmatpush1.bf16.msra.mxu0 %v1312
    %1579 = vmatprep.subr.bf16.mxu0 %v1315
    %1580 = vmatpush1.bf16.msra.mxu0 %v1314
    %1581 = vmatprep.subr.bf16.mxu0 %v1317
    %1582 = vmatpush1.bf16.msra.mxu0 %v1316
    %1583 = vmatprep.subr.bf16.mxu0 %v1319
    %1584 = vmatpush1.bf16.msra.mxu0 %v1318
    %1585 = vmatprep.subr.bf16.mxu0 %v1321
    %1586 = vmatpush1.bf16.msra.mxu0 %v1320
    %1587 = vmatprep.subr.bf16.mxu0 %v1323
    %1588 = vmatpush1.bf16.msra.mxu0 %v1322
    %1589 = vmatprep.subr.bf16.mxu0 %v1325
    %1590 = vmatpush1.bf16.msra.mxu0 %v1324
    %1591 = vmatprep.subr.bf16.mxu0 %v1327
    %1592 = vmatpush1.bf16.msra.mxu0 %v1326
    %1593 = vmatprep.subr.bf16.mxu0 %v1329
    %1594 = vmatpush1.bf16.msra.mxu0 %v1328
    %1595 = vmatprep.subr.bf16.mxu0 %v1331
    %1596 = vmatpush1.bf16.msra.mxu0 %v1330
    %1597 = vmatprep.subr.bf16.mxu0 %v1333
    %1598 = vmatpush1.bf16.msra.mxu0 %v1332
    %1599 = vmatprep.subr.bf16.mxu0 %v1335
    %1600 = vmatpush1.bf16.msra.mxu0 %v1334
    %1601 = vmatprep.subr.bf16.mxu0 %v1337
    %1602 = vmatpush1.bf16.msra.mxu0 %v1336
    %1603 = vmatprep.mubr.bf16.mxu0 %v745
    %1604 = vmatmul.mubr.bf16.gmra.mrb[0].mxu0 %v744
    %v1605 = vpop.f32.mrb[0].mxu0
    %v1606 = vadd.f32 %v1565, %v1605
    %v1607 = vpop.f32.mrb[0].mxu0
    %v1608 = vadd.f32 %v1567, %v1607
    %v1609 = vpop.f32.mrb[0].mxu0
    %v1610 = vpop.f32.mrb[0].mxu0
    %1611 = vdwg.mxu0
    %1612 = vmatprep.subr.bf16.mxu0 %v1339
    %1613 = vmatpush1.bf16.msra.mxu0 %v1338
    %1614 = vmatprep.subr.bf16.mxu0 %v1341
    %1615 = vmatpush1.bf16.msra.mxu0 %v1340
    %1616 = vmatprep.subr.bf16.mxu0 %v1343
    %1617 = vmatpush1.bf16.msra.mxu0 %v1342
    %1618 = vmatprep.subr.bf16.mxu0 %v1345
    %1619 = vmatpush1.bf16.msra.mxu0 %v1344
    %1620 = vmatprep.subr.bf16.mxu0 %v1347
    %1621 = vmatpush1.bf16.msra.mxu0 %v1346
    %1622 = vmatprep.subr.bf16.mxu0 %v1349
    %1623 = vmatpush1.bf16.msra.mxu0 %v1348
    %1624 = vmatprep.subr.bf16.mxu0 %v1351
    %1625 = vmatpush1.bf16.msra.mxu0 %v1350
    %1626 = vmatprep.subr.bf16.mxu0 %v1353
    %1627 = vmatpush1.bf16.msra.mxu0 %v1352
    %1628 = vmatprep.subr.bf16.mxu0 %v1355
    %1629 = vmatpush1.bf16.msra.mxu0 %v1354
    %1630 = vmatprep.subr.bf16.mxu0 %v1357
    %1631 = vmatpush1.bf16.msra.mxu0 %v1356
    %1632 = vmatprep.subr.bf16.mxu0 %v1359
    %1633 = vmatpush1.bf16.msra.mxu0 %v1358
    %1634 = vmatprep.subr.bf16.mxu0 %v1361
    %1635 = vmatpush1.bf16.msra.mxu0 %v1360
    %1636 = vmatprep.subr.bf16.mxu0 %v1363
    %1637 = vmatpush1.bf16.msra.mxu0 %v1362
    %1638 = vmatprep.subr.bf16.mxu0 %v1365
    %1639 = vmatpush1.bf16.msra.mxu0 %v1364
    %1640 = vmatprep.subr.bf16.mxu0 %v1367
    %1641 = vmatpush1.bf16.msra.mxu0 %v1366
    %1642 = vmatprep.subr.bf16.mxu0 %v1369
    %1643 = vmatpush1.bf16.msra.mxu0 %v1368
    %1644 = vmatprep.mubr.bf16.mxu0 %v747
    %1645 = vmatmul.mubr.bf16.gmra.mrb[0].mxu0 %v746
    %v1646 = vpop.f32.mrb[0].mxu0
    %v1647 = vadd.f32 %v1606, %v1646
    %v1648 = vpop.f32.mrb[0].mxu0
    %v1649 = vadd.f32 %v1608, %v1648
    %v1650 = vpop.f32.mrb[0].mxu0
    %v1651 = vpop.f32.mrb[0].mxu0
    %1652 = vdwg.mxu0
    %1653 = vmatprep.subr.bf16.mxu0 %v1371
    %1654 = vmatpush1.bf16.msra.mxu0 %v1370
    %1655 = vmatprep.subr.bf16.mxu0 %v1373
    %1656 = vmatpush1.bf16.msra.mxu0 %v1372
    %1657 = vmatprep.subr.bf16.mxu0 %v1375
    %1658 = vmatpush1.bf16.msra.mxu0 %v1374
    %1659 = vmatprep.subr.bf16.mxu0 %v1377
    %1660 = vmatpush1.bf16.msra.mxu0 %v1376
    %1661 = vmatprep.subr.bf16.mxu0 %v1379
    %1662 = vmatpush1.bf16.msra.mxu0 %v1378
    %1663 = vmatprep.subr.bf16.mxu0 %v1381
    %1664 = vmatpush1.bf16.msra.mxu0 %v1380
    %1665 = vmatprep.subr.bf16.mxu0 %v1383
    %1666 = vmatpush1.bf16.msra.mxu0 %v1382
    %1667 = vmatprep.subr.bf16.mxu0 %v1385
    %1668 = vmatpush1.bf16.msra.mxu0 %v1384
    %1669 = vmatprep.subr.bf16.mxu0 %v1387
    %1670 = vmatpush1.bf16.msra.mxu0 %v1386
    %1671 = vmatprep.subr.bf16.mxu0 %v1389
    %1672 = vmatpush1.bf16.msra.mxu0 %v1388
    %1673 = vmatprep.subr.bf16.mxu0 %v1391
    %1674 = vmatpush1.bf16.msra.mxu0 %v1390
    %1675 = vmatprep.subr.bf16.mxu0 %v1393
    %1676 = vmatpush1.bf16.msra.mxu0 %v1392
    %1677 = vmatprep.subr.bf16.mxu0 %v1395
    %1678 = vmatpush1.bf16.msra.mxu0 %v1394
    %1679 = vmatprep.subr.bf16.mxu0 %v1397
    %1680 = vmatpush1.bf16.msra.mxu0 %v1396
    %1681 = vmatprep.subr.bf16.mxu0 %v1399
    %1682 = vmatpush1.bf16.msra.mxu0 %v1398
    %1683 = vmatprep.subr.bf16.mxu0 %v1401
    %1684 = vmatpush1.bf16.msra.mxu0 %v1400
    %1685 = vmatprep.mubr.bf16.mxu0 %v749
    %1686 = vmatmul.mubr.bf16.gmra.mrb[0].mxu0 %v748
    %v1687 = vpop.f32.mrb[0].mxu0
    %v1688 = vadd.f32 %v1647, %v1687
    %v1689 = vpop.f32.mrb[0].mxu0
    %v1690 = vadd.f32 %v1649, %v1689
    %v1691 = vpop.f32.mrb[0].mxu0
    %v1692 = vpop.f32.mrb[0].mxu0
    %1693 = vdwg.mxu0
    %v1694 = vmax.f32 %v1688, 0.0
    %v1695 = vmax.f32 %v1690, 0.0
    %v1696 = vpack.c.bf16 %v1694, %v1694
    %v1697 = vpack.c.bf16 %v1695, %v1695
    %v1698 = vld [vmem:[#allocation11] sm:$0xf]
    %v1699 = vld [vmem:[#allocation11 + $0x4] sm:$0xf]
    %v1700 = vld [vmem:[#allocation11 + $0x8] sm:$0xf]
    %v1701 = vld [vmem:[#allocation11 + $0xc] sm:$0xf]
    %v1702 = vld [vmem:[#allocation11 + $0x10] sm:$0xf]
    %v1703 = vld [vmem:[#allocation11 + $0x14] sm:$0xf]
    %v1704 = vld [vmem:[#allocation11 + $0x18] sm:$0xf]
    %v1705 = vld [vmem:[#allocation11 + $0x1c] sm:$0xf]
    %v1706 = vld [vmem:[#allocation11 + $0x20] sm:$0xf]
    %v1707 = vld [vmem:[#allocation11 + $0x24] sm:$0xf]
    %v1708 = vld [vmem:[#allocation11 + $0x28] sm:$0xf]
    %v1709 = vld [vmem:[#allocation11 + $0x2c] sm:$0xf]
    %v1710 = vld [vmem:[#allocation11 + $0x30] sm:$0xf]
    %v1711 = vld [vmem:[#allocation11 + $0x34] sm:$0xf]
    %v1712 = vld [vmem:[#allocation11 + $0x38] sm:$0xf]
    %v1713 = vld [vmem:[#allocation11 + $0x3c] sm:$0xf]
    %v1714 = vld [vmem:[#allocation11 + $0x40] sm:$0xf]
    %v1715 = vld [vmem:[#allocation11 + $0x44] sm:$0xf]
    %v1716 = vld [vmem:[#allocation11 + $0x48] sm:$0xf]
    %v1717 = vld [vmem:[#allocation11 + $0x4c] sm:$0xf]
    %v1718 = vld [vmem:[#allocation11 + $0x50] sm:$0xf]
    %v1719 = vld [vmem:[#allocation11 + $0x54] sm:$0xf]
    %v1720 = vld [vmem:[#allocation11 + $0x58] sm:$0xf]
    %v1721 = vld [vmem:[#allocation11 + $0x5c] sm:$0xf]
    %v1722 = vld [vmem:[#allocation11 + $0x60] sm:$0xf]
    %v1723 = vld [vmem:[#allocation11 + $0x64] sm:$0xf]
    %v1724 = vld [vmem:[#allocation11 + $0x68] sm:$0xf]
    %v1725 = vld [vmem:[#allocation11 + $0x6c] sm:$0xf]
    %v1726 = vld [vmem:[#allocation11 + $0x70] sm:$0xf]
    %v1727 = vld [vmem:[#allocation11 + $0x74] sm:$0xf]
    %v1728 = vld [vmem:[#allocation11 + $0x78] sm:$0xf]
    %v1729 = vld [vmem:[#allocation11 + $0x7c] sm:$0xf]
    %v1730 = vld [vmem:[#allocation13] sm:$0x1]
    %v1732 = vlaneseq
    %v1733 = vshrl.u32 %v1732, 7
    %v1734 = vsub.s32 0, %v1733
    %v1735 = vrot.slane %v1730, %v1734
    %v1769 = vunpack.c.l.b16 %v1698
    %v1770 = vunpack.c.l.b16 %v1699
    %v1771 = vunpack.c.l.b16 %v1700
    %v1772 = vunpack.c.l.b16 %v1701
    %v1773 = vunpack.c.l.b16 %v1702
    %v1774 = vunpack.c.l.b16 %v1703
    %v1775 = vunpack.c.l.b16 %v1704
    %v1776 = vunpack.c.l.b16 %v1705
    %v1777 = vunpack.c.l.b16 %v1706
    %v1778 = vunpack.c.l.b16 %v1707
    %v1779 = vunpack.c.l.b16 %v1708
    %v1780 = vunpack.c.l.b16 %v1709
    %v1781 = vunpack.c.l.b16 %v1710
    %v1782 = vunpack.c.l.b16 %v1711
    %v1783 = vunpack.c.l.b16 %v1712
    %v1784 = vunpack.c.l.b16 %v1713
    %v1785 = vunpack.c.l.b16 %v1714
    %v1786 = vunpack.c.l.b16 %v1715
    %v1787 = vunpack.c.l.b16 %v1716
    %v1788 = vunpack.c.l.b16 %v1717
    %v1789 = vunpack.c.l.b16 %v1718
    %v1790 = vunpack.c.l.b16 %v1719
    %v1791 = vunpack.c.l.b16 %v1720
    %v1792 = vunpack.c.l.b16 %v1721
    %v1793 = vunpack.c.l.b16 %v1722
    %v1794 = vunpack.c.l.b16 %v1723
    %v1795 = vunpack.c.l.b16 %v1724
    %v1796 = vunpack.c.l.b16 %v1725
    %v1797 = vunpack.c.l.b16 %v1726
    %v1798 = vunpack.c.l.b16 %v1727
    %v1799 = vunpack.c.l.b16 %v1728
    %v1800 = vunpack.c.l.b16 %v1729
    %v1801 = vpack.c.b16 %v1770, %v1769
    %v1802 = vpack.c.b16 %v1772, %v1771
    %v1803 = vpack.c.b16 %v1774, %v1773
    %v1804 = vpack.c.b16 %v1776, %v1775
    %v1805 = vpack.c.b16 %v1778, %v1777
    %v1806 = vpack.c.b16 %v1780, %v1779
    %v1807 = vpack.c.b16 %v1782, %v1781
    %v1808 = vpack.c.b16 %v1784, %v1783
    %v1809 = vpack.c.b16 %v1786, %v1785
    %v1810 = vpack.c.b16 %v1788, %v1787
    %v1811 = vpack.c.b16 %v1790, %v1789
    %v1812 = vpack.c.b16 %v1792, %v1791
    %v1813 = vpack.c.b16 %v1794, %v1793
    %v1814 = vpack.c.b16 %v1796, %v1795
    %v1815 = vpack.c.b16 %v1798, %v1797
    %v1816 = vpack.c.b16 %v1800, %v1799
    %1833 = vmatprep.subr.bf16.mxu0 0
    %1834 = vmatpush1.bf16.msra.mxu0 %v1801
    %1835 = vmatprep.subr.bf16.mxu0 0
    %1836 = vmatpush1.bf16.msra.mxu0 %v1802
    %1837 = vmatprep.subr.bf16.mxu0 0
    %1838 = vmatpush1.bf16.msra.mxu0 %v1803
    %1839 = vmatprep.subr.bf16.mxu0 0
    %1840 = vmatpush1.bf16.msra.mxu0 %v1804
    %1841 = vmatprep.subr.bf16.mxu0 0
    %1842 = vmatpush1.bf16.msra.mxu0 %v1805
    %1843 = vmatprep.subr.bf16.mxu0 0
    %1844 = vmatpush1.bf16.msra.mxu0 %v1806
    %1845 = vmatprep.subr.bf16.mxu0 0
    %1846 = vmatpush1.bf16.msra.mxu0 %v1807
    %1847 = vmatprep.subr.bf16.mxu0 0
    %1848 = vmatpush1.bf16.msra.mxu0 %v1808
    %1849 = vmatprep.subr.bf16.mxu0 0
    %1850 = vmatpush1.bf16.msra.mxu0 %v1809
    %1851 = vmatprep.subr.bf16.mxu0 0
    %1852 = vmatpush1.bf16.msra.mxu0 %v1810
    %1853 = vmatprep.subr.bf16.mxu0 0
    %1854 = vmatpush1.bf16.msra.mxu0 %v1811
    %1855 = vmatprep.subr.bf16.mxu0 0
    %1856 = vmatpush1.bf16.msra.mxu0 %v1812
    %1857 = vmatprep.subr.bf16.mxu0 0
    %1858 = vmatpush1.bf16.msra.mxu0 %v1813
    %1859 = vmatprep.subr.bf16.mxu0 0
    %1860 = vmatpush1.bf16.msra.mxu0 %v1814
    %1861 = vmatprep.subr.bf16.mxu0 0
    %1862 = vmatpush1.bf16.msra.mxu0 %v1815
    %1863 = vmatprep.subr.bf16.mxu0 0
    %1864 = vmatpush1.bf16.msra.mxu0 %v1816
    %1865 = vmatprep.mubr.bf16.mxu0 %v1697
    %1866 = vmatmul.mubr.bf16.gmra.mrb[0].mxu0 %v1696
    %v1867 = vpop.f32.mrb[0].mxu0
    %v1868 = vadd.f32 %v1735, %v1867
    %v1869 = vpop.f32.mrb[0].mxu0
    %v1870 = vpop.f32.mrb[0].mxu0
    %v1871 = vpop.f32.mrb[0].mxu0
    %1872 = vdwg.mxu0
    %1873 = vst [vmem:[#allocation14] sm:$0x3] %v1868
    // Predicated region
    $region58: #{recurrent_forward.11} parent=1 // pred_check
      _
    $region59: #{recurrent_forward.11} parent=1 // pred_check_branch
      %1875 = sbr.rel (0) target = $region61
    $region60: #{recurrent_forward.11} parent=1 // pred_region
      %s1877 = ssub.s32 32, 32
      %1878 = vsyncadd [#allocation4], %s1877
      %s1880 = sshll.u32 [#allocation14], 4
      %s1881 = int_to_ptr.vmem [resolvable:$true] %s1880
      %1883 = dma.vmem_to_hbm [thread:$0]  %s1881, 32, %s7, [#allocation4]
    $region61: #{recurrent_forward.11} parent=1 // pred_fallthru
      _
    // Predicated region
    $region62: #{recurrent_forward.11} parent=1 // pred_check
      _
    $region63: #{recurrent_forward.11} parent=1 // pred_check_branch
      %1885 = sbr.rel (0) target = $region65
    $region64: #{recurrent_forward.11} parent=1 // pred_region
      %1886 = dma.done [#allocation4], 32
    $region65: #{recurrent_forward.11} parent=1 // pred_fallthru
      _
    %1887 = vsyncpa [#allocation3], 1
    %1888 = vsyncpa [#allocation6], 1
    %1889 = vsyncpa [#allocation9], 1
    %1890 = vsyncpa [#allocation12], 1
    %1891 = vsyncpa [#allocation4], 1

</llo_original>
